<compile_context>
chip_gen: v6e
topology: v6e:2x2x1
jax: 0.10.0
libtpu: 0.0.40
codegen_flags: <defaults>
</compile_context>

<pallas_src>
import functools

import jax
import jax.numpy as jnp
from jax.experimental import pallas as pl
from jax.experimental.pallas import tpu as pltpu

_VMEM_LIMIT = 48 * 1024 * 1024   # explicit budget; < v7x physical (64 MiB)


# =============================================================================
# Small helpers
# =============================================================================
def _round_up(n, m):
    return ((n + m - 1) // m) * m


def _pick_sblk(B, T, G, H, cap=8, vmem_budget=12 << 20):
    """Sequence-block size for the recurrences: a divisor of B, capped both by
    `cap` and by a rough per-step VMEM budget (double-buffered gi/out streams)."""
    per_step = 2 * (2 * T * G + 2 * T * H) * 4 * 2   # fwd+bwd gi in + outs, x2 buffers
    cap = max(1, min(cap, vmem_budget // max(per_step, 1)))
    for d in range(min(cap, B), 0, -1):
        if B % d == 0:
            return d
    return 1


def _block_diag(*mats):
    rows = sum(m.shape[0] for m in mats)
    cols = sum(m.shape[1] for m in mats)
    out = jnp.zeros((rows, cols), mats[0].dtype)
    r = c = 0
    for m in mats:
        out = out.at[r:r + m.shape[0], c:c + m.shape[1]].set(m)
        r += m.shape[0]
        c += m.shape[1]
    return out


# =============================================================================
# Generic tiled linear (weight-resident: N outer, M inner) -- used for logits
# =============================================================================
def _linear_kernel(x_ref, w_ref, b_ref, o_ref):
    o_ref[...] = (jnp.dot(x_ref[...], w_ref[...],
                          preferred_element_type=jnp.float32) + b_ref[...])


def linear(x, w_t, b, *, tile_m=256, tile_n=512):
    """y = x @ w_t + b.   x: (M,K) f32, w_t: (K,N) f32, b: (N,) -> (M,N) f32.

    Grid order is (N-blocks outer, M-blocks inner) so each (K,tn) weight block
    stays resident in VMEM while the activations stream -> weight read once."""
    M, K = x.shape
    N = w_t.shape[1]
    tm = min(tile_m, _round_up(M, 8))
    tn = min(tile_n, _round_up(N, 128))
    Mp = _round_up(M, tm)
    Np = _round_up(N, tn)
    if Mp != M:
        x = jnp.pad(x, ((0, Mp - M), (0, 0)))
    if Np != N:
        w_t = jnp.pad(w_t, ((0, 0), (0, Np - N)))
        b = jnp.pad(b, (0, Np - N))
    out = pl.pallas_call(
        _linear_kernel,
        out_shape=jax.ShapeDtypeStruct((Mp, Np), jnp.float32),
        grid_spec=pltpu.PrefetchScalarGridSpec(
            num_scalar_prefetch=0,
            grid=(Np // tn, Mp // tm),                    # N outer, M inner
            in_specs=[
                pl.BlockSpec((tm, K), lambda j, i: (i, 0)),
                pl.BlockSpec((K, tn), lambda j, i: (0, j)),
                pl.BlockSpec((1, tn), lambda j, i: (0, j)),
            ],
            out_specs=pl.BlockSpec((tm, tn), lambda j, i: (i, j)),
        ),
        compiler_params=pltpu.CompilerParams(
            dimension_semantics=("parallel", "parallel"),
            vmem_limit_bytes=_VMEM_LIMIT),
    )(x, w_t, b.reshape(1, Np))
    if Mp != M or Np != N:
        out = out[:M, :N]
    return out


# =============================================================================
# Direction-major input projection: gi[d] = x @ Wih_d^T + b_d   (d = 0..5)
# =============================================================================
def _proj_kernel(x_ref, w_ref, b_ref, o_ref):
    w = w_ref[0]                                  # (E, G) resident per direction
    b = b_ref[0]                                  # (1, G)
    for k in range(x_ref.shape[0]):               # static unroll over sblk rows
        o_ref[0, k] = jnp.dot(x_ref[k], w, preferred_element_type=jnp.float32) + b


def project_inputs(x, w_in, b_in, sblk):
    """x: (B,T,E); w_in: (6,E,G); b_in: (6,1,G) -> gi: (6,B,T,G) direction-major."""
    B, T, E = x.shape
    D, _, G = w_in.shape
    nblk = B // sblk
    return pl.pallas_call(
        _proj_kernel,
        out_shape=jax.ShapeDtypeStruct((D, B, T, G), jnp.float32),
        grid_spec=pltpu.PrefetchScalarGridSpec(
            num_scalar_prefetch=0,
            grid=(D, nblk),                        # direction outer -> weight resident
            in_specs=[
                pl.BlockSpec((sblk, T, E), lambda j, i: (i, 0, 0)),
                pl.BlockSpec((1, E, G), lambda j, i: (j, 0, 0)),
                pl.BlockSpec((1, 1, G), lambda j, i: (j, 0, 0)),
            ],
            out_specs=pl.BlockSpec((1, sblk, T, G), lambda j, i: (j, i, 0, 0)),
        ),
        compiler_params=pltpu.CompilerParams(
            dimension_semantics=("parallel", "parallel"),
            vmem_limit_bytes=_VMEM_LIMIT),
    )(x, w_in, b_in)


# =============================================================================
# GRU recurrence kernels (input half precomputed; r/z hidden biases folded)
# =============================================================================
def _gru_cell(gi, h, whh_t, bhn):
    """gi: (N,3H) = x@Wih^T + b_ih + [b_hr,b_hz,0]; h: (N,H); bhn: (1,H)."""
    H = h.shape[-1]
    gh = jnp.dot(h, whh_t, preferred_element_type=jnp.float32)
    r = jax.nn.sigmoid(gi[:, :H] + gh[:, :H])
    z = jax.nn.sigmoid(gi[:, H:2 * H] + gh[:, H:2 * H])
    n = jnp.tanh(gi[:, 2 * H:] + r * (gh[:, 2 * H:] + bhn))
    return (1.0 - z) * n + z * h


def _gru_bidir_kernel(gif_ref, gib_ref, whhf_ref, whhb_ref, bnf_ref, bnb_ref,
                      outf_ref, outb_ref, hf_ref, hb_ref):
    """All 4 encoder directions; sblk recurrence steps per grid iteration.

    Forward dirs read S-blocks in order; backward dirs read reversed blocks
    (via index_map) and process rows inside the block in reverse, so no
    reversed copy exists in HBM and outputs stay position-aligned."""
    @pl.when(pl.program_id(0) == 0)
    def _():
        hf_ref[...] = jnp.zeros_like(hf_ref)
        hb_ref[...] = jnp.zeros_like(hb_ref)

    sblk = gif_ref.shape[1]
    for d in range(hf_ref.shape[0]):                 # static unroll: fwd dirs
        h = hf_ref[d]
        whh = whhf_ref[d]
        bn = bnf_ref[d]
        for k in range(sblk):
            h = _gru_cell(gif_ref[d, k], h, whh, bn)
            outf_ref[d, k] = h
        hf_ref[d] = h
    for d in range(hb_ref.shape[0]):                 # static unroll: bwd dirs
        h = hb_ref[d]
        whh = whhb_ref[d]
        bn = bnb_ref[d]
        for k in range(sblk - 1, -1, -1):
            h = _gru_cell(gib_ref[d, k], h, whh, bn)
            outb_ref[d, k] = h
        hb_ref[d] = h


def _gru_dec_kernel(gi_ref, corr_ref, whh_ref, bn_ref, out_ref, h_ref):
    """Both decoder GRUs; corr holds the per-step de_hidden@Wih correction so
    the (B,T,E) `x + de_hidden` tensor is never materialized."""
    @pl.when(pl.program_id(0) == 0)
    def _():
        h_ref[...] = jnp.zeros_like(h_ref)

    sblk = gi_ref.shape[1]
    for d in range(h_ref.shape[0]):
        h = h_ref[d]
        whh = whh_ref[d]
        bn = bn_ref[d]
        for k in range(sblk):
            gi = gi_ref[d, k] + corr_ref[d, k]       # (T,G) + (1,G)
            h = _gru_cell(gi, h, whh, bn)
            out_ref[d, k] = h
        h_ref[d] = h


def gru_bidir(gi, whh_f, whh_b, bhn_f, bhn_b, sblk):
    """gi: (6,B,T,G) direction-major (dirs 0:2 = fwd, 2:4 = bwd).
    Returns (out_f, out_b), each (2,B,T,H), position-aligned like PyTorch."""
    _, B, T, G = gi.shape
    H = G // 3
    nblk = B // sblk
    full3 = lambda s: (0, 0, 0)
    return pl.pallas_call(
        _gru_bidir_kernel,
        out_shape=(jax.ShapeDtypeStruct((2, B, T, H), jnp.float32),
                   jax.ShapeDtypeStruct((2, B, T, H), jnp.float32)),
        grid_spec=pltpu.PrefetchScalarGridSpec(
            num_scalar_prefetch=0,
            grid=(nblk,),
            in_specs=[
                pl.BlockSpec((2, sblk, T, G), lambda s: (0, s, 0, 0)),
                pl.BlockSpec((2, sblk, T, G), lambda s: (1, nblk - 1 - s, 0, 0)),
                pl.BlockSpec((2, H, G), full3),
                pl.BlockSpec((2, H, G), full3),
                pl.BlockSpec((2, 1, H), full3),
                pl.BlockSpec((2, 1, H), full3),
            ],
            out_specs=[
                pl.BlockSpec((2, sblk, T, H), lambda s: (0, s, 0, 0)),
                pl.BlockSpec((2, sblk, T, H), lambda s: (0, nblk - 1 - s, 0, 0)),
            ],
            scratch_shapes=[pltpu.VMEM((2, T, H), jnp.float32),
                            pltpu.VMEM((2, T, H), jnp.float32)],
        ),
        compiler_params=pltpu.CompilerParams(
            dimension_semantics=("arbitrary",),       # sequential recurrence
            vmem_limit_bytes=_VMEM_LIMIT),
    )(gi, gi, whh_f, whh_b, bhn_f, bhn_b)


def gru_dec(gi, corr, whh, bhn, sblk):
    """gi: (6,B,T,G) (dirs 4:6 = decoders); corr: (2,B,1,G) -> out: (2,B,T,H)."""
    _, B, T, G = gi.shape
    H = G // 3
    nblk = B // sblk
    full3 = lambda s: (0, 0, 0)
    return pl.pallas_call(
        _gru_dec_kernel,
        out_shape=jax.ShapeDtypeStruct((2, B, T, H), jnp.float32),
        grid_spec=pltpu.PrefetchScalarGridSpec(
            num_scalar_prefetch=0,
            grid=(nblk,),
            in_specs=[
                pl.BlockSpec((2, sblk, T, G), lambda s: (2, s, 0, 0)),
                pl.BlockSpec((2, sblk, 1, G), lambda s: (0, s, 0, 0)),
                pl.BlockSpec((2, H, G), full3),
                pl.BlockSpec((2, 1, H), full3),
            ],
            out_specs=pl.BlockSpec((2, sblk, T, H), lambda s: (0, s, 0, 0)),
            scratch_shapes=[pltpu.VMEM((2, T, H), jnp.float32)],
        ),
        compiler_params=pltpu.CompilerParams(
            dimension_semantics=("arbitrary",),
            vmem_limit_bytes=_VMEM_LIMIT),
    )(gi, corr, whh, bhn)


# =============================================================================
# Fused post-encoder tail: hidden2latent -> tanh -> latent2output -> Wih corr
# =============================================================================
def _tail_kernel(x_ref, w1_ref, b1_ref, w2_ref, b2_ref, w3_ref, corr_ref):
    lat = jnp.dot(x_ref[...], w1_ref[...],
                  preferred_element_type=jnp.float32) + b1_ref[...]
    dh = jnp.dot(jnp.tanh(lat), w2_ref[...],
                 preferred_element_type=jnp.float32) + b2_ref[...]
    c = jnp.dot(dh, w3_ref[...], preferred_element_type=jnp.float32)
    G = corr_ref.shape[-1]
    corr_ref[0] = c[:, :G]       # user decoder correction
    corr_ref[1] = c[:, G:]       # item decoder correction


def tail_chain(last_cat, w_h2l, b_h2l, w_l2o, b_l2o, w_corr):
    """last_cat: (B,4H) -> corr: (2,B,G); everything fits a single VMEM tile."""
    B = last_cat.shape[0]
    G = w_corr.shape[1] // 2
    return pl.pallas_call(
        _tail_kernel,
        out_shape=jax.ShapeDtypeStruct((2, B, G), jnp.float32),
        compiler_params=pltpu.CompilerParams(vmem_limit_bytes=_VMEM_LIMIT),
    )(last_cat, w_h2l, b_h2l, w_l2o, b_l2o, w_corr)


# =============================================================================
# One-time parameter re-layout (hoisted out of the jitted forward)
# =============================================================================
def prepare_params(p):
    ue, ie = p["user_enc"], p["item_enc"]
    ud, idd = p["user_dec"], p["item_dec"]
    H = ue["w_hh_f"].shape[1]

    def fold_bias(b_ih, b_hh):
        # r/z hidden biases are purely additive with the input bias.
        return b_ih + jnp.concatenate([b_hh[:2 * H], jnp.zeros((H,), jnp.float32)])

    # direction order: [user_f, item_f, user_b, item_b, user_dec, item_dec]
    dirs = [
        (ue["w_ih_f"], ue["b_ih_f"], ue["b_hh_f"]),
        (ie["w_ih_f"], ie["b_ih_f"], ie["b_hh_f"]),
        (ue["w_ih_b"], ue["b_ih_b"], ue["b_hh_b"]),
        (ie["w_ih_b"], ie["b_ih_b"], ie["b_hh_b"]),
        (ud["w_ih"], ud["b_ih"], ud["b_hh"]),
        (idd["w_ih"], idd["b_ih"], idd["b_hh"]),
    ]
    w_in = jnp.stack([w.T for (w, _, _) in dirs], axis=0)                # (6,E,G)
    b_in = jnp.stack([fold_bias(bi, bh) for (_, bi, bh) in dirs], 0)[:, None, :]

    whh_f = jnp.stack([ue["w_hh_f"].T, ie["w_hh_f"].T], axis=0)          # (2,H,G)
    whh_b = jnp.stack([ue["w_hh_b"].T, ie["w_hh_b"].T], axis=0)
    whh_d = jnp.stack([ud["w_hh"].T, idd["w_hh"].T], axis=0)
    bhn_f = jnp.stack([ue["b_hh_f"][2*H:], ie["b_hh_f"][2*H:]], 0)[:, None, :]
    bhn_b = jnp.stack([ue["b_hh_b"][2*H:], ie["b_hh_b"][2*H:]], 0)[:, None, :]
    bhn_d = jnp.stack([ud["b_hh"][2*H:], idd["b_hh"][2*H:]], 0)[:, None, :]

    w_h2l = _block_diag(ue["w_h2l"].T, ie["w_h2l"].T)                    # (4H,2L)
    b_h2l = jnp.concatenate([ue["b_h2l"], ie["b_h2l"]])[None, :]
    w_l2o = _block_diag(ud["w_l2o"].T, idd["w_l2o"].T)                   # (2L,2E)
    b_l2o = jnp.concatenate([ud["b_l2o"], idd["b_l2o"]])[None, :]
    w_corr = _block_diag(ud["w_ih"].T, idd["w_ih"].T)                    # (2E,2G)

    # Vocab projection: transpose + pad to a lane multiple ONCE.
    V = p["w_out"].shape[0]
    Vp = _round_up(V, 128)
    w_out_t = jnp.pad(p["w_out"].T, ((0, 0), (0, Vp - V)))               # (H,Vp)
    b_out = jnp.pad(p["b_out"], (0, Vp - V))                             # (Vp,)

    return dict(embedding=p["embedding"], w_in=w_in, b_in=b_in,
                whh_f=whh_f, whh_b=whh_b, whh_d=whh_d,
                bhn_f=bhn_f, bhn_b=bhn_b, bhn_d=bhn_d,
                w_h2l=w_h2l, b_h2l=b_h2l, w_l2o=w_l2o, b_l2o=b_l2o,
                w_corr=w_corr, w_out_t=w_out_t, b_out=b_out)


# =============================================================================
# Module forward
# =============================================================================
def user_item_encoder_forward(prep, reviews, review_lens, user_ids, item_ids,
                              *, vocab_size):
    # user_ids / item_ids are unused in the reference forward pass.
    del user_ids, item_ids
    emb = prep["embedding"]
    B, T = reviews.shape
    H = prep["whh_f"].shape[1]
    G = 3 * H
    V = vocab_size
    sblk = _pick_sblk(B, T, G, H)

    # ---- single embedding gather shared by all four sub-modules -----------
    x = jnp.take(emb, reviews, axis=0)                        # (B, T, E)
    # embedding dropout: identity (eval mode)

    # ---- hoisted input projections, direction-major (no HBM transpose) ----
    gi = project_inputs(x, prep["w_in"], prep["b_in"], sblk)  # (6, B, T, G)

    # ---- all 4 encoder directions in ONE blocked recurrence call ----------
    out_f, out_b = gru_bidir(gi, prep["whh_f"], prep["whh_b"],
                             prep["bhn_f"], prep["bhn_b"], sblk)  # (2,B,T,H) x2

    # ---- last-position gathers per direction (no (B,T,2H) concat) ---------
    idx = jnp.arange(B)
    pos = jnp.maximum(review_lens - 1, 0)
    last_cat = jnp.concatenate([out_f[0, idx, pos, :], out_b[0, idx, pos, :],
                                out_f[1, idx, pos, :], out_b[1, idx, pos, :]],
                               axis=-1)                        # (B, 4H)

    # ---- fused tail: h2l -> tanh -> l2o -> (de_hidden @ Wih) correction ---
    corr = tail_chain(last_cat, prep["w_h2l"], prep["b_h2l"],
                      prep["w_l2o"], prep["b_l2o"], prep["w_corr"])  # (2,B,G)
    corr = corr[:, :, None, :]                                 # (2, B, 1, G)

    # ---- both decoders in ONE blocked recurrence call ----------------------
    out_dec = gru_dec(gi, corr, prep["whh_d"], prep["bhn_d"], sblk)  # (2,B,T,H)

    # ---- fused vocab projection (weight read from HBM once) ----------------
    flat = out_dec.reshape(2 * B * T, H)                       # contiguous
    logits = linear(flat, prep["w_out_t"], prep["b_out"])[:, :V]
    return logits[:B * T], logits[B * T:]


# =============================================================================
# Deterministic parameter construction
# =============================================================================
def _uniform(key, shape, fan_in):
    bound = 1.0 / jnp.sqrt(jnp.float32(fan_in))
    return jax.random.uniform(key, shape, jnp.float32, -bound, bound)


def init_params(key, vocab_size, embedding_size, hidden_size, latent_size):
    E, H, L, V = embedding_size, hidden_size, latent_size, vocab_size
    keys = iter(jax.random.split(key, 64))

    def gru_dir(inp):
        return dict(
            w_ih=_uniform(next(keys), (3 * H, inp), H),
            w_hh=_uniform(next(keys), (3 * H, H), H),
            b_ih=_uniform(next(keys), (3 * H,), H),
            b_hh=_uniform(next(keys), (3 * H,), H),
        )

    def encoder():
        f, b = gru_dir(E), gru_dir(E)
        return dict(
            w_ih_f=f["w_ih"], w_hh_f=f["w_hh"], b_ih_f=f["b_ih"], b_hh_f=f["b_hh"],
            w_ih_b=b["w_ih"], w_hh_b=b["w_hh"], b_ih_b=b["b_ih"], b_hh_b=b["b_hh"],
            w_h2l=_uniform(next(keys), (L, 2 * H), 2 * H),
            b_h2l=_uniform(next(keys), (L,), 2 * H),
        )

    def decoder():
        g = gru_dir(E)
        return dict(
            w_l2o=_uniform(next(keys), (E, L), L),
            b_l2o=_uniform(next(keys), (E,), L),
            **g,
        )

    return dict(
        embedding=jax.random.normal(next(keys), (V, E), jnp.float32),
        user_enc=encoder(),
        item_enc=encoder(),
        user_dec=decoder(),
        item_dec=decoder(),
        w_out=_uniform(next(keys), (V, H), H),
        b_out=_uniform(next(keys), (V,), H),
    )


# =============================================================================
if __name__ == "__main__":
    # Small, module-consistent shapes.  The reference GRUs require
    # embedding_size == hidden_size (GRU input size is hidden_size).
    VOCAB = 50
    EMB = 32
    HIDDEN = 32
    LATENT = 16
    B, T = 4, 8

    key = jax.random.PRNGKey(0)
    kp, kr, kl, ku, ki = jax.random.split(key, 5)

    params = init_params(kp, VOCAB, EMB, HIDDEN, LATENT)
    prep = prepare_params(params)     # one-time weight re-layout (outside jit)

    reviews = jax.random.randint(kr, (B, T), 0, VOCAB, dtype=jnp.int32)
    review_lens = jax.random.randint(kl, (B,), 1, T + 1, dtype=jnp.int32)
    user_ids = jax.random.randint(ku, (B,), 0, 10, dtype=jnp.int32)
    item_ids = jax.random.randint(ki, (B,), 0, 10, dtype=jnp.int32)

    fwd = jax.jit(functools.partial(user_item_encoder_forward),
                  static_argnames=("vocab_size",))
    user_logits, item_logits = fwd(prep, reviews, review_lens, user_ids,
                                   item_ids, vocab_size=VOCAB)
    jax.block_until_ready((user_logits, item_logits))

    assert user_logits.shape == (B * T, VOCAB)
    assert item_logits.shape == (B * T, VOCAB)
    assert user_logits.dtype == jnp.float32
    print("KERNEL_OK")
</pallas_src>

<mosaic_0001>
module attributes {stable_mosaic.version = 11 : i64} {
  func.func @_proj_kernel(%arg0: i32, %arg1: i32, %arg2: memref<4x8x32xf32, #tpu.memory_space<vmem>>, %arg3: memref<1x32x96xf32, #tpu.memory_space<vmem>>, %arg4: memref<1x1x96xf32, #tpu.memory_space<vmem>>, %arg5: memref<1x4x8x96xf32, #tpu.memory_space<vmem>>) attributes {dimension_semantics = [#tpu.dimension_semantics<parallel>, #tpu.dimension_semantics<parallel>], iteration_bounds = array<i64: 6, 1>, scalar_prefetch = 0 : i64, scratch_operands = 0 : i64, tpu.core_type = #tpu.core_type<tc>, window_params = [{transform_indices = @transform_0, window_bounds = array<i64: 4, 8, 32>}, {transform_indices = @transform_1, window_bounds = array<i64: 1, 32, 96>}, {transform_indices = @transform_2, window_bounds = array<i64: 1, 1, 96>}, {transform_indices = @transform_3, window_bounds = array<i64: 1, 4, 8, 96>}]} {
    %c0 = arith.constant 0 : index
    %c0_0 = arith.constant 0 : index
    %c0_1 = arith.constant 0 : index
    %0 = vector.load %arg3[%c0, %c0_0, %c0_1] : memref<1x32x96xf32, #tpu.memory_space<vmem>>, vector<1x32x96xf32>
    %1 = vector.shape_cast %0 : vector<1x32x96xf32> to vector<32x96xf32>
    %c0_2 = arith.constant 0 : index
    %c0_3 = arith.constant 0 : index
    %c0_4 = arith.constant 0 : index
    %2 = vector.load %arg4[%c0_2, %c0_3, %c0_4] : memref<1x1x96xf32, #tpu.memory_space<vmem>>, vector<1x1x96xf32>
    %3 = vector.shape_cast %2 : vector<1x1x96xf32> to vector<1x96xf32>
    %c0_5 = arith.constant 0 : index
    %c0_6 = arith.constant 0 : index
    %c0_7 = arith.constant 0 : index
    %4 = vector.load %arg2[%c0_5, %c0_6, %c0_7] : memref<4x8x32xf32, #tpu.memory_space<vmem>>, vector<1x8x32xf32>
    %5 = vector.shape_cast %4 : vector<1x8x32xf32> to vector<8x32xf32>
    %cst = arith.constant dense<0.000000e+00> : vector<8x96xf32>
    %6 = tpu.matmul %5, %1, %cst {dimension_numbers = #tpu.dot_dimension_numbers<[1], [0], [0], [1], [0, 0, 1, 1], [], []>} : vector<8x32xf32>, vector<32x96xf32>, vector<8x96xf32> -> vector<8x96xf32>
    %7 = vector.broadcast %3 : vector<1x96xf32> to vector<8x96xf32>
    %8 = arith.addf %6, %7 : vector<8x96xf32>
    %c0_8 = arith.constant 0 : index
    %c0_9 = arith.constant 0 : index
    %c0_10 = arith.constant 0 : index
    %c0_11 = arith.constant 0 : index
    %9 = vector.load %arg5[%c0_8, %c0_9, %c0_10, %c0_11] : memref<1x4x8x96xf32, #tpu.memory_space<vmem>>, vector<1x1x8x96xf32>
    %10 = vector.shape_cast %9 : vector<1x1x8x96xf32> to vector<8x96xf32>
    %11 = vector.shape_cast %8 : vector<8x96xf32> to vector<1x1x8x96xf32>
    tpu.vector_store %arg5[%c0_8, %c0_9, %c0_10, %c0_11], %11 {strides = array<i32>} : memref<1x4x8x96xf32, #tpu.memory_space<vmem>>, vector<1x1x8x96xf32>,
    %c1 = arith.constant 1 : index
    %c0_12 = arith.constant 0 : index
    %c0_13 = arith.constant 0 : index
    %12 = vector.load %arg2[%c1, %c0_12, %c0_13] : memref<4x8x32xf32, #tpu.memory_space<vmem>>, vector<1x8x32xf32>
    %13 = vector.shape_cast %12 : vector<1x8x32xf32> to vector<8x32xf32>
    %cst_14 = arith.constant dense<0.000000e+00> : vector<8x96xf32>
    %14 = tpu.matmul %13, %1, %cst_14 {dimension_numbers = #tpu.dot_dimension_numbers<[1], [0], [0], [1], [0, 0, 1, 1], [], []>} : vector<8x32xf32>, vector<32x96xf32>, vector<8x96xf32> -> vector<8x96xf32>
    %15 = vector.broadcast %3 : vector<1x96xf32> to vector<8x96xf32>
    %16 = arith.addf %14, %15 : vector<8x96xf32>
    %c0_15 = arith.constant 0 : index
    %c1_16 = arith.constant 1 : index
    %c0_17 = arith.constant 0 : index
    %c0_18 = arith.constant 0 : index
    %17 = vector.load %arg5[%c0_15, %c1_16, %c0_17, %c0_18] : memref<1x4x8x96xf32, #tpu.memory_space<vmem>>, vector<1x1x8x96xf32>
    %18 = vector.shape_cast %17 : vector<1x1x8x96xf32> to vector<8x96xf32>
    %19 = vector.shape_cast %16 : vector<8x96xf32> to vector<1x1x8x96xf32>
    tpu.vector_store %arg5[%c0_15, %c1_16, %c0_17, %c0_18], %19 {strides = array<i32>} : memref<1x4x8x96xf32, #tpu.memory_space<vmem>>, vector<1x1x8x96xf32>,
    %c2 = arith.constant 2 : index
    %c0_19 = arith.constant 0 : index
    %c0_20 = arith.constant 0 : index
    %20 = vector.load %arg2[%c2, %c0_19, %c0_20] : memref<4x8x32xf32, #tpu.memory_space<vmem>>, vector<1x8x32xf32>
    %21 = vector.shape_cast %20 : vector<1x8x32xf32> to vector<8x32xf32>
    %cst_21 = arith.constant dense<0.000000e+00> : vector<8x96xf32>
    %22 = tpu.matmul %21, %1, %cst_21 {dimension_numbers = #tpu.dot_dimension_numbers<[1], [0], [0], [1], [0, 0, 1, 1], [], []>} : vector<8x32xf32>, vector<32x96xf32>, vector<8x96xf32> -> vector<8x96xf32>
    %23 = vector.broadcast %3 : vector<1x96xf32> to vector<8x96xf32>
    %24 = arith.addf %22, %23 : vector<8x96xf32>
    %c0_22 = arith.constant 0 : index
    %c2_23 = arith.constant 2 : index
    %c0_24 = arith.constant 0 : index
    %c0_25 = arith.constant 0 : index
    %25 = vector.load %arg5[%c0_22, %c2_23, %c0_24, %c0_25] : memref<1x4x8x96xf32, #tpu.memory_space<vmem>>, vector<1x1x8x96xf32>
    %26 = vector.shape_cast %25 : vector<1x1x8x96xf32> to vector<8x96xf32>
    %27 = vector.shape_cast %24 : vector<8x96xf32> to vector<1x1x8x96xf32>
    tpu.vector_store %arg5[%c0_22, %c2_23, %c0_24, %c0_25], %27 {strides = array<i32>} : memref<1x4x8x96xf32, #tpu.memory_space<vmem>>, vector<1x1x8x96xf32>,
    %c3 = arith.constant 3 : index
    %c0_26 = arith.constant 0 : index
    %c0_27 = arith.constant 0 : index
    %28 = vector.load %arg2[%c3, %c0_26, %c0_27] : memref<4x8x32xf32, #tpu.memory_space<vmem>>, vector<1x8x32xf32>
    %29 = vector.shape_cast %28 : vector<1x8x32xf32> to vector<8x32xf32>
    %cst_28 = arith.constant dense<0.000000e+00> : vector<8x96xf32>
    %30 = tpu.matmul %29, %1, %cst_28 {dimension_numbers = #tpu.dot_dimension_numbers<[1], [0], [0], [1], [0, 0, 1, 1], [], []>} : vector<8x32xf32>, vector<32x96xf32>, vector<8x96xf32> -> vector<8x96xf32>
    %31 = vector.broadcast %3 : vector<1x96xf32> to vector<8x96xf32>
    %32 = arith.addf %30, %31 : vector<8x96xf32>
    %c0_29 = arith.constant 0 : index
    %c3_30 = arith.constant 3 : index
    %c0_31 = arith.constant 0 : index
    %c0_32 = arith.constant 0 : index
    %33 = vector.load %arg5[%c0_29, %c3_30, %c0_31, %c0_32] : memref<1x4x8x96xf32, #tpu.memory_space<vmem>>, vector<1x1x8x96xf32>
    %34 = vector.shape_cast %33 : vector<1x1x8x96xf32> to vector<8x96xf32>
    %35 = vector.shape_cast %32 : vector<8x96xf32> to vector<1x1x8x96xf32>
    tpu.vector_store %arg5[%c0_29, %c3_30, %c0_31, %c0_32], %35 {strides = array<i32>} : memref<1x4x8x96xf32, #tpu.memory_space<vmem>>, vector<1x1x8x96xf32>,
    return
  }
  func.func @transform_0(%arg0: i32, %arg1: i32) -> (i32, i32, i32) {
    %c0_i32 = arith.constant 0 : i32
    %c0_i32_0 = arith.constant 0 : i32
    %c0_i32_1 = arith.constant 0 : i32
    return %arg1, %c0_i32, %c0_i32_0 : i32, i32, i32
  }
  func.func @transform_1(%arg0: i32, %arg1: i32) -> (i32, i32, i32) {
    %c0_i32 = arith.constant 0 : i32
    %c0_i32_0 = arith.constant 0 : i32
    %c0_i32_1 = arith.constant 0 : i32
    return %arg0, %c0_i32, %c0_i32_0 : i32, i32, i32
  }
  func.func @transform_2(%arg0: i32, %arg1: i32) -> (i32, i32, i32) {
    %c0_i32 = arith.constant 0 : i32
    %c0_i32_0 = arith.constant 0 : i32
    %c0_i32_1 = arith.constant 0 : i32
    return %arg0, %c0_i32, %c0_i32_0 : i32, i32, i32
  }
  func.func @transform_3(%arg0: i32, %arg1: i32) -> (i32, i32, i32, i32) {
    %c0_i32 = arith.constant 0 : i32
    %c0_i32_0 = arith.constant 0 : i32
    %c0_i32_1 = arith.constant 0 : i32
    return %arg0, %arg1, %c0_i32, %c0_i32_0 : i32, i32, i32, i32
  }
}

module attributes {stable_mosaic.version = 11 : i64} {
  func.func @_gru_bidir_kernel(%arg0: i32, %arg1: memref<2x4x8x96xf32, #tpu.memory_space<vmem>>, %arg2: memref<2x4x8x96xf32, #tpu.memory_space<vmem>>, %arg3: memref<2x32x96xf32, #tpu.memory_space<vmem>>, %arg4: memref<2x32x96xf32, #tpu.memory_space<vmem>>, %arg5: memref<2x1x32xf32, #tpu.memory_space<vmem>>, %arg6: memref<2x1x32xf32, #tpu.memory_space<vmem>>, %arg7: memref<2x4x8x32xf32, #tpu.memory_space<vmem>>, %arg8: memref<2x4x8x32xf32, #tpu.memory_space<vmem>>, %arg9: memref<2x8x32xf32, #tpu.memory_space<vmem>>, %arg10: memref<2x8x32xf32, #tpu.memory_space<vmem>>) attributes {dimension_semantics = [#tpu.dimension_semantics<arbitrary>], iteration_bounds = array<i64: 1>, scalar_prefetch = 0 : i64, scratch_operands = 2 : i64, tpu.core_type = #tpu.core_type<tc>, window_params = [{transform_indices = @transform_0, window_bounds = array<i64: 2, 4, 8, 96>}, {transform_indices = @transform_1, window_bounds = array<i64: 2, 4, 8, 96>}, {pipeline_mode = #tpu.pipeline_mode<synchronous>, transform_indices = @transform_2, window_bounds = array<i64: 2, 32, 96>}, {pipeline_mode = #tpu.pipeline_mode<synchronous>, transform_indices = @transform_3, window_bounds = array<i64: 2, 32, 96>}, {pipeline_mode = #tpu.pipeline_mode<synchronous>, transform_indices = @transform_4, window_bounds = array<i64: 2, 1, 32>}, {pipeline_mode = #tpu.pipeline_mode<synchronous>, transform_indices = @transform_5, window_bounds = array<i64: 2, 1, 32>}, {transform_indices = @transform_6, window_bounds = array<i64: 2, 4, 8, 32>}, {transform_indices = @transform_7, window_bounds = array<i64: 2, 4, 8, 32>}]} {
    %c0_i32 = arith.constant 0 : i32
    %0 = arith.cmpi eq, %arg0, %c0_i32 : i32
    %1 = arith.extui %0 : i1 to i32
    %c0_i32_0 = arith.constant 0 : i32
    %2 = arith.cmpi ne, %1, %c0_i32_0 : i32
    scf.if %2 {
      %cst_236 = arith.constant 0.000000e+00 : f32
      %583 = vector.broadcast %cst_236 : f32 to vector<2x8x32xf32>
      %c0_237 = arith.constant 0 : index
      %c0_238 = arith.constant 0 : index
      %c0_239 = arith.constant 0 : index
      %584 = vector.load %arg9[%c0_237, %c0_238, %c0_239] : memref<2x8x32xf32, #tpu.memory_space<vmem>>, vector<2x8x32xf32>
      tpu.vector_store %arg9[%c0_237, %c0_238, %c0_239], %583 {strides = array<i32>} : memref<2x8x32xf32, #tpu.memory_space<vmem>>, vector<2x8x32xf32>,
      %cst_240 = arith.constant 0.000000e+00 : f32
      %585 = vector.broadcast %cst_240 : f32 to vector<2x8x32xf32>
      %c0_241 = arith.constant 0 : index
      %c0_242 = arith.constant 0 : index
      %c0_243 = arith.constant 0 : index
      %586 = vector.load %arg10[%c0_241, %c0_242, %c0_243] : memref<2x8x32xf32, #tpu.memory_space<vmem>>, vector<2x8x32xf32>
      tpu.vector_store %arg10[%c0_241, %c0_242, %c0_243], %585 {strides = array<i32>} : memref<2x8x32xf32, #tpu.memory_space<vmem>>, vector<2x8x32xf32>,
    } else {
    }
    %c0 = arith.constant 0 : index
    %c0_1 = arith.constant 0 : index
    %c0_2 = arith.constant 0 : index
    %3 = vector.load %arg9[%c0, %c0_1, %c0_2] : memref<2x8x32xf32, #tpu.memory_space<vmem>>, vector<1x8x32xf32>
    %4 = vector.shape_cast %3 : vector<1x8x32xf32> to vector<8x32xf32>
    %c0_3 = arith.constant 0 : index
    %c0_4 = arith.constant 0 : index
    %c0_5 = arith.constant 0 : index
    %5 = vector.load %arg3[%c0_3, %c0_4, %c0_5] : memref<2x32x96xf32, #tpu.memory_space<vmem>>, vector<1x32x96xf32>
    %6 = vector.shape_cast %5 : vector<1x32x96xf32> to vector<32x96xf32>
    %c0_6 = arith.constant 0 : index
    %c0_7 = arith.constant 0 : index
    %c0_8 = arith.constant 0 : index
    %7 = vector.load %arg5[%c0_6, %c0_7, %c0_8] : memref<2x1x32xf32, #tpu.memory_space<vmem>>, vector<1x1x32xf32>
    %8 = vector.shape_cast %7 : vector<1x1x32xf32> to vector<1x32xf32>
    %c0_9 = arith.constant 0 : index
    %c0_10 = arith.constant 0 : index
    %c0_11 = arith.constant 0 : index
    %c0_12 = arith.constant 0 : index
    %9 = vector.load %arg1[%c0_9, %c0_10, %c0_11, %c0_12] : memref<2x4x8x96xf32, #tpu.memory_space<vmem>>, vector<1x1x8x96xf32>
    %10 = vector.shape_cast %9 : vector<1x1x8x96xf32> to vector<8x96xf32>
    %cst = arith.constant dense<0.000000e+00> : vector<8x96xf32>
    %11 = tpu.matmul %4, %6, %cst {dimension_numbers = #tpu.dot_dimension_numbers<[1], [0], [0], [1], [0, 0, 1, 1], [], []>} : vector<8x32xf32>, vector<32x96xf32>, vector<8x96xf32> -> vector<8x96xf32>
    %12 = vector.extract_strided_slice %10 {offsets = [0, 0], sizes = [8, 32], strides = [1, 1]} : vector<8x96xf32> to vector<8x32xf32>
    %13 = vector.extract_strided_slice %11 {offsets = [0, 0], sizes = [8, 32], strides = [1, 1]} : vector<8x96xf32> to vector<8x32xf32>
    %14 = arith.addf %12, %13 : vector<8x32xf32>
    %15 = arith.negf %14 : vector<8x32xf32>
    %16 = math.exp %15 : vector<8x32xf32>
    %cst_13 = arith.constant 1.000000e+00 : f32
    %17 = vector.broadcast %cst_13 : f32 to vector<8x32xf32>
    %18 = arith.addf %17, %16 : vector<8x32xf32>
    %19 = arith.divf %17, %18 : vector<8x32xf32>
    %20 = vector.extract_strided_slice %10 {offsets = [0, 32], sizes = [8, 32], strides = [1, 1]} : vector<8x96xf32> to vector<8x32xf32>
    %21 = vector.extract_strided_slice %11 {offsets = [0, 32], sizes = [8, 32], strides = [1, 1]} : vector<8x96xf32> to vector<8x32xf32>
    %22 = arith.addf %20, %21 : vector<8x32xf32>
    %23 = arith.negf %22 : vector<8x32xf32>
    %24 = math.exp %23 : vector<8x32xf32>
    %cst_14 = arith.constant 1.000000e+00 : f32
    %25 = vector.broadcast %cst_14 : f32 to vector<8x32xf32>
    %26 = arith.addf %25, %24 : vector<8x32xf32>
    %27 = arith.divf %25, %26 : vector<8x32xf32>
    %28 = vector.extract_strided_slice %10 {offsets = [0, 64], sizes = [8, 32], strides = [1, 1]} : vector<8x96xf32> to vector<8x32xf32>
    %29 = vector.extract_strided_slice %11 {offsets = [0, 64], sizes = [8, 32], strides = [1, 1]} : vector<8x96xf32> to vector<8x32xf32>
    %30 = vector.broadcast %8 : vector<1x32xf32> to vector<8x32xf32>
    %31 = arith.addf %29, %30 : vector<8x32xf32>
    %32 = arith.mulf %19, %31 : vector<8x32xf32>
    %33 = arith.addf %28, %32 : vector<8x32xf32>
    %34 = math.tanh %33 : vector<8x32xf32>
    %cst_15 = arith.constant 1.000000e+00 : f32
    %35 = vector.broadcast %cst_15 : f32 to vector<8x32xf32>
    %36 = arith.subf %35, %27 : vector<8x32xf32>
    %37 = arith.mulf %36, %34 : vector<8x32xf32>
    %38 = arith.mulf %27, %4 : vector<8x32xf32>
    %39 = arith.addf %37, %38 : vector<8x32xf32>
    %c0_16 = arith.constant 0 : index
    %c0_17 = arith.constant 0 : index
    %c0_18 = arith.constant 0 : index
    %c0_19 = arith.constant 0 : index
    %40 = vector.load %arg7[%c0_16, %c0_17, %c0_18, %c0_19] : memref<2x4x8x32xf32, #tpu.memory_space<vmem>>, vector<1x1x8x32xf32>
    %41 = vector.shape_cast %40 : vector<1x1x8x32xf32> to vector<8x32xf32>
    %42 = vector.shape_cast %39 : vector<8x32xf32> to vector<1x1x8x32xf32>
    tpu.vector_store %arg7[%c0_16, %c0_17, %c0_18, %c0_19], %42 {strides = array<i32>} : memref<2x4x8x32xf32, #tpu.memory_space<vmem>>, vector<1x1x8x32xf32>,
    %c0_20 = arith.constant 0 : index
    %c1 = arith.constant 1 : index
    %c0_21 = arith.constant 0 : index
    %c0_22 = arith.constant 0 : index
    %43 = vector.load %arg1[%c0_20, %c1, %c0_21, %c0_22] : memref<2x4x8x96xf32, #tpu.memory_space<vmem>>, vector<1x1x8x96xf32>
    %44 = vector.shape_cast %43 : vector<1x1x8x96xf32> to vector<8x96xf32>
    %cst_23 = arith.constant dense<0.000000e+00> : vector<8x96xf32>
    %45 = tpu.matmul %39, %6, %cst_23 {dimension_numbers = #tpu.dot_dimension_numbers<[1], [0], [0], [1], [0, 0, 1, 1], [], []>} : vector<8x32xf32>, vector<32x96xf32>, vector<8x96xf32> -> vector<8x96xf32>
    %46 = vector.extract_strided_slice %44 {offsets = [0, 0], sizes = [8, 32], strides = [1, 1]} : vector<8x96xf32> to vector<8x32xf32>
    %47 = vector.extract_strided_slice %45 {offsets = [0, 0], sizes = [8, 32], strides = [1, 1]} : vector<8x96xf32> to vector<8x32xf32>
    %48 = arith.addf %46, %47 : vector<8x32xf32>
    %49 = arith.negf %48 : vector<8x32xf32>
    %50 = math.exp %49 : vector<8x32xf32>
    %cst_24 = arith.constant 1.000000e+00 : f32
    %51 = vector.broadcast %cst_24 : f32 to vector<8x32xf32>
    %52 = arith.addf %51, %50 : vector<8x32xf32>
    %53 = arith.divf %51, %52 : vector<8x32xf32>
    %54 = vector.extract_strided_slice %44 {offsets = [0, 32], sizes = [8, 32], strides = [1, 1]} : vector<8x96xf32> to vector<8x32xf32>
    %55 = vector.extract_strided_slice %45 {offsets = [0, 32], sizes = [8, 32], strides = [1, 1]} : vector<8x96xf32> to vector<8x32xf32>
    %56 = arith.addf %54, %55 : vector<8x32xf32>
    %57 = arith.negf %56 : vector<8x32xf32>
    %58 = math.exp %57 : vector<8x32xf32>
    %cst_25 = arith.constant 1.000000e+00 : f32
    %59 = vector.broadcast %cst_25 : f32 to vector<8x32xf32>
    %60 = arith.addf %59, %58 : vector<8x32xf32>
    %61 = arith.divf %59, %60 : vector<8x32xf32>
    %62 = vector.extract_strided_slice %44 {offsets = [0, 64], sizes = [8, 32], strides = [1, 1]} : vector<8x96xf32> to vector<8x32xf32>
    %63 = vector.extract_strided_slice %45 {offsets = [0, 64], sizes = [8, 32], strides = [1, 1]} : vector<8x96xf32> to vector<8x32xf32>
    %64 = vector.broadcast %8 : vector<1x32xf32> to vector<8x32xf32>
    %65 = arith.addf %63, %64 : vector<8x32xf32>
    %66 = arith.mulf %53, %65 : vector<8x32xf32>
    %67 = arith.addf %62, %66 : vector<8x32xf32>
    %68 = math.tanh %67 : vector<8x32xf32>
    %cst_26 = arith.constant 1.000000e+00 : f32
    %69 = vector.broadcast %cst_26 : f32 to vector<8x32xf32>
    %70 = arith.subf %69, %61 : vector<8x32xf32>
    %71 = arith.mulf %70, %68 : vector<8x32xf32>
    %72 = arith.mulf %61, %39 : vector<8x32xf32>
    %73 = arith.addf %71, %72 : vector<8x32xf32>
    %c0_27 = arith.constant 0 : index
    %c1_28 = arith.constant 1 : index
    %c0_29 = arith.constant 0 : index
    %c0_30 = arith.constant 0 : index
    %74 = vector.load %arg7[%c0_27, %c1_28, %c0_29, %c0_30] : memref<2x4x8x32xf32, #tpu.memory_space<vmem>>, vector<1x1x8x32xf32>
    %75 = vector.shape_cast %74 : vector<1x1x8x32xf32> to vector<8x32xf32>
    %76 = vector.shape_cast %73 : vector<8x32xf32> to vector<1x1x8x32xf32>
    tpu.vector_store %arg7[%c0_27, %c1_28, %c0_29, %c0_30], %76 {strides = array<i32>} : memref<2x4x8x32xf32, #tpu.memory_space<vmem>>, vector<1x1x8x32xf32>,
    %c0_31 = arith.constant 0 : index
    %c2 = arith.constant 2 : index
    %c0_32 = arith.constant 0 : index
    %c0_33 = arith.constant 0 : index
    %77 = vector.load %arg1[%c0_31, %c2, %c0_32, %c0_33] : memref<2x4x8x96xf32, #tpu.memory_space<vmem>>, vector<1x1x8x96xf32>
    %78 = vector.shape_cast %77 : vector<1x1x8x96xf32> to vector<8x96xf32>
    %cst_34 = arith.constant dense<0.000000e+00> : vector<8x96xf32>
    %79 = tpu.matmul %73, %6, %cst_34 {dimension_numbers = #tpu.dot_dimension_numbers<[1], [0], [0], [1], [0, 0, 1, 1], [], []>} : vector<8x32xf32>, vector<32x96xf32>, vector<8x96xf32> -> vector<8x96xf32>
    %80 = vector.extract_strided_slice %78 {offsets = [0, 0], sizes = [8, 32], strides = [1, 1]} : vector<8x96xf32> to vector<8x32xf32>
    %81 = vector.extract_strided_slice %79 {offsets = [0, 0], sizes = [8, 32], strides = [1, 1]} : vector<8x96xf32> to vector<8x32xf32>
    %82 = arith.addf %80, %81 : vector<8x32xf32>
    %83 = arith.negf %82 : vector<8x32xf32>
    %84 = math.exp %83 : vector<8x32xf32>
    %cst_35 = arith.constant 1.000000e+00 : f32
    %85 = vector.broadcast %cst_35 : f32 to vector<8x32xf32>
    %86 = arith.addf %85, %84 : vector<8x32xf32>
    %87 = arith.divf %85, %86 : vector<8x32xf32>
    %88 = vector.extract_strided_slice %78 {offsets = [0, 32], sizes = [8, 32], strides = [1, 1]} : vector<8x96xf32> to vector<8x32xf32>
    %89 = vector.extract_strided_slice %79 {offsets = [0, 32], sizes = [8, 32], strides = [1, 1]} : vector<8x96xf32> to vector<8x32xf32>
    %90 = arith.addf %88, %89 : vector<8x32xf32>
    %91 = arith.negf %90 : vector<8x32xf32>
    %92 = math.exp %91 : vector<8x32xf32>
    %cst_36 = arith.constant 1.000000e+00 : f32
    %93 = vector.broadcast %cst_36 : f32 to vector<8x32xf32>
    %94 = arith.addf %93, %92 : vector<8x32xf32>
    %95 = arith.divf %93, %94 : vector<8x32xf32>
    %96 = vector.extract_strided_slice %78 {offsets = [0, 64], sizes = [8, 32], strides = [1, 1]} : vector<8x96xf32> to vector<8x32xf32>
    %97 = vector.extract_strided_slice %79 {offsets = [0, 64], sizes = [8, 32], strides = [1, 1]} : vector<8x96xf32> to vector<8x32xf32>
    %98 = vector.broadcast %8 : vector<1x32xf32> to vector<8x32xf32>
    %99 = arith.addf %97, %98 : vector<8x32xf32>
    %100 = arith.mulf %87, %99 : vector<8x32xf32>
    %101 = arith.addf %96, %100 : vector<8x32xf32>
    %102 = math.tanh %101 : vector<8x32xf32>
    %cst_37 = arith.constant 1.000000e+00 : f32
    %103 = vector.broadcast %cst_37 : f32 to vector<8x32xf32>
    %104 = arith.subf %103, %95 : vector<8x32xf32>
    %105 = arith.mulf %104, %102 : vector<8x32xf32>
    %106 = arith.mulf %95, %73 : vector<8x32xf32>
    %107 = arith.addf %105, %106 : vector<8x32xf32>
    %c0_38 = arith.constant 0 : index
    %c2_39 = arith.constant 2 : index
    %c0_40 = arith.constant 0 : index
    %c0_41 = arith.constant 0 : index
    %108 = vector.load %arg7[%c0_38, %c2_39, %c0_40, %c0_41] : memref<2x4x8x32xf32, #tpu.memory_space<vmem>>, vector<1x1x8x32xf32>
    %109 = vector.shape_cast %108 : vector<1x1x8x32xf32> to vector<8x32xf32>
    %110 = vector.shape_cast %107 : vector<8x32xf32> to vector<1x1x8x32xf32>
    tpu.vector_store %arg7[%c0_38, %c2_39, %c0_40, %c0_41], %110 {strides = array<i32>} : memref<2x4x8x32xf32, #tpu.memory_space<vmem>>, vector<1x1x8x32xf32>,
    %c0_42 = arith.constant 0 : index
    %c3 = arith.constant 3 : index
    %c0_43 = arith.constant 0 : index
    %c0_44 = arith.constant 0 : index
    %111 = vector.load %arg1[%c0_42, %c3, %c0_43, %c0_44] : memref<2x4x8x96xf32, #tpu.memory_space<vmem>>, vector<1x1x8x96xf32>
    %112 = vector.shape_cast %111 : vector<1x1x8x96xf32> to vector<8x96xf32>
    %cst_45 = arith.constant dense<0.000000e+00> : vector<8x96xf32>
    %113 = tpu.matmul %107, %6, %cst_45 {dimension_numbers = #tpu.dot_dimension_numbers<[1], [0], [0], [1], [0, 0, 1, 1], [], []>} : vector<8x32xf32>, vector<32x96xf32>, vector<8x96xf32> -> vector<8x96xf32>
    %114 = vector.extract_strided_slice %112 {offsets = [0, 0], sizes = [8, 32], strides = [1, 1]} : vector<8x96xf32> to vector<8x32xf32>
    %115 = vector.extract_strided_slice %113 {offsets = [0, 0], sizes = [8, 32], strides = [1, 1]} : vector<8x96xf32> to vector<8x32xf32>
    %116 = arith.addf %114, %115 : vector<8x32xf32>
    %117 = arith.negf %116 : vector<8x32xf32>
    %118 = math.exp %117 : vector<8x32xf32>
    %cst_46 = arith.constant 1.000000e+00 : f32
    %119 = vector.broadcast %cst_46 : f32 to vector<8x32xf32>
    %120 = arith.addf %119, %118 : vector<8x32xf32>
    %121 = arith.divf %119, %120 : vector<8x32xf32>
    %122 = vector.extract_strided_slice %112 {offsets = [0, 32], sizes = [8, 32], strides = [1, 1]} : vector<8x96xf32> to vector<8x32xf32>
    %123 = vector.extract_strided_slice %113 {offsets = [0, 32], sizes = [8, 32], strides = [1, 1]} : vector<8x96xf32> to vector<8x32xf32>
    %124 = arith.addf %122, %123 : vector<8x32xf32>
    %125 = arith.negf %124 : vector<8x32xf32>
    %126 = math.exp %125 : vector<8x32xf32>
    %cst_47 = arith.constant 1.000000e+00 : f32
    %127 = vector.broadcast %cst_47 : f32 to vector<8x32xf32>
    %128 = arith.addf %127, %126 : vector<8x32xf32>
    %129 = arith.divf %127, %128 : vector<8x32xf32>
    %130 = vector.extract_strided_slice %112 {offsets = [0, 64], sizes = [8, 32], strides = [1, 1]} : vector<8x96xf32> to vector<8x32xf32>
    %131 = vector.extract_strided_slice %113 {offsets = [0, 64], sizes = [8, 32], strides = [1, 1]} : vector<8x96xf32> to vector<8x32xf32>
    %132 = vector.broadcast %8 : vector<1x32xf32> to vector<8x32xf32>
    %133 = arith.addf %131, %132 : vector<8x32xf32>
    %134 = arith.mulf %121, %133 : vector<8x32xf32>
    %135 = arith.addf %130, %134 : vector<8x32xf32>
    %136 = math.tanh %135 : vector<8x32xf32>
    %cst_48 = arith.constant 1.000000e+00 : f32
    %137 = vector.broadcast %cst_48 : f32 to vector<8x32xf32>
    %138 = arith.subf %137, %129 : vector<8x32xf32>
    %139 = arith.mulf %138, %136 : vector<8x32xf32>
    %140 = arith.mulf %129, %107 : vector<8x32xf32>
    %141 = arith.addf %139, %140 : vector<8x32xf32>
    %c0_49 = arith.constant 0 : index
    %c3_50 = arith.constant 3 : index
    %c0_51 = arith.constant 0 : index
    %c0_52 = arith.constant 0 : index
    %142 = vector.load %arg7[%c0_49, %c3_50, %c0_51, %c0_52] : memref<2x4x8x32xf32, #tpu.memory_space<vmem>>, vector<1x1x8x32xf32>
    %143 = vector.shape_cast %142 : vector<1x1x8x32xf32> to vector<8x32xf32>
    %144 = vector.shape_cast %141 : vector<8x32xf32> to vector<1x1x8x32xf32>
    tpu.vector_store %arg7[%c0_49, %c3_50, %c0_51, %c0_52], %144 {strides = array<i32>} : memref<2x4x8x32xf32, #tpu.memory_space<vmem>>, vector<1x1x8x32xf32>,
    %c0_53 = arith.constant 0 : index
    %c0_54 = arith.constant 0 : index
    %c0_55 = arith.constant 0 : index
    %145 = vector.load %arg9[%c0_53, %c0_54, %c0_55] : memref<2x8x32xf32, #tpu.memory_space<vmem>>, vector<1x8x32xf32>
    %146 = vector.shape_cast %145 : vector<1x8x32xf32> to vector<8x32xf32>
    %147 = vector.shape_cast %141 : vector<8x32xf32> to vector<1x8x32xf32>
    tpu.vector_store %arg9[%c0_53, %c0_54, %c0_55], %147 {strides = array<i32>} : memref<2x8x32xf32, #tpu.memory_space<vmem>>, vector<1x8x32xf32>,
    %c1_56 = arith.constant 1 : index
    %c0_57 = arith.constant 0 : index
    %c0_58 = arith.constant 0 : index
    %148 = vector.load %arg9[%c1_56, %c0_57, %c0_58] : memref<2x8x32xf32, #tpu.memory_space<vmem>>, vector<1x8x32xf32>
    %149 = vector.shape_cast %148 : vector<1x8x32xf32> to vector<8x32xf32>
    %c1_59 = arith.constant 1 : index
    %c0_60 = arith.constant 0 : index
    %c0_61 = arith.constant 0 : index
    %150 = vector.load %arg3[%c1_59, %c0_60, %c0_61] : memref<2x32x96xf32, #tpu.memory_space<vmem>>, vector<1x32x96xf32>
    %151 = vector.shape_cast %150 : vector<1x32x96xf32> to vector<32x96xf32>
    %c1_62 = arith.constant 1 : index
    %c0_63 = arith.constant 0 : index
    %c0_64 = arith.constant 0 : index
    %152 = vector.load %arg5[%c1_62, %c0_63, %c0_64] : memref<2x1x32xf32, #tpu.memory_space<vmem>>, vector<1x1x32xf32>
    %153 = vector.shape_cast %152 : vector<1x1x32xf32> to vector<1x32xf32>
    %c1_65 = arith.constant 1 : index
    %c0_66 = arith.constant 0 : index
    %c0_67 = arith.constant 0 : index
    %c0_68 = arith.constant 0 : index
    %154 = vector.load %arg1[%c1_65, %c0_66, %c0_67, %c0_68] : memref<2x4x8x96xf32, #tpu.memory_space<vmem>>, vector<1x1x8x96xf32>
    %155 = vector.shape_cast %154 : vector<1x1x8x96xf32> to vector<8x96xf32>
    %cst_69 = arith.constant dense<0.000000e+00> : vector<8x96xf32>
    %156 = tpu.matmul %149, %151, %cst_69 {dimension_numbers = #tpu.dot_dimension_numbers<[1], [0], [0], [1], [0, 0, 1, 1], [], []>} : vector<8x32xf32>, vector<32x96xf32>, vector<8x96xf32> -> vector<8x96xf32>
    %157 = vector.extract_strided_slice %155 {offsets = [0, 0], sizes = [8, 32], strides = [1, 1]} : vector<8x96xf32> to vector<8x32xf32>
    %158 = vector.extract_strided_slice %156 {offsets = [0, 0], sizes = [8, 32], strides = [1, 1]} : vector<8x96xf32> to vector<8x32xf32>
    %159 = arith.addf %157, %158 : vector<8x32xf32>
    %160 = arith.negf %159 : vector<8x32xf32>
    %161 = math.exp %160 : vector<8x32xf32>
    %cst_70 = arith.constant 1.000000e+00 : f32
    %162 = vector.broadcast %cst_70 : f32 to vector<8x32xf32>
    %163 = arith.addf %162, %161 : vector<8x32xf32>
    %164 = arith.divf %162, %163 : vector<8x32xf32>
    %165 = vector.extract_strided_slice %155 {offsets = [0, 32], sizes = [8, 32], strides = [1, 1]} : vector<8x96xf32> to vector<8x32xf32>
    %166 = vector.extract_strided_slice %156 {offsets = [0, 32], sizes = [8, 32], strides = [1, 1]} : vector<8x96xf32> to vector<8x32xf32>
    %167 = arith.addf %165, %166 : vector<8x32xf32>
    %168 = arith.negf %167 : vector<8x32xf32>
    %169 = math.exp %168 : vector<8x32xf32>
    %cst_71 = arith.constant 1.000000e+00 : f32
    %170 = vector.broadcast %cst_71 : f32 to vector<8x32xf32>
    %171 = arith.addf %170, %169 : vector<8x32xf32>
    %172 = arith.divf %170, %171 : vector<8x32xf32>
    %173 = vector.extract_strided_slice %155 {offsets = [0, 64], sizes = [8, 32], strides = [1, 1]} : vector<8x96xf32> to vector<8x32xf32>
    %174 = vector.extract_strided_slice %156 {offsets = [0, 64], sizes = [8, 32], strides = [1, 1]} : vector<8x96xf32> to vector<8x32xf32>
    %175 = vector.broadcast %153 : vector<1x32xf32> to vector<8x32xf32>
    %176 = arith.addf %174, %175 : vector<8x32xf32>
    %177 = arith.mulf %164, %176 : vector<8x32xf32>
    %178 = arith.addf %173, %177 : vector<8x32xf32>
    %179 = math.tanh %178 : vector<8x32xf32>
    %cst_72 = arith.constant 1.000000e+00 : f32
    %180 = vector.broadcast %cst_72 : f32 to vector<8x32xf32>
    %181 = arith.subf %180, %172 : vector<8x32xf32>
    %182 = arith.mulf %181, %179 : vector<8x32xf32>
    %183 = arith.mulf %172, %149 : vector<8x32xf32>
    %184 = arith.addf %182, %183 : vector<8x32xf32>
    %c1_73 = arith.constant 1 : index
    %c0_74 = arith.constant 0 : index
    %c0_75 = arith.constant 0 : index
    %c0_76 = arith.constant 0 : index
    %185 = vector.load %arg7[%c1_73, %c0_74, %c0_75, %c0_76] : memref<2x4x8x32xf32, #tpu.memory_space<vmem>>, vector<1x1x8x32xf32>
    %186 = vector.shape_cast %185 : vector<1x1x8x32xf32> to vector<8x32xf32>
    %187 = vector.shape_cast %184 : vector<8x32xf32> to vector<1x1x8x32xf32>
    tpu.vector_store %arg7[%c1_73, %c0_74, %c0_75, %c0_76], %187 {strides = array<i32>} : memref<2x4x8x32xf32, #tpu.memory_space<vmem>>, vector<1x1x8x32xf32>,
    %c1_77 = arith.constant 1 : index
    %c1_78 = arith.constant 1 : index
    %c0_79 = arith.constant 0 : index
    %c0_80 = arith.constant 0 : index
    %188 = vector.load %arg1[%c1_77, %c1_78, %c0_79, %c0_80] : memref<2x4x8x96xf32, #tpu.memory_space<vmem>>, vector<1x1x8x96xf32>
    %189 = vector.shape_cast %188 : vector<1x1x8x96xf32> to vector<8x96xf32>
    %cst_81 = arith.constant dense<0.000000e+00> : vector<8x96xf32>
    %190 = tpu.matmul %184, %151, %cst_81 {dimension_numbers = #tpu.dot_dimension_numbers<[1], [0], [0], [1], [0, 0, 1, 1], [], []>} : vector<8x32xf32>, vector<32x96xf32>, vector<8x96xf32> -> vector<8x96xf32>
    %191 = vector.extract_strided_slice %189 {offsets = [0, 0], sizes = [8, 32], strides = [1, 1]} : vector<8x96xf32> to vector<8x32xf32>
    %192 = vector.extract_strided_slice %190 {offsets = [0, 0], sizes = [8, 32], strides = [1, 1]} : vector<8x96xf32> to vector<8x32xf32>
    %193 = arith.addf %191, %192 : vector<8x32xf32>
    %194 = arith.negf %193 : vector<8x32xf32>
    %195 = math.exp %194 : vector<8x32xf32>
    %cst_82 = arith.constant 1.000000e+00 : f32
    %196 = vector.broadcast %cst_82 : f32 to vector<8x32xf32>
    %197 = arith.addf %196, %195 : vector<8x32xf32>
    %198 = arith.divf %196, %197 : vector<8x32xf32>
    %199 = vector.extract_strided_slice %189 {offsets = [0, 32], sizes = [8, 32], strides = [1, 1]} : vector<8x96xf32> to vector<8x32xf32>
    %200 = vector.extract_strided_slice %190 {offsets = [0, 32], sizes = [8, 32], strides = [1, 1]} : vector<8x96xf32> to vector<8x32xf32>
    %201 = arith.addf %199, %200 : vector<8x32xf32>
    %202 = arith.negf %201 : vector<8x32xf32>
    %203 = math.exp %202 : vector<8x32xf32>
    %cst_83 = arith.constant 1.000000e+00 : f32
    %204 = vector.broadcast %cst_83 : f32 to vector<8x32xf32>
    %205 = arith.addf %204, %203 : vector<8x32xf32>
    %206 = arith.divf %204, %205 : vector<8x32xf32>
    %207 = vector.extract_strided_slice %189 {offsets = [0, 64], sizes = [8, 32], strides = [1, 1]} : vector<8x96xf32> to vector<8x32xf32>
    %208 = vector.extract_strided_slice %190 {offsets = [0, 64], sizes = [8, 32], strides = [1, 1]} : vector<8x96xf32> to vector<8x32xf32>
    %209 = vector.broadcast %153 : vector<1x32xf32> to vector<8x32xf32>
    %210 = arith.addf %208, %209 : vector<8x32xf32>
    %211 = arith.mulf %198, %210 : vector<8x32xf32>
    %212 = arith.addf %207, %211 : vector<8x32xf32>
    %213 = math.tanh %212 : vector<8x32xf32>
    %cst_84 = arith.constant 1.000000e+00 : f32
    %214 = vector.broadcast %cst_84 : f32 to vector<8x32xf32>
    %215 = arith.subf %214, %206 : vector<8x32xf32>
    %216 = arith.mulf %215, %213 : vector<8x32xf32>
    %217 = arith.mulf %206, %184 : vector<8x32xf32>
    %218 = arith.addf %216, %217 : vector<8x32xf32>
    %c1_85 = arith.constant 1 : index
    %c1_86 = arith.constant 1 : index
    %c0_87 = arith.constant 0 : index
    %c0_88 = arith.constant 0 : index
    %219 = vector.load %arg7[%c1_85, %c1_86, %c0_87, %c0_88] : memref<2x4x8x32xf32, #tpu.memory_space<vmem>>, vector<1x1x8x32xf32>
    %220 = vector.shape_cast %219 : vector<1x1x8x32xf32> to vector<8x32xf32>
    %221 = vector.shape_cast %218 : vector<8x32xf32> to vector<1x1x8x32xf32>
    tpu.vector_store %arg7[%c1_85, %c1_86, %c0_87, %c0_88], %221 {strides = array<i32>} : memref<2x4x8x32xf32, #tpu.memory_space<vmem>>, vector<1x1x8x32xf32>,
    %c1_89 = arith.constant 1 : index
    %c2_90 = arith.constant 2 : index
    %c0_91 = arith.constant 0 : index
    %c0_92 = arith.constant 0 : index
    %222 = vector.load %arg1[%c1_89, %c2_90, %c0_91, %c0_92] : memref<2x4x8x96xf32, #tpu.memory_space<vmem>>, vector<1x1x8x96xf32>
    %223 = vector.shape_cast %222 : vector<1x1x8x96xf32> to vector<8x96xf32>
    %cst_93 = arith.constant dense<0.000000e+00> : vector<8x96xf32>
    %224 = tpu.matmul %218, %151, %cst_93 {dimension_numbers = #tpu.dot_dimension_numbers<[1], [0], [0], [1], [0, 0, 1, 1], [], []>} : vector<8x32xf32>, vector<32x96xf32>, vector<8x96xf32> -> vector<8x96xf32>
    %225 = vector.extract_strided_slice %223 {offsets = [0, 0], sizes = [8, 32], strides = [1, 1]} : vector<8x96xf32> to vector<8x32xf32>
    %226 = vector.extract_strided_slice %224 {offsets = [0, 0], sizes = [8, 32], strides = [1, 1]} : vector<8x96xf32> to vector<8x32xf32>
    %227 = arith.addf %225, %226 : vector<8x32xf32>
    %228 = arith.negf %227 : vector<8x32xf32>
    %229 = math.exp %228 : vector<8x32xf32>
    %cst_94 = arith.constant 1.000000e+00 : f32
    %230 = vector.broadcast %cst_94 : f32 to vector<8x32xf32>
    %231 = arith.addf %230, %229 : vector<8x32xf32>
    %232 = arith.divf %230, %231 : vector<8x32xf32>
    %233 = vector.extract_strided_slice %223 {offsets = [0, 32], sizes = [8, 32], strides = [1, 1]} : vector<8x96xf32> to vector<8x32xf32>
    %234 = vector.extract_strided_slice %224 {offsets = [0, 32], sizes = [8, 32], strides = [1, 1]} : vector<8x96xf32> to vector<8x32xf32>
    %235 = arith.addf %233, %234 : vector<8x32xf32>
    %236 = arith.negf %235 : vector<8x32xf32>
    %237 = math.exp %236 : vector<8x32xf32>
    %cst_95 = arith.constant 1.000000e+00 : f32
    %238 = vector.broadcast %cst_95 : f32 to vector<8x32xf32>
    %239 = arith.addf %238, %237 : vector<8x32xf32>
    %240 = arith.divf %238, %239 : vector<8x32xf32>
    %241 = vector.extract_strided_slice %223 {offsets = [0, 64], sizes = [8, 32], strides = [1, 1]} : vector<8x96xf32> to vector<8x32xf32>
    %242 = vector.extract_strided_slice %224 {offsets = [0, 64], sizes = [8, 32], strides = [1, 1]} : vector<8x96xf32> to vector<8x32xf32>
    %243 = vector.broadcast %153 : vector<1x32xf32> to vector<8x32xf32>
    %244 = arith.addf %242, %243 : vector<8x32xf32>
    %245 = arith.mulf %232, %244 : vector<8x32xf32>
    %246 = arith.addf %241, %245 : vector<8x32xf32>
    %247 = math.tanh %246 : vector<8x32xf32>
    %cst_96 = arith.constant 1.000000e+00 : f32
    %248 = vector.broadcast %cst_96 : f32 to vector<8x32xf32>
    %249 = arith.subf %248, %240 : vector<8x32xf32>
    %250 = arith.mulf %249, %247 : vector<8x32xf32>
    %251 = arith.mulf %240, %218 : vector<8x32xf32>
    %252 = arith.addf %250, %251 : vector<8x32xf32>
    %c1_97 = arith.constant 1 : index
    %c2_98 = arith.constant 2 : index
    %c0_99 = arith.constant 0 : index
    %c0_100 = arith.constant 0 : index
    %253 = vector.load %arg7[%c1_97, %c2_98, %c0_99, %c0_100] : memref<2x4x8x32xf32, #tpu.memory_space<vmem>>, vector<1x1x8x32xf32>
    %254 = vector.shape_cast %253 : vector<1x1x8x32xf32> to vector<8x32xf32>
    %255 = vector.shape_cast %252 : vector<8x32xf32> to vector<1x1x8x32xf32>
    tpu.vector_store %arg7[%c1_97, %c2_98, %c0_99, %c0_100], %255 {strides = array<i32>} : memref<2x4x8x32xf32, #tpu.memory_space<vmem>>, vector<1x1x8x32xf32>,
    %c1_101 = arith.constant 1 : index
    %c3_102 = arith.constant 3 : index
    %c0_103 = arith.constant 0 : index
    %c0_104 = arith.constant 0 : index
    %256 = vector.load %arg1[%c1_101, %c3_102, %c0_103, %c0_104] : memref<2x4x8x96xf32, #tpu.memory_space<vmem>>, vector<1x1x8x96xf32>
    %257 = vector.shape_cast %256 : vector<1x1x8x96xf32> to vector<8x96xf32>
    %cst_105 = arith.constant dense<0.000000e+00> : vector<8x96xf32>
    %258 = tpu.matmul %252, %151, %cst_105 {dimension_numbers = #tpu.dot_dimension_numbers<[1], [0], [0], [1], [0, 0, 1, 1], [], []>} : vector<8x32xf32>, vector<32x96xf32>, vector<8x96xf32> -> vector<8x96xf32>
    %259 = vector.extract_strided_slice %257 {offsets = [0, 0], sizes = [8, 32], strides = [1, 1]} : vector<8x96xf32> to vector<8x32xf32>
    %260 = vector.extract_strided_slice %258 {offsets = [0, 0], sizes = [8, 32], strides = [1, 1]} : vector<8x96xf32> to vector<8x32xf32>
    %261 = arith.addf %259, %260 : vector<8x32xf32>
    %262 = arith.negf %261 : vector<8x32xf32>
    %263 = math.exp %262 : vector<8x32xf32>
    %cst_106 = arith.constant 1.000000e+00 : f32
    %264 = vector.broadcast %cst_106 : f32 to vector<8x32xf32>
    %265 = arith.addf %264, %263 : vector<8x32xf32>
    %266 = arith.divf %264, %265 : vector<8x32xf32>
    %267 = vector.extract_strided_slice %257 {offsets = [0, 32], sizes = [8, 32], strides = [1, 1]} : vector<8x96xf32> to vector<8x32xf32>
    %268 = vector.extract_strided_slice %258 {offsets = [0, 32], sizes = [8, 32], strides = [1, 1]} : vector<8x96xf32> to vector<8x32xf32>
    %269 = arith.addf %267, %268 : vector<8x32xf32>
    %270 = arith.negf %269 : vector<8x32xf32>
    %271 = math.exp %270 : vector<8x32xf32>
    %cst_107 = arith.constant 1.000000e+00 : f32
    %272 = vector.broadcast %cst_107 : f32 to vector<8x32xf32>
    %273 = arith.addf %272, %271 : vector<8x32xf32>
    %274 = arith.divf %272, %273 : vector<8x32xf32>
    %275 = vector.extract_strided_slice %257 {offsets = [0, 64], sizes = [8, 32], strides = [1, 1]} : vector<8x96xf32> to vector<8x32xf32>
    %276 = vector.extract_strided_slice %258 {offsets = [0, 64], sizes = [8, 32], strides = [1, 1]} : vector<8x96xf32> to vector<8x32xf32>
    %277 = vector.broadcast %153 : vector<1x32xf32> to vector<8x32xf32>
    %278 = arith.addf %276, %277 : vector<8x32xf32>
    %279 = arith.mulf %266, %278 : vector<8x32xf32>
    %280 = arith.addf %275, %279 : vector<8x32xf32>
    %281 = math.tanh %280 : vector<8x32xf32>
    %cst_108 = arith.constant 1.000000e+00 : f32
    %282 = vector.broadcast %cst_108 : f32 to vector<8x32xf32>
    %283 = arith.subf %282, %274 : vector<8x32xf32>
    %284 = arith.mulf %283, %281 : vector<8x32xf32>
    %285 = arith.mulf %274, %252 : vector<8x32xf32>
    %286 = arith.addf %284, %285 : vector<8x32xf32>
    %c1_109 = arith.constant 1 : index
    %c3_110 = arith.constant 3 : index
    %c0_111 = arith.constant 0 : index
    %c0_112 = arith.constant 0 : index
    %287 = vector.load %arg7[%c1_109, %c3_110, %c0_111, %c0_112] : memref<2x4x8x32xf32, #tpu.memory_space<vmem>>, vector<1x1x8x32xf32>
    %288 = vector.shape_cast %287 : vector<1x1x8x32xf32> to vector<8x32xf32>
    %289 = vector.shape_cast %286 : vector<8x32xf32> to vector<1x1x8x32xf32>
    tpu.vector_store %arg7[%c1_109, %c3_110, %c0_111, %c0_112], %289 {strides = array<i32>} : memref<2x4x8x32xf32, #tpu.memory_space<vmem>>, vector<1x1x8x32xf32>,
    %c1_113 = arith.constant 1 : index
    %c0_114 = arith.constant 0 : index
    %c0_115 = arith.constant 0 : index
    %290 = vector.load %arg9[%c1_113, %c0_114, %c0_115] : memref<2x8x32xf32, #tpu.memory_space<vmem>>, vector<1x8x32xf32>
    %291 = vector.shape_cast %290 : vector<1x8x32xf32> to vector<8x32xf32>
    %292 = vector.shape_cast %286 : vector<8x32xf32> to vector<1x8x32xf32>
    tpu.vector_store %arg9[%c1_113, %c0_114, %c0_115], %292 {strides = array<i32>} : memref<2x8x32xf32, #tpu.memory_space<vmem>>, vector<1x8x32xf32>,
    %c0_116 = arith.constant 0 : index
    %c0_117 = arith.constant 0 : index
    %c0_118 = arith.constant 0 : index
    %293 = vector.load %arg10[%c0_116, %c0_117, %c0_118] : memref<2x8x32xf32, #tpu.memory_space<vmem>>, vector<1x8x32xf32>
    %294 = vector.shape_cast %293 : vector<1x8x32xf32> to vector<8x32xf32>
    %c0_119 = arith.constant 0 : index
    %c0_120 = arith.constant 0 : index
    %c0_121 = arith.constant 0 : index
    %295 = vector.load %arg4[%c0_119, %c0_120, %c0_121] : memref<2x32x96xf32, #tpu.memory_space<vmem>>, vector<1x32x96xf32>
    %296 = vector.shape_cast %295 : vector<1x32x96xf32> to vector<32x96xf32>
    %c0_122 = arith.constant 0 : index
    %c0_123 = arith.constant 0 : index
    %c0_124 = arith.constant 0 : index
    %297 = vector.load %arg6[%c0_122, %c0_123, %c0_124] : memref<2x1x32xf32, #tpu.memory_space<vmem>>, vector<1x1x32xf32>
    %298 = vector.shape_cast %297 : vector<1x1x32xf32> to vector<1x32xf32>
    %c0_125 = arith.constant 0 : index
    %c3_126 = arith.constant 3 : index
    %c0_127 = arith.constant 0 : index
    %c0_128 = arith.constant 0 : index
    %299 = vector.load %arg2[%c0_125, %c3_126, %c0_127, %c0_128] : memref<2x4x8x96xf32, #tpu.memory_space<vmem>>, vector<1x1x8x96xf32>
    %300 = vector.shape_cast %299 : vector<1x1x8x96xf32> to vector<8x96xf32>
    %cst_129 = arith.constant dense<0.000000e+00> : vector<8x96xf32>
    %301 = tpu.matmul %294, %296, %cst_129 {dimension_numbers = #tpu.dot_dimension_numbers<[1], [0], [0], [1], [0, 0, 1, 1], [], []>} : vector<8x32xf32>, vector<32x96xf32>, vector<8x96xf32> -> vector<8x96xf32>
    %302 = vector.extract_strided_slice %300 {offsets = [0, 0], sizes = [8, 32], strides = [1, 1]} : vector<8x96xf32> to vector<8x32xf32>
    %303 = vector.extract_strided_slice %301 {offsets = [0, 0], sizes = [8, 32], strides = [1, 1]} : vector<8x96xf32> to vector<8x32xf32>
    %304 = arith.addf %302, %303 : vector<8x32xf32>
    %305 = arith.negf %304 : vector<8x32xf32>
    %306 = math.exp %305 : vector<8x32xf32>
    %cst_130 = arith.constant 1.000000e+00 : f32
    %307 = vector.broadcast %cst_130 : f32 to vector<8x32xf32>
    %308 = arith.addf %307, %306 : vector<8x32xf32>
    %309 = arith.divf %307, %308 : vector<8x32xf32>
    %310 = vector.extract_strided_slice %300 {offsets = [0, 32], sizes = [8, 32], strides = [1, 1]} : vector<8x96xf32> to vector<8x32xf32>
    %311 = vector.extract_strided_slice %301 {offsets = [0, 32], sizes = [8, 32], strides = [1, 1]} : vector<8x96xf32> to vector<8x32xf32>
    %312 = arith.addf %310, %311 : vector<8x32xf32>
    %313 = arith.negf %312 : vector<8x32xf32>
    %314 = math.exp %313 : vector<8x32xf32>
    %cst_131 = arith.constant 1.000000e+00 : f32
    %315 = vector.broadcast %cst_131 : f32 to vector<8x32xf32>
    %316 = arith.addf %315, %314 : vector<8x32xf32>
    %317 = arith.divf %315, %316 : vector<8x32xf32>
    %318 = vector.extract_strided_slice %300 {offsets = [0, 64], sizes = [8, 32], strides = [1, 1]} : vector<8x96xf32> to vector<8x32xf32>
    %319 = vector.extract_strided_slice %301 {offsets = [0, 64], sizes = [8, 32], strides = [1, 1]} : vector<8x96xf32> to vector<8x32xf32>
    %320 = vector.broadcast %298 : vector<1x32xf32> to vector<8x32xf32>
    %321 = arith.addf %319, %320 : vector<8x32xf32>
    %322 = arith.mulf %309, %321 : vector<8x32xf32>
    %323 = arith.addf %318, %322 : vector<8x32xf32>
    %324 = math.tanh %323 : vector<8x32xf32>
    %cst_132 = arith.constant 1.000000e+00 : f32
    %325 = vector.broadcast %cst_132 : f32 to vector<8x32xf32>
    %326 = arith.subf %325, %317 : vector<8x32xf32>
    %327 = arith.mulf %326, %324 : vector<8x32xf32>
    %328 = arith.mulf %317, %294 : vector<8x32xf32>
    %329 = arith.addf %327, %328 : vector<8x32xf32>
    %c0_133 = arith.constant 0 : index
    %c3_134 = arith.constant 3 : index
    %c0_135 = arith.constant 0 : index
    %c0_136 = arith.constant 0 : index
    %330 = vector.load %arg8[%c0_133, %c3_134, %c0_135, %c0_136] : memref<2x4x8x32xf32, #tpu.memory_space<vmem>>, vector<1x1x8x32xf32>
    %331 = vector.shape_cast %330 : vector<1x1x8x32xf32> to vector<8x32xf32>
    %332 = vector.shape_cast %329 : vector<8x32xf32> to vector<1x1x8x32xf32>
    tpu.vector_store %arg8[%c0_133, %c3_134, %c0_135, %c0_136], %332 {strides = array<i32>} : memref<2x4x8x32xf32, #tpu.memory_space<vmem>>, vector<1x1x8x32xf32>,
    %c0_137 = arith.constant 0 : index
    %c2_138 = arith.constant 2 : index
    %c0_139 = arith.constant 0 : index
    %c0_140 = arith.constant 0 : index
    %333 = vector.load %arg2[%c0_137, %c2_138, %c0_139, %c0_140] : memref<2x4x8x96xf32, #tpu.memory_space<vmem>>, vector<1x1x8x96xf32>
    %334 = vector.shape_cast %333 : vector<1x1x8x96xf32> to vector<8x96xf32>
    %cst_141 = arith.constant dense<0.000000e+00> : vector<8x96xf32>
    %335 = tpu.matmul %329, %296, %cst_141 {dimension_numbers = #tpu.dot_dimension_numbers<[1], [0], [0], [1], [0, 0, 1, 1], [], []>} : vector<8x32xf32>, vector<32x96xf32>, vector<8x96xf32> -> vector<8x96xf32>
    %336 = vector.extract_strided_slice %334 {offsets = [0, 0], sizes = [8, 32], strides = [1, 1]} : vector<8x96xf32> to vector<8x32xf32>
    %337 = vector.extract_strided_slice %335 {offsets = [0, 0], sizes = [8, 32], strides = [1, 1]} : vector<8x96xf32> to vector<8x32xf32>
    %338 = arith.addf %336, %337 : vector<8x32xf32>
    %339 = arith.negf %338 : vector<8x32xf32>
    %340 = math.exp %339 : vector<8x32xf32>
    %cst_142 = arith.constant 1.000000e+00 : f32
    %341 = vector.broadcast %cst_142 : f32 to vector<8x32xf32>
    %342 = arith.addf %341, %340 : vector<8x32xf32>
    %343 = arith.divf %341, %342 : vector<8x32xf32>
    %344 = vector.extract_strided_slice %334 {offsets = [0, 32], sizes = [8, 32], strides = [1, 1]} : vector<8x96xf32> to vector<8x32xf32>
    %345 = vector.extract_strided_slice %335 {offsets = [0, 32], sizes = [8, 32], strides = [1, 1]} : vector<8x96xf32> to vector<8x32xf32>
    %346 = arith.addf %344, %345 : vector<8x32xf32>
    %347 = arith.negf %346 : vector<8x32xf32>
    %348 = math.exp %347 : vector<8x32xf32>
    %cst_143 = arith.constant 1.000000e+00 : f32
    %349 = vector.broadcast %cst_143 : f32 to vector<8x32xf32>
    %350 = arith.addf %349, %348 : vector<8x32xf32>
    %351 = arith.divf %349, %350 : vector<8x32xf32>
    %352 = vector.extract_strided_slice %334 {offsets = [0, 64], sizes = [8, 32], strides = [1, 1]} : vector<8x96xf32> to vector<8x32xf32>
    %353 = vector.extract_strided_slice %335 {offsets = [0, 64], sizes = [8, 32], strides = [1, 1]} : vector<8x96xf32> to vector<8x32xf32>
    %354 = vector.broadcast %298 : vector<1x32xf32> to vector<8x32xf32>
    %355 = arith.addf %353, %354 : vector<8x32xf32>
    %356 = arith.mulf %343, %355 : vector<8x32xf32>
    %357 = arith.addf %352, %356 : vector<8x32xf32>
    %358 = math.tanh %357 : vector<8x32xf32>
    %cst_144 = arith.constant 1.000000e+00 : f32
    %359 = vector.broadcast %cst_144 : f32 to vector<8x32xf32>
    %360 = arith.subf %359, %351 : vector<8x32xf32>
    %361 = arith.mulf %360, %358 : vector<8x32xf32>
    %362 = arith.mulf %351, %329 : vector<8x32xf32>
    %363 = arith.addf %361, %362 : vector<8x32xf32>
    %c0_145 = arith.constant 0 : index
    %c2_146 = arith.constant 2 : index
    %c0_147 = arith.constant 0 : index
    %c0_148 = arith.constant 0 : index
    %364 = vector.load %arg8[%c0_145, %c2_146, %c0_147, %c0_148] : memref<2x4x8x32xf32, #tpu.memory_space<vmem>>, vector<1x1x8x32xf32>
    %365 = vector.shape_cast %364 : vector<1x1x8x32xf32> to vector<8x32xf32>
    %366 = vector.shape_cast %363 : vector<8x32xf32> to vector<1x1x8x32xf32>
    tpu.vector_store %arg8[%c0_145, %c2_146, %c0_147, %c0_148], %366 {strides = array<i32>} : memref<2x4x8x32xf32, #tpu.memory_space<vmem>>, vector<1x1x8x32xf32>,
    %c0_149 = arith.constant 0 : index
    %c1_150 = arith.constant 1 : index
    %c0_151 = arith.constant 0 : index
    %c0_152 = arith.constant 0 : index
    %367 = vector.load %arg2[%c0_149, %c1_150, %c0_151, %c0_152] : memref<2x4x8x96xf32, #tpu.memory_space<vmem>>, vector<1x1x8x96xf32>
    %368 = vector.shape_cast %367 : vector<1x1x8x96xf32> to vector<8x96xf32>
    %cst_153 = arith.constant dense<0.000000e+00> : vector<8x96xf32>
    %369 = tpu.matmul %363, %296, %cst_153 {dimension_numbers = #tpu.dot_dimension_numbers<[1], [0], [0], [1], [0, 0, 1, 1], [], []>} : vector<8x32xf32>, vector<32x96xf32>, vector<8x96xf32> -> vector<8x96xf32>
    %370 = vector.extract_strided_slice %368 {offsets = [0, 0], sizes = [8, 32], strides = [1, 1]} : vector<8x96xf32> to vector<8x32xf32>
    %371 = vector.extract_strided_slice %369 {offsets = [0, 0], sizes = [8, 32], strides = [1, 1]} : vector<8x96xf32> to vector<8x32xf32>
    %372 = arith.addf %370, %371 : vector<8x32xf32>
    %373 = arith.negf %372 : vector<8x32xf32>
    %374 = math.exp %373 : vector<8x32xf32>
    %cst_154 = arith.constant 1.000000e+00 : f32
    %375 = vector.broadcast %cst_154 : f32 to vector<8x32xf32>
    %376 = arith.addf %375, %374 : vector<8x32xf32>
    %377 = arith.divf %375, %376 : vector<8x32xf32>
    %378 = vector.extract_strided_slice %368 {offsets = [0, 32], sizes = [8, 32], strides = [1, 1]} : vector<8x96xf32> to vector<8x32xf32>
    %379 = vector.extract_strided_slice %369 {offsets = [0, 32], sizes = [8, 32], strides = [1, 1]} : vector<8x96xf32> to vector<8x32xf32>
    %380 = arith.addf %378, %379 : vector<8x32xf32>
    %381 = arith.negf %380 : vector<8x32xf32>
    %382 = math.exp %381 : vector<8x32xf32>
    %cst_155 = arith.constant 1.000000e+00 : f32
    %383 = vector.broadcast %cst_155 : f32 to vector<8x32xf32>
    %384 = arith.addf %383, %382 : vector<8x32xf32>
    %385 = arith.divf %383, %384 : vector<8x32xf32>
    %386 = vector.extract_strided_slice %368 {offsets = [0, 64], sizes = [8, 32], strides = [1, 1]} : vector<8x96xf32> to vector<8x32xf32>
    %387 = vector.extract_strided_slice %369 {offsets = [0, 64], sizes = [8, 32], strides = [1, 1]} : vector<8x96xf32> to vector<8x32xf32>
    %388 = vector.broadcast %298 : vector<1x32xf32> to vector<8x32xf32>
    %389 = arith.addf %387, %388 : vector<8x32xf32>
    %390 = arith.mulf %377, %389 : vector<8x32xf32>
    %391 = arith.addf %386, %390 : vector<8x32xf32>
    %392 = math.tanh %391 : vector<8x32xf32>
    %cst_156 = arith.constant 1.000000e+00 : f32
    %393 = vector.broadcast %cst_156 : f32 to vector<8x32xf32>
    %394 = arith.subf %393, %385 : vector<8x32xf32>
    %395 = arith.mulf %394, %392 : vector<8x32xf32>
    %396 = arith.mulf %385, %363 : vector<8x32xf32>
    %397 = arith.addf %395, %396 : vector<8x32xf32>
    %c0_157 = arith.constant 0 : index
    %c1_158 = arith.constant 1 : index
    %c0_159 = arith.constant 0 : index
    %c0_160 = arith.constant 0 : index
    %398 = vector.load %arg8[%c0_157, %c1_158, %c0_159, %c0_160] : memref<2x4x8x32xf32, #tpu.memory_space<vmem>>, vector<1x1x8x32xf32>
    %399 = vector.shape_cast %398 : vector<1x1x8x32xf32> to vector<8x32xf32>
    %400 = vector.shape_cast %397 : vector<8x32xf32> to vector<1x1x8x32xf32>
    tpu.vector_store %arg8[%c0_157, %c1_158, %c0_159, %c0_160], %400 {strides = array<i32>} : memref<2x4x8x32xf32, #tpu.memory_space<vmem>>, vector<1x1x8x32xf32>,
    %c0_161 = arith.constant 0 : index
    %c0_162 = arith.constant 0 : index
    %c0_163 = arith.constant 0 : index
    %c0_164 = arith.constant 0 : index
    %401 = vector.load %arg2[%c0_161, %c0_162, %c0_163, %c0_164] : memref<2x4x8x96xf32, #tpu.memory_space<vmem>>, vector<1x1x8x96xf32>
    %402 = vector.shape_cast %401 : vector<1x1x8x96xf32> to vector<8x96xf32>
    %cst_165 = arith.constant dense<0.000000e+00> : vector<8x96xf32>
    %403 = tpu.matmul %397, %296, %cst_165 {dimension_numbers = #tpu.dot_dimension_numbers<[1], [0], [0], [1], [0, 0, 1, 1], [], []>} : vector<8x32xf32>, vector<32x96xf32>, vector<8x96xf32> -> vector<8x96xf32>
    %404 = vector.extract_strided_slice %402 {offsets = [0, 0], sizes = [8, 32], strides = [1, 1]} : vector<8x96xf32> to vector<8x32xf32>
    %405 = vector.extract_strided_slice %403 {offsets = [0, 0], sizes = [8, 32], strides = [1, 1]} : vector<8x96xf32> to vector<8x32xf32>
    %406 = arith.addf %404, %405 : vector<8x32xf32>
    %407 = arith.negf %406 : vector<8x32xf32>
    %408 = math.exp %407 : vector<8x32xf32>
    %cst_166 = arith.constant 1.000000e+00 : f32
    %409 = vector.broadcast %cst_166 : f32 to vector<8x32xf32>
    %410 = arith.addf %409, %408 : vector<8x32xf32>
    %411 = arith.divf %409, %410 : vector<8x32xf32>
    %412 = vector.extract_strided_slice %402 {offsets = [0, 32], sizes = [8, 32], strides = [1, 1]} : vector<8x96xf32> to vector<8x32xf32>
    %413 = vector.extract_strided_slice %403 {offsets = [0, 32], sizes = [8, 32], strides = [1, 1]} : vector<8x96xf32> to vector<8x32xf32>
    %414 = arith.addf %412, %413 : vector<8x32xf32>
    %415 = arith.negf %414 : vector<8x32xf32>
    %416 = math.exp %415 : vector<8x32xf32>
    %cst_167 = arith.constant 1.000000e+00 : f32
    %417 = vector.broadcast %cst_167 : f32 to vector<8x32xf32>
    %418 = arith.addf %417, %416 : vector<8x32xf32>
    %419 = arith.divf %417, %418 : vector<8x32xf32>
    %420 = vector.extract_strided_slice %402 {offsets = [0, 64], sizes = [8, 32], strides = [1, 1]} : vector<8x96xf32> to vector<8x32xf32>
    %421 = vector.extract_strided_slice %403 {offsets = [0, 64], sizes = [8, 32], strides = [1, 1]} : vector<8x96xf32> to vector<8x32xf32>
    %422 = vector.broadcast %298 : vector<1x32xf32> to vector<8x32xf32>
    %423 = arith.addf %421, %422 : vector<8x32xf32>
    %424 = arith.mulf %411, %423 : vector<8x32xf32>
    %425 = arith.addf %420, %424 : vector<8x32xf32>
    %426 = math.tanh %425 : vector<8x32xf32>
    %cst_168 = arith.constant 1.000000e+00 : f32
    %427 = vector.broadcast %cst_168 : f32 to vector<8x32xf32>
    %428 = arith.subf %427, %419 : vector<8x32xf32>
    %429 = arith.mulf %428, %426 : vector<8x32xf32>
    %430 = arith.mulf %419, %397 : vector<8x32xf32>
    %431 = arith.addf %429, %430 : vector<8x32xf32>
    %c0_169 = arith.constant 0 : index
    %c0_170 = arith.constant 0 : index
    %c0_171 = arith.constant 0 : index
    %c0_172 = arith.constant 0 : index
    %432 = vector.load %arg8[%c0_169, %c0_170, %c0_171, %c0_172] : memref<2x4x8x32xf32, #tpu.memory_space<vmem>>, vector<1x1x8x32xf32>
    %433 = vector.shape_cast %432 : vector<1x1x8x32xf32> to vector<8x32xf32>
    %434 = vector.shape_cast %431 : vector<8x32xf32> to vector<1x1x8x32xf32>
    tpu.vector_store %arg8[%c0_169, %c0_170, %c0_171, %c0_172], %434 {strides = array<i32>} : memref<2x4x8x32xf32, #tpu.memory_space<vmem>>, vector<1x1x8x32xf32>,
    %c0_173 = arith.constant 0 : index
    %c0_174 = arith.constant 0 : index
    %c0_175 = arith.constant 0 : index
    %435 = vector.load %arg10[%c0_173, %c0_174, %c0_175] : memref<2x8x32xf32, #tpu.memory_space<vmem>>, vector<1x8x32xf32>
    %436 = vector.shape_cast %435 : vector<1x8x32xf32> to vector<8x32xf32>
    %437 = vector.shape_cast %431 : vector<8x32xf32> to vector<1x8x32xf32>
    tpu.vector_store %arg10[%c0_173, %c0_174, %c0_175], %437 {strides = array<i32>} : memref<2x8x32xf32, #tpu.memory_space<vmem>>, vector<1x8x32xf32>,
    %c1_176 = arith.constant 1 : index
    %c0_177 = arith.constant 0 : index
    %c0_178 = arith.constant 0 : index
    %438 = vector.load %arg10[%c1_176, %c0_177, %c0_178] : memref<2x8x32xf32, #tpu.memory_space<vmem>>, vector<1x8x32xf32>
    %439 = vector.shape_cast %438 : vector<1x8x32xf32> to vector<8x32xf32>
    %c1_179 = arith.constant 1 : index
    %c0_180 = arith.constant 0 : index
    %c0_181 = arith.constant 0 : index
    %440 = vector.load %arg4[%c1_179, %c0_180, %c0_181] : memref<2x32x96xf32, #tpu.memory_space<vmem>>, vector<1x32x96xf32>
    %441 = vector.shape_cast %440 : vector<1x32x96xf32> to vector<32x96xf32>
    %c1_182 = arith.constant 1 : index
    %c0_183 = arith.constant 0 : index
    %c0_184 = arith.constant 0 : index
    %442 = vector.load %arg6[%c1_182, %c0_183, %c0_184] : memref<2x1x32xf32, #tpu.memory_space<vmem>>, vector<1x1x32xf32>
    %443 = vector.shape_cast %442 : vector<1x1x32xf32> to vector<1x32xf32>
    %c1_185 = arith.constant 1 : index
    %c3_186 = arith.constant 3 : index
    %c0_187 = arith.constant 0 : index
    %c0_188 = arith.constant 0 : index
    %444 = vector.load %arg2[%c1_185, %c3_186, %c0_187, %c0_188] : memref<2x4x8x96xf32, #tpu.memory_space<vmem>>, vector<1x1x8x96xf32>
    %445 = vector.shape_cast %444 : vector<1x1x8x96xf32> to vector<8x96xf32>
    %cst_189 = arith.constant dense<0.000000e+00> : vector<8x96xf32>
    %446 = tpu.matmul %439, %441, %cst_189 {dimension_numbers = #tpu.dot_dimension_numbers<[1], [0], [0], [1], [0, 0, 1, 1], [], []>} : vector<8x32xf32>, vector<32x96xf32>, vector<8x96xf32> -> vector<8x96xf32>
    %447 = vector.extract_strided_slice %445 {offsets = [0, 0], sizes = [8, 32], strides = [1, 1]} : vector<8x96xf32> to vector<8x32xf32>
    %448 = vector.extract_strided_slice %446 {offsets = [0, 0], sizes = [8, 32], strides = [1, 1]} : vector<8x96xf32> to vector<8x32xf32>
    %449 = arith.addf %447, %448 : vector<8x32xf32>
    %450 = arith.negf %449 : vector<8x32xf32>
    %451 = math.exp %450 : vector<8x32xf32>
    %cst_190 = arith.constant 1.000000e+00 : f32
    %452 = vector.broadcast %cst_190 : f32 to vector<8x32xf32>
    %453 = arith.addf %452, %451 : vector<8x32xf32>
    %454 = arith.divf %452, %453 : vector<8x32xf32>
    %455 = vector.extract_strided_slice %445 {offsets = [0, 32], sizes = [8, 32], strides = [1, 1]} : vector<8x96xf32> to vector<8x32xf32>
    %456 = vector.extract_strided_slice %446 {offsets = [0, 32], sizes = [8, 32], strides = [1, 1]} : vector<8x96xf32> to vector<8x32xf32>
    %457 = arith.addf %455, %456 : vector<8x32xf32>
    %458 = arith.negf %457 : vector<8x32xf32>
    %459 = math.exp %458 : vector<8x32xf32>
    %cst_191 = arith.constant 1.000000e+00 : f32
    %460 = vector.broadcast %cst_191 : f32 to vector<8x32xf32>
    %461 = arith.addf %460, %459 : vector<8x32xf32>
    %462 = arith.divf %460, %461 : vector<8x32xf32>
    %463 = vector.extract_strided_slice %445 {offsets = [0, 64], sizes = [8, 32], strides = [1, 1]} : vector<8x96xf32> to vector<8x32xf32>
    %464 = vector.extract_strided_slice %446 {offsets = [0, 64], sizes = [8, 32], strides = [1, 1]} : vector<8x96xf32> to vector<8x32xf32>
    %465 = vector.broadcast %443 : vector<1x32xf32> to vector<8x32xf32>
    %466 = arith.addf %464, %465 : vector<8x32xf32>
    %467 = arith.mulf %454, %466 : vector<8x32xf32>
    %468 = arith.addf %463, %467 : vector<8x32xf32>
    %469 = math.tanh %468 : vector<8x32xf32>
    %cst_192 = arith.constant 1.000000e+00 : f32
    %470 = vector.broadcast %cst_192 : f32 to vector<8x32xf32>
    %471 = arith.subf %470, %462 : vector<8x32xf32>
    %472 = arith.mulf %471, %469 : vector<8x32xf32>
    %473 = arith.mulf %462, %439 : vector<8x32xf32>
    %474 = arith.addf %472, %473 : vector<8x32xf32>
    %c1_193 = arith.constant 1 : index
    %c3_194 = arith.constant 3 : index
    %c0_195 = arith.constant 0 : index
    %c0_196 = arith.constant 0 : index
    %475 = vector.load %arg8[%c1_193, %c3_194, %c0_195, %c0_196] : memref<2x4x8x32xf32, #tpu.memory_space<vmem>>, vector<1x1x8x32xf32>
    %476 = vector.shape_cast %475 : vector<1x1x8x32xf32> to vector<8x32xf32>
    %477 = vector.shape_cast %474 : vector<8x32xf32> to vector<1x1x8x32xf32>
    tpu.vector_store %arg8[%c1_193, %c3_194, %c0_195, %c0_196], %477 {strides = array<i32>} : memref<2x4x8x32xf32, #tpu.memory_space<vmem>>, vector<1x1x8x32xf32>,
    %c1_197 = arith.constant 1 : index
    %c2_198 = arith.constant 2 : index
    %c0_199 = arith.constant 0 : index
    %c0_200 = arith.constant 0 : index
    %478 = vector.load %arg2[%c1_197, %c2_198, %c0_199, %c0_200] : memref<2x4x8x96xf32, #tpu.memory_space<vmem>>, vector<1x1x8x96xf32>
    %479 = vector.shape_cast %478 : vector<1x1x8x96xf32> to vector<8x96xf32>
    %cst_201 = arith.constant dense<0.000000e+00> : vector<8x96xf32>
    %480 = tpu.matmul %474, %441, %cst_201 {dimension_numbers = #tpu.dot_dimension_numbers<[1], [0], [0], [1], [0, 0, 1, 1], [], []>} : vector<8x32xf32>, vector<32x96xf32>, vector<8x96xf32> -> vector<8x96xf32>
    %481 = vector.extract_strided_slice %479 {offsets = [0, 0], sizes = [8, 32], strides = [1, 1]} : vector<8x96xf32> to vector<8x32xf32>
    %482 = vector.extract_strided_slice %480 {offsets = [0, 0], sizes = [8, 32], strides = [1, 1]} : vector<8x96xf32> to vector<8x32xf32>
    %483 = arith.addf %481, %482 : vector<8x32xf32>
    %484 = arith.negf %483 : vector<8x32xf32>
    %485 = math.exp %484 : vector<8x32xf32>
    %cst_202 = arith.constant 1.000000e+00 : f32
    %486 = vector.broadcast %cst_202 : f32 to vector<8x32xf32>
    %487 = arith.addf %486, %485 : vector<8x32xf32>
    %488 = arith.divf %486, %487 : vector<8x32xf32>
    %489 = vector.extract_strided_slice %479 {offsets = [0, 32], sizes = [8, 32], strides = [1, 1]} : vector<8x96xf32> to vector<8x32xf32>
    %490 = vector.extract_strided_slice %480 {offsets = [0, 32], sizes = [8, 32], strides = [1, 1]} : vector<8x96xf32> to vector<8x32xf32>
    %491 = arith.addf %489, %490 : vector<8x32xf32>
    %492 = arith.negf %491 : vector<8x32xf32>
    %493 = math.exp %492 : vector<8x32xf32>
    %cst_203 = arith.constant 1.000000e+00 : f32
    %494 = vector.broadcast %cst_203 : f32 to vector<8x32xf32>
    %495 = arith.addf %494, %493 : vector<8x32xf32>
    %496 = arith.divf %494, %495 : vector<8x32xf32>
    %497 = vector.extract_strided_slice %479 {offsets = [0, 64], sizes = [8, 32], strides = [1, 1]} : vector<8x96xf32> to vector<8x32xf32>
    %498 = vector.extract_strided_slice %480 {offsets = [0, 64], sizes = [8, 32], strides = [1, 1]} : vector<8x96xf32> to vector<8x32xf32>
    %499 = vector.broadcast %443 : vector<1x32xf32> to vector<8x32xf32>
    %500 = arith.addf %498, %499 : vector<8x32xf32>
    %501 = arith.mulf %488, %500 : vector<8x32xf32>
    %502 = arith.addf %497, %501 : vector<8x32xf32>
    %503 = math.tanh %502 : vector<8x32xf32>
    %cst_204 = arith.constant 1.000000e+00 : f32
    %504 = vector.broadcast %cst_204 : f32 to vector<8x32xf32>
    %505 = arith.subf %504, %496 : vector<8x32xf32>
    %506 = arith.mulf %505, %503 : vector<8x32xf32>
    %507 = arith.mulf %496, %474 : vector<8x32xf32>
    %508 = arith.addf %506, %507 : vector<8x32xf32>
    %c1_205 = arith.constant 1 : index
    %c2_206 = arith.constant 2 : index
    %c0_207 = arith.constant 0 : index
    %c0_208 = arith.constant 0 : index
    %509 = vector.load %arg8[%c1_205, %c2_206, %c0_207, %c0_208] : memref<2x4x8x32xf32, #tpu.memory_space<vmem>>, vector<1x1x8x32xf32>
    %510 = vector.shape_cast %509 : vector<1x1x8x32xf32> to vector<8x32xf32>
    %511 = vector.shape_cast %508 : vector<8x32xf32> to vector<1x1x8x32xf32>
    tpu.vector_store %arg8[%c1_205, %c2_206, %c0_207, %c0_208], %511 {strides = array<i32>} : memref<2x4x8x32xf32, #tpu.memory_space<vmem>>, vector<1x1x8x32xf32>,
    %c1_209 = arith.constant 1 : index
    %c1_210 = arith.constant 1 : index
    %c0_211 = arith.constant 0 : index
    %c0_212 = arith.constant 0 : index
    %512 = vector.load %arg2[%c1_209, %c1_210, %c0_211, %c0_212] : memref<2x4x8x96xf32, #tpu.memory_space<vmem>>, vector<1x1x8x96xf32>
    %513 = vector.shape_cast %512 : vector<1x1x8x96xf32> to vector<8x96xf32>
    %cst_213 = arith.constant dense<0.000000e+00> : vector<8x96xf32>
    %514 = tpu.matmul %508, %441, %cst_213 {dimension_numbers = #tpu.dot_dimension_numbers<[1], [0], [0], [1], [0, 0, 1, 1], [], []>} : vector<8x32xf32>, vector<32x96xf32>, vector<8x96xf32> -> vector<8x96xf32>
    %515 = vector.extract_strided_slice %513 {offsets = [0, 0], sizes = [8, 32], strides = [1, 1]} : vector<8x96xf32> to vector<8x32xf32>
    %516 = vector.extract_strided_slice %514 {offsets = [0, 0], sizes = [8, 32], strides = [1, 1]} : vector<8x96xf32> to vector<8x32xf32>
    %517 = arith.addf %515, %516 : vector<8x32xf32>
    %518 = arith.negf %517 : vector<8x32xf32>
    %519 = math.exp %518 : vector<8x32xf32>
    %cst_214 = arith.constant 1.000000e+00 : f32
    %520 = vector.broadcast %cst_214 : f32 to vector<8x32xf32>
    %521 = arith.addf %520, %519 : vector<8x32xf32>
    %522 = arith.divf %520, %521 : vector<8x32xf32>
    %523 = vector.extract_strided_slice %513 {offsets = [0, 32], sizes = [8, 32], strides = [1, 1]} : vector<8x96xf32> to vector<8x32xf32>
    %524 = vector.extract_strided_slice %514 {offsets = [0, 32], sizes = [8, 32], strides = [1, 1]} : vector<8x96xf32> to vector<8x32xf32>
    %525 = arith.addf %523, %524 : vector<8x32xf32>
    %526 = arith.negf %525 : vector<8x32xf32>
    %527 = math.exp %526 : vector<8x32xf32>
    %cst_215 = arith.constant 1.000000e+00 : f32
    %528 = vector.broadcast %cst_215 : f32 to vector<8x32xf32>
    %529 = arith.addf %528, %527 : vector<8x32xf32>
    %530 = arith.divf %528, %529 : vector<8x32xf32>
    %531 = vector.extract_strided_slice %513 {offsets = [0, 64], sizes = [8, 32], strides = [1, 1]} : vector<8x96xf32> to vector<8x32xf32>
    %532 = vector.extract_strided_slice %514 {offsets = [0, 64], sizes = [8, 32], strides = [1, 1]} : vector<8x96xf32> to vector<8x32xf32>
    %533 = vector.broadcast %443 : vector<1x32xf32> to vector<8x32xf32>
    %534 = arith.addf %532, %533 : vector<8x32xf32>
    %535 = arith.mulf %522, %534 : vector<8x32xf32>
    %536 = arith.addf %531, %535 : vector<8x32xf32>
    %537 = math.tanh %536 : vector<8x32xf32>
    %cst_216 = arith.constant 1.000000e+00 : f32
    %538 = vector.broadcast %cst_216 : f32 to vector<8x32xf32>
    %539 = arith.subf %538, %530 : vector<8x32xf32>
    %540 = arith.mulf %539, %537 : vector<8x32xf32>
    %541 = arith.mulf %530, %508 : vector<8x32xf32>
    %542 = arith.addf %540, %541 : vector<8x32xf32>
    %c1_217 = arith.constant 1 : index
    %c1_218 = arith.constant 1 : index
    %c0_219 = arith.constant 0 : index
    %c0_220 = arith.constant 0 : index
    %543 = vector.load %arg8[%c1_217, %c1_218, %c0_219, %c0_220] : memref<2x4x8x32xf32, #tpu.memory_space<vmem>>, vector<1x1x8x32xf32>
    %544 = vector.shape_cast %543 : vector<1x1x8x32xf32> to vector<8x32xf32>
    %545 = vector.shape_cast %542 : vector<8x32xf32> to vector<1x1x8x32xf32>
    tpu.vector_store %arg8[%c1_217, %c1_218, %c0_219, %c0_220], %545 {strides = array<i32>} : memref<2x4x8x32xf32, #tpu.memory_space<vmem>>, vector<1x1x8x32xf32>,
    %c1_221 = arith.constant 1 : index
    %c0_222 = arith.constant 0 : index
    %c0_223 = arith.constant 0 : index
    %c0_224 = arith.constant 0 : index
    %546 = vector.load %arg2[%c1_221, %c0_222, %c0_223, %c0_224] : memref<2x4x8x96xf32, #tpu.memory_space<vmem>>, vector<1x1x8x96xf32>
    %547 = vector.shape_cast %546 : vector<1x1x8x96xf32> to vector<8x96xf32>
    %cst_225 = arith.constant dense<0.000000e+00> : vector<8x96xf32>
    %548 = tpu.matmul %542, %441, %cst_225 {dimension_numbers = #tpu.dot_dimension_numbers<[1], [0], [0], [1], [0, 0, 1, 1], [], []>} : vector<8x32xf32>, vector<32x96xf32>, vector<8x96xf32> -> vector<8x96xf32>
    %549 = vector.extract_strided_slice %547 {offsets = [0, 0], sizes = [8, 32], strides = [1, 1]} : vector<8x96xf32> to vector<8x32xf32>
    %550 = vector.extract_strided_slice %548 {offsets = [0, 0], sizes = [8, 32], strides = [1, 1]} : vector<8x96xf32> to vector<8x32xf32>
    %551 = arith.addf %549, %550 : vector<8x32xf32>
    %552 = arith.negf %551 : vector<8x32xf32>
    %553 = math.exp %552 : vector<8x32xf32>
    %cst_226 = arith.constant 1.000000e+00 : f32
    %554 = vector.broadcast %cst_226 : f32 to vector<8x32xf32>
    %555 = arith.addf %554, %553 : vector<8x32xf32>
    %556 = arith.divf %554, %555 : vector<8x32xf32>
    %557 = vector.extract_strided_slice %547 {offsets = [0, 32], sizes = [8, 32], strides = [1, 1]} : vector<8x96xf32> to vector<8x32xf32>
    %558 = vector.extract_strided_slice %548 {offsets = [0, 32], sizes = [8, 32], strides = [1, 1]} : vector<8x96xf32> to vector<8x32xf32>
    %559 = arith.addf %557, %558 : vector<8x32xf32>
    %560 = arith.negf %559 : vector<8x32xf32>
    %561 = math.exp %560 : vector<8x32xf32>
    %cst_227 = arith.constant 1.000000e+00 : f32
    %562 = vector.broadcast %cst_227 : f32 to vector<8x32xf32>
    %563 = arith.addf %562, %561 : vector<8x32xf32>
    %564 = arith.divf %562, %563 : vector<8x32xf32>
    %565 = vector.extract_strided_slice %547 {offsets = [0, 64], sizes = [8, 32], strides = [1, 1]} : vector<8x96xf32> to vector<8x32xf32>
    %566 = vector.extract_strided_slice %548 {offsets = [0, 64], sizes = [8, 32], strides = [1, 1]} : vector<8x96xf32> to vector<8x32xf32>
    %567 = vector.broadcast %443 : vector<1x32xf32> to vector<8x32xf32>
    %568 = arith.addf %566, %567 : vector<8x32xf32>
    %569 = arith.mulf %556, %568 : vector<8x32xf32>
    %570 = arith.addf %565, %569 : vector<8x32xf32>
    %571 = math.tanh %570 : vector<8x32xf32>
    %cst_228 = arith.constant 1.000000e+00 : f32
    %572 = vector.broadcast %cst_228 : f32 to vector<8x32xf32>
    %573 = arith.subf %572, %564 : vector<8x32xf32>
    %574 = arith.mulf %573, %571 : vector<8x32xf32>
    %575 = arith.mulf %564, %542 : vector<8x32xf32>
    %576 = arith.addf %574, %575 : vector<8x32xf32>
    %c1_229 = arith.constant 1 : index
    %c0_230 = arith.constant 0 : index
    %c0_231 = arith.constant 0 : index
    %c0_232 = arith.constant 0 : index
    %577 = vector.load %arg8[%c1_229, %c0_230, %c0_231, %c0_232] : memref<2x4x8x32xf32, #tpu.memory_space<vmem>>, vector<1x1x8x32xf32>
    %578 = vector.shape_cast %577 : vector<1x1x8x32xf32> to vector<8x32xf32>
    %579 = vector.shape_cast %576 : vector<8x32xf32> to vector<1x1x8x32xf32>
    tpu.vector_store %arg8[%c1_229, %c0_230, %c0_231, %c0_232], %579 {strides = array<i32>} : memref<2x4x8x32xf32, #tpu.memory_space<vmem>>, vector<1x1x8x32xf32>,
    %c1_233 = arith.constant 1 : index
    %c0_234 = arith.constant 0 : index
    %c0_235 = arith.constant 0 : index
    %580 = vector.load %arg10[%c1_233, %c0_234, %c0_235] : memref<2x8x32xf32, #tpu.memory_space<vmem>>, vector<1x8x32xf32>
    %581 = vector.shape_cast %580 : vector<1x8x32xf32> to vector<8x32xf32>
    %582 = vector.shape_cast %576 : vector<8x32xf32> to vector<1x8x32xf32>
    tpu.vector_store %arg10[%c1_233, %c0_234, %c0_235], %582 {strides = array<i32>} : memref<2x8x32xf32, #tpu.memory_space<vmem>>, vector<1x8x32xf32>,
    return
  }
  func.func @transform_0(%arg0: i32) -> (i32, i32, i32, i32) {
    %c0_i32 = arith.constant 0 : i32
    %c0_i32_0 = arith.constant 0 : i32
    %c0_i32_1 = arith.constant 0 : i32
    %c0_i32_2 = arith.constant 0 : i32
    return %c0_i32, %arg0, %c0_i32_0, %c0_i32_1 : i32, i32, i32, i32
  }
  func.func @transform_1(%arg0: i32) -> (i32, i32, i32, i32) {
    %c0_i32 = arith.constant 0 : i32
    %0 = arith.subi %c0_i32, %arg0 : i32
    %c1_i32 = arith.constant 1 : i32
    %c0_i32_0 = arith.constant 0 : i32
    %c0_i32_1 = arith.constant 0 : i32
    %c0_i32_2 = arith.constant 0 : i32
    return %c1_i32, %0, %c0_i32_0, %c0_i32_1 : i32, i32, i32, i32
  }
  func.func @transform_2(%arg0: i32) -> (i32, i32, i32) {
    %c0_i32 = arith.constant 0 : i32
    %c0_i32_0 = arith.constant 0 : i32
    %c0_i32_1 = arith.constant 0 : i32
    %c0_i32_2 = arith.constant 0 : i32
    return %c0_i32, %c0_i32_0, %c0_i32_1 : i32, i32, i32
  }
  func.func @transform_3(%arg0: i32) -> (i32, i32, i32) {
    %c0_i32 = arith.constant 0 : i32
    %c0_i32_0 = arith.constant 0 : i32
    %c0_i32_1 = arith.constant 0 : i32
    %c0_i32_2 = arith.constant 0 : i32
    return %c0_i32, %c0_i32_0, %c0_i32_1 : i32, i32, i32
  }
  func.func @transform_4(%arg0: i32) -> (i32, i32, i32) {
    %c0_i32 = arith.constant 0 : i32
    %c0_i32_0 = arith.constant 0 : i32
    %c0_i32_1 = arith.constant 0 : i32
    %c0_i32_2 = arith.constant 0 : i32
    return %c0_i32, %c0_i32_0, %c0_i32_1 : i32, i32, i32
  }
  func.func @transform_5(%arg0: i32) -> (i32, i32, i32) {
    %c0_i32 = arith.constant 0 : i32
    %c0_i32_0 = arith.constant 0 : i32
    %c0_i32_1 = arith.constant 0 : i32
    %c0_i32_2 = arith.constant 0 : i32
    return %c0_i32, %c0_i32_0, %c0_i32_1 : i32, i32, i32
  }
  func.func @transform_6(%arg0: i32) -> (i32, i32, i32, i32) {
    %c0_i32 = arith.constant 0 : i32
    %c0_i32_0 = arith.constant 0 : i32
    %c0_i32_1 = arith.constant 0 : i32
    %c0_i32_2 = arith.constant 0 : i32
    return %c0_i32, %arg0, %c0_i32_0, %c0_i32_1 : i32, i32, i32, i32
  }
  func.func @transform_7(%arg0: i32) -> (i32, i32, i32, i32) {
    %c0_i32 = arith.constant 0 : i32
    %0 = arith.subi %c0_i32, %arg0 : i32
    %c0_i32_0 = arith.constant 0 : i32
    %c0_i32_1 = arith.constant 0 : i32
    %c0_i32_2 = arith.constant 0 : i32
    %c0_i32_3 = arith.constant 0 : i32
    return %c0_i32_0, %0, %c0_i32_1, %c0_i32_2 : i32, i32, i32, i32
  }
}

module attributes {stable_mosaic.version = 11 : i64} {
  func.func @_tail_kernel(%arg0: memref<4x128xf32, #tpu.memory_space<vmem>>, %arg1: memref<128x32xf32, #tpu.memory_space<vmem>>, %arg2: memref<1x32xf32, #tpu.memory_space<vmem>>, %arg3: memref<32x64xf32, #tpu.memory_space<vmem>>, %arg4: memref<1x64xf32, #tpu.memory_space<vmem>>, %arg5: memref<64x192xf32, #tpu.memory_space<vmem>>, %arg6: memref<2x4x96xf32, #tpu.memory_space<vmem>>) attributes {dimension_semantics = [], scalar_prefetch = 0 : i64, scratch_operands = 0 : i64, tpu.core_type = #tpu.core_type<tc>} {
    %c0 = arith.constant 0 : index
    %c0_0 = arith.constant 0 : index
    %0 = vector.load %arg0[%c0, %c0_0] : memref<4x128xf32, #tpu.memory_space<vmem>>, vector<4x128xf32>
    %c0_1 = arith.constant 0 : index
    %c0_2 = arith.constant 0 : index
    %1 = vector.load %arg1[%c0_1, %c0_2] : memref<128x32xf32, #tpu.memory_space<vmem>>, vector<128x32xf32>
    %cst = arith.constant dense<0.000000e+00> : vector<4x32xf32>
    %2 = tpu.matmul %0, %1, %cst {dimension_numbers = #tpu.dot_dimension_numbers<[1], [0], [0], [1], [0, 0, 1, 1], [], []>} : vector<4x128xf32>, vector<128x32xf32>, vector<4x32xf32> -> vector<4x32xf32>
    %c0_3 = arith.constant 0 : index
    %c0_4 = arith.constant 0 : index
    %3 = vector.load %arg2[%c0_3, %c0_4] : memref<1x32xf32, #tpu.memory_space<vmem>>, vector<1x32xf32>
    %4 = vector.broadcast %3 : vector<1x32xf32> to vector<4x32xf32>
    %5 = arith.addf %2, %4 : vector<4x32xf32>
    %6 = math.tanh %5 : vector<4x32xf32>
    %c0_5 = arith.constant 0 : index
    %c0_6 = arith.constant 0 : index
    %7 = vector.load %arg3[%c0_5, %c0_6] : memref<32x64xf32, #tpu.memory_space<vmem>>, vector<32x64xf32>
    %cst_7 = arith.constant dense<0.000000e+00> : vector<4x64xf32>
    %8 = tpu.matmul %6, %7, %cst_7 {dimension_numbers = #tpu.dot_dimension_numbers<[1], [0], [0], [1], [0, 0, 1, 1], [], []>} : vector<4x32xf32>, vector<32x64xf32>, vector<4x64xf32> -> vector<4x64xf32>
    %c0_8 = arith.constant 0 : index
    %c0_9 = arith.constant 0 : index
    %9 = vector.load %arg4[%c0_8, %c0_9] : memref<1x64xf32, #tpu.memory_space<vmem>>, vector<1x64xf32>
    %10 = vector.broadcast %9 : vector<1x64xf32> to vector<4x64xf32>
    %11 = arith.addf %8, %10 : vector<4x64xf32>
    %c0_10 = arith.constant 0 : index
    %c0_11 = arith.constant 0 : index
    %12 = vector.load %arg5[%c0_10, %c0_11] : memref<64x192xf32, #tpu.memory_space<vmem>>, vector<64x192xf32>
    %cst_12 = arith.constant dense<0.000000e+00> : vector<4x192xf32>
    %13 = tpu.matmul %11, %12, %cst_12 {dimension_numbers = #tpu.dot_dimension_numbers<[1], [0], [0], [1], [0, 0, 1, 1], [], []>} : vector<4x64xf32>, vector<64x192xf32>, vector<4x192xf32> -> vector<4x192xf32>
    %14 = vector.extract_strided_slice %13 {offsets = [0, 0], sizes = [4, 96], strides = [1, 1]} : vector<4x192xf32> to vector<4x96xf32>
    %c0_13 = arith.constant 0 : index
    %c0_14 = arith.constant 0 : index
    %c0_15 = arith.constant 0 : index
    %15 = vector.load %arg6[%c0_13, %c0_14, %c0_15] : memref<2x4x96xf32, #tpu.memory_space<vmem>>, vector<1x4x96xf32>
    %16 = vector.shape_cast %15 : vector<1x4x96xf32> to vector<4x96xf32>
    %17 = vector.shape_cast %14 : vector<4x96xf32> to vector<1x4x96xf32>
    tpu.vector_store %arg6[%c0_13, %c0_14, %c0_15], %17 {strides = array<i32>} : memref<2x4x96xf32, #tpu.memory_space<vmem>>, vector<1x4x96xf32>,
    %18 = vector.extract_strided_slice %13 {offsets = [0, 96], sizes = [4, 96], strides = [1, 1]} : vector<4x192xf32> to vector<4x96xf32>
    %c1 = arith.constant 1 : index
    %c0_16 = arith.constant 0 : index
    %c0_17 = arith.constant 0 : index
    %19 = vector.load %arg6[%c1, %c0_16, %c0_17] : memref<2x4x96xf32, #tpu.memory_space<vmem>>, vector<1x4x96xf32>
    %20 = vector.shape_cast %19 : vector<1x4x96xf32> to vector<4x96xf32>
    %21 = vector.shape_cast %18 : vector<4x96xf32> to vector<1x4x96xf32>
    tpu.vector_store %arg6[%c1, %c0_16, %c0_17], %21 {strides = array<i32>} : memref<2x4x96xf32, #tpu.memory_space<vmem>>, vector<1x4x96xf32>,
    return
  }
}

module attributes {stable_mosaic.version = 11 : i64} {
  func.func @_gru_dec_kernel(%arg0: i32, %arg1: memref<2x4x8x96xf32, #tpu.memory_space<vmem>>, %arg2: memref<2x4x1x96xf32, #tpu.memory_space<vmem>>, %arg3: memref<2x32x96xf32, #tpu.memory_space<vmem>>, %arg4: memref<2x1x32xf32, #tpu.memory_space<vmem>>, %arg5: memref<2x4x8x32xf32, #tpu.memory_space<vmem>>, %arg6: memref<2x8x32xf32, #tpu.memory_space<vmem>>) attributes {dimension_semantics = [#tpu.dimension_semantics<arbitrary>], iteration_bounds = array<i64: 1>, scalar_prefetch = 0 : i64, scratch_operands = 1 : i64, tpu.core_type = #tpu.core_type<tc>, window_params = [{transform_indices = @transform_0, window_bounds = array<i64: 2, 4, 8, 96>}, {transform_indices = @transform_1, window_bounds = array<i64: 2, 4, 1, 96>}, {pipeline_mode = #tpu.pipeline_mode<synchronous>, transform_indices = @transform_2, window_bounds = array<i64: 2, 32, 96>}, {pipeline_mode = #tpu.pipeline_mode<synchronous>, transform_indices = @transform_3, window_bounds = array<i64: 2, 1, 32>}, {transform_indices = @transform_4, window_bounds = array<i64: 2, 4, 8, 32>}]} {
    %c0_i32 = arith.constant 0 : i32
    %0 = arith.cmpi eq, %arg0, %c0_i32 : i32
    %1 = arith.extui %0 : i1 to i32
    %c0_i32_0 = arith.constant 0 : i32
    %2 = arith.cmpi ne, %1, %c0_i32_0 : i32
    scf.if %2 {
      %cst_148 = arith.constant 0.000000e+00 : f32
      %325 = vector.broadcast %cst_148 : f32 to vector<2x8x32xf32>
      %c0_149 = arith.constant 0 : index
      %c0_150 = arith.constant 0 : index
      %c0_151 = arith.constant 0 : index
      %326 = vector.load %arg6[%c0_149, %c0_150, %c0_151] : memref<2x8x32xf32, #tpu.memory_space<vmem>>, vector<2x8x32xf32>
      tpu.vector_store %arg6[%c0_149, %c0_150, %c0_151], %325 {strides = array<i32>} : memref<2x8x32xf32, #tpu.memory_space<vmem>>, vector<2x8x32xf32>,
    } else {
    }
    %c0 = arith.constant 0 : index
    %c0_1 = arith.constant 0 : index
    %c0_2 = arith.constant 0 : index
    %3 = vector.load %arg6[%c0, %c0_1, %c0_2] : memref<2x8x32xf32, #tpu.memory_space<vmem>>, vector<1x8x32xf32>
    %4 = vector.shape_cast %3 : vector<1x8x32xf32> to vector<8x32xf32>
    %c0_3 = arith.constant 0 : index
    %c0_4 = arith.constant 0 : index
    %c0_5 = arith.constant 0 : index
    %5 = vector.load %arg3[%c0_3, %c0_4, %c0_5] : memref<2x32x96xf32, #tpu.memory_space<vmem>>, vector<1x32x96xf32>
    %6 = vector.shape_cast %5 : vector<1x32x96xf32> to vector<32x96xf32>
    %c0_6 = arith.constant 0 : index
    %c0_7 = arith.constant 0 : index
    %c0_8 = arith.constant 0 : index
    %7 = vector.load %arg4[%c0_6, %c0_7, %c0_8] : memref<2x1x32xf32, #tpu.memory_space<vmem>>, vector<1x1x32xf32>
    %8 = vector.shape_cast %7 : vector<1x1x32xf32> to vector<1x32xf32>
    %c0_9 = arith.constant 0 : index
    %c0_10 = arith.constant 0 : index
    %c0_11 = arith.constant 0 : index
    %c0_12 = arith.constant 0 : index
    %9 = vector.load %arg1[%c0_9, %c0_10, %c0_11, %c0_12] : memref<2x4x8x96xf32, #tpu.memory_space<vmem>>, vector<1x1x8x96xf32>
    %10 = vector.shape_cast %9 : vector<1x1x8x96xf32> to vector<8x96xf32>
    %c0_13 = arith.constant 0 : index
    %c0_14 = arith.constant 0 : index
    %c0_15 = arith.constant 0 : index
    %c0_16 = arith.constant 0 : index
    %11 = vector.load %arg2[%c0_13, %c0_14, %c0_15, %c0_16] : memref<2x4x1x96xf32, #tpu.memory_space<vmem>>, vector<1x1x1x96xf32>
    %12 = vector.shape_cast %11 : vector<1x1x1x96xf32> to vector<1x96xf32>
    %13 = vector.broadcast %12 : vector<1x96xf32> to vector<8x96xf32>
    %14 = arith.addf %10, %13 : vector<8x96xf32>
    %cst = arith.constant dense<0.000000e+00> : vector<8x96xf32>
    %15 = tpu.matmul %4, %6, %cst {dimension_numbers = #tpu.dot_dimension_numbers<[1], [0], [0], [1], [0, 0, 1, 1], [], []>} : vector<8x32xf32>, vector<32x96xf32>, vector<8x96xf32> -> vector<8x96xf32>
    %16 = vector.extract_strided_slice %14 {offsets = [0, 0], sizes = [8, 32], strides = [1, 1]} : vector<8x96xf32> to vector<8x32xf32>
    %17 = vector.extract_strided_slice %15 {offsets = [0, 0], sizes = [8, 32], strides = [1, 1]} : vector<8x96xf32> to vector<8x32xf32>
    %18 = arith.addf %16, %17 : vector<8x32xf32>
    %19 = arith.negf %18 : vector<8x32xf32>
    %20 = math.exp %19 : vector<8x32xf32>
    %cst_17 = arith.constant 1.000000e+00 : f32
    %21 = vector.broadcast %cst_17 : f32 to vector<8x32xf32>
    %22 = arith.addf %21, %20 : vector<8x32xf32>
    %23 = arith.divf %21, %22 : vector<8x32xf32>
    %24 = vector.extract_strided_slice %14 {offsets = [0, 32], sizes = [8, 32], strides = [1, 1]} : vector<8x96xf32> to vector<8x32xf32>
    %25 = vector.extract_strided_slice %15 {offsets = [0, 32], sizes = [8, 32], strides = [1, 1]} : vector<8x96xf32> to vector<8x32xf32>
    %26 = arith.addf %24, %25 : vector<8x32xf32>
    %27 = arith.negf %26 : vector<8x32xf32>
    %28 = math.exp %27 : vector<8x32xf32>
    %cst_18 = arith.constant 1.000000e+00 : f32
    %29 = vector.broadcast %cst_18 : f32 to vector<8x32xf32>
    %30 = arith.addf %29, %28 : vector<8x32xf32>
    %31 = arith.divf %29, %30 : vector<8x32xf32>
    %32 = vector.extract_strided_slice %14 {offsets = [0, 64], sizes = [8, 32], strides = [1, 1]} : vector<8x96xf32> to vector<8x32xf32>
    %33 = vector.extract_strided_slice %15 {offsets = [0, 64], sizes = [8, 32], strides = [1, 1]} : vector<8x96xf32> to vector<8x32xf32>
    %34 = vector.broadcast %8 : vector<1x32xf32> to vector<8x32xf32>
    %35 = arith.addf %33, %34 : vector<8x32xf32>
    %36 = arith.mulf %23, %35 : vector<8x32xf32>
    %37 = arith.addf %32, %36 : vector<8x32xf32>
    %38 = math.tanh %37 : vector<8x32xf32>
    %cst_19 = arith.constant 1.000000e+00 : f32
    %39 = vector.broadcast %cst_19 : f32 to vector<8x32xf32>
    %40 = arith.subf %39, %31 : vector<8x32xf32>
    %41 = arith.mulf %40, %38 : vector<8x32xf32>
    %42 = arith.mulf %31, %4 : vector<8x32xf32>
    %43 = arith.addf %41, %42 : vector<8x32xf32>
    %c0_20 = arith.constant 0 : index
    %c0_21 = arith.constant 0 : index
    %c0_22 = arith.constant 0 : index
    %c0_23 = arith.constant 0 : index
    %44 = vector.load %arg5[%c0_20, %c0_21, %c0_22, %c0_23] : memref<2x4x8x32xf32, #tpu.memory_space<vmem>>, vector<1x1x8x32xf32>
    %45 = vector.shape_cast %44 : vector<1x1x8x32xf32> to vector<8x32xf32>
    %46 = vector.shape_cast %43 : vector<8x32xf32> to vector<1x1x8x32xf32>
    tpu.vector_store %arg5[%c0_20, %c0_21, %c0_22, %c0_23], %46 {strides = array<i32>} : memref<2x4x8x32xf32, #tpu.memory_space<vmem>>, vector<1x1x8x32xf32>,
    %c0_24 = arith.constant 0 : index
    %c1 = arith.constant 1 : index
    %c0_25 = arith.constant 0 : index
    %c0_26 = arith.constant 0 : index
    %47 = vector.load %arg1[%c0_24, %c1, %c0_25, %c0_26] : memref<2x4x8x96xf32, #tpu.memory_space<vmem>>, vector<1x1x8x96xf32>
    %48 = vector.shape_cast %47 : vector<1x1x8x96xf32> to vector<8x96xf32>
    %c0_27 = arith.constant 0 : index
    %c1_28 = arith.constant 1 : index
    %c0_29 = arith.constant 0 : index
    %c0_30 = arith.constant 0 : index
    %49 = vector.load %arg2[%c0_27, %c1_28, %c0_29, %c0_30] : memref<2x4x1x96xf32, #tpu.memory_space<vmem>>, vector<1x1x1x96xf32>
    %50 = vector.shape_cast %49 : vector<1x1x1x96xf32> to vector<1x96xf32>
    %51 = vector.broadcast %50 : vector<1x96xf32> to vector<8x96xf32>
    %52 = arith.addf %48, %51 : vector<8x96xf32>
    %cst_31 = arith.constant dense<0.000000e+00> : vector<8x96xf32>
    %53 = tpu.matmul %43, %6, %cst_31 {dimension_numbers = #tpu.dot_dimension_numbers<[1], [0], [0], [1], [0, 0, 1, 1], [], []>} : vector<8x32xf32>, vector<32x96xf32>, vector<8x96xf32> -> vector<8x96xf32>
    %54 = vector.extract_strided_slice %52 {offsets = [0, 0], sizes = [8, 32], strides = [1, 1]} : vector<8x96xf32> to vector<8x32xf32>
    %55 = vector.extract_strided_slice %53 {offsets = [0, 0], sizes = [8, 32], strides = [1, 1]} : vector<8x96xf32> to vector<8x32xf32>
    %56 = arith.addf %54, %55 : vector<8x32xf32>
    %57 = arith.negf %56 : vector<8x32xf32>
    %58 = math.exp %57 : vector<8x32xf32>
    %cst_32 = arith.constant 1.000000e+00 : f32
    %59 = vector.broadcast %cst_32 : f32 to vector<8x32xf32>
    %60 = arith.addf %59, %58 : vector<8x32xf32>
    %61 = arith.divf %59, %60 : vector<8x32xf32>
    %62 = vector.extract_strided_slice %52 {offsets = [0, 32], sizes = [8, 32], strides = [1, 1]} : vector<8x96xf32> to vector<8x32xf32>
    %63 = vector.extract_strided_slice %53 {offsets = [0, 32], sizes = [8, 32], strides = [1, 1]} : vector<8x96xf32> to vector<8x32xf32>
    %64 = arith.addf %62, %63 : vector<8x32xf32>
    %65 = arith.negf %64 : vector<8x32xf32>
    %66 = math.exp %65 : vector<8x32xf32>
    %cst_33 = arith.constant 1.000000e+00 : f32
    %67 = vector.broadcast %cst_33 : f32 to vector<8x32xf32>
    %68 = arith.addf %67, %66 : vector<8x32xf32>
    %69 = arith.divf %67, %68 : vector<8x32xf32>
    %70 = vector.extract_strided_slice %52 {offsets = [0, 64], sizes = [8, 32], strides = [1, 1]} : vector<8x96xf32> to vector<8x32xf32>
    %71 = vector.extract_strided_slice %53 {offsets = [0, 64], sizes = [8, 32], strides = [1, 1]} : vector<8x96xf32> to vector<8x32xf32>
    %72 = vector.broadcast %8 : vector<1x32xf32> to vector<8x32xf32>
    %73 = arith.addf %71, %72 : vector<8x32xf32>
    %74 = arith.mulf %61, %73 : vector<8x32xf32>
    %75 = arith.addf %70, %74 : vector<8x32xf32>
    %76 = math.tanh %75 : vector<8x32xf32>
    %cst_34 = arith.constant 1.000000e+00 : f32
    %77 = vector.broadcast %cst_34 : f32 to vector<8x32xf32>
    %78 = arith.subf %77, %69 : vector<8x32xf32>
    %79 = arith.mulf %78, %76 : vector<8x32xf32>
    %80 = arith.mulf %69, %43 : vector<8x32xf32>
    %81 = arith.addf %79, %80 : vector<8x32xf32>
    %c0_35 = arith.constant 0 : index
    %c1_36 = arith.constant 1 : index
    %c0_37 = arith.constant 0 : index
    %c0_38 = arith.constant 0 : index
    %82 = vector.load %arg5[%c0_35, %c1_36, %c0_37, %c0_38] : memref<2x4x8x32xf32, #tpu.memory_space<vmem>>, vector<1x1x8x32xf32>
    %83 = vector.shape_cast %82 : vector<1x1x8x32xf32> to vector<8x32xf32>
    %84 = vector.shape_cast %81 : vector<8x32xf32> to vector<1x1x8x32xf32>
    tpu.vector_store %arg5[%c0_35, %c1_36, %c0_37, %c0_38], %84 {strides = array<i32>} : memref<2x4x8x32xf32, #tpu.memory_space<vmem>>, vector<1x1x8x32xf32>,
    %c0_39 = arith.constant 0 : index
    %c2 = arith.constant 2 : index
    %c0_40 = arith.constant 0 : index
    %c0_41 = arith.constant 0 : index
    %85 = vector.load %arg1[%c0_39, %c2, %c0_40, %c0_41] : memref<2x4x8x96xf32, #tpu.memory_space<vmem>>, vector<1x1x8x96xf32>
    %86 = vector.shape_cast %85 : vector<1x1x8x96xf32> to vector<8x96xf32>
    %c0_42 = arith.constant 0 : index
    %c2_43 = arith.constant 2 : index
    %c0_44 = arith.constant 0 : index
    %c0_45 = arith.constant 0 : index
    %87 = vector.load %arg2[%c0_42, %c2_43, %c0_44, %c0_45] : memref<2x4x1x96xf32, #tpu.memory_space<vmem>>, vector<1x1x1x96xf32>
    %88 = vector.shape_cast %87 : vector<1x1x1x96xf32> to vector<1x96xf32>
    %89 = vector.broadcast %88 : vector<1x96xf32> to vector<8x96xf32>
    %90 = arith.addf %86, %89 : vector<8x96xf32>
    %cst_46 = arith.constant dense<0.000000e+00> : vector<8x96xf32>
    %91 = tpu.matmul %81, %6, %cst_46 {dimension_numbers = #tpu.dot_dimension_numbers<[1], [0], [0], [1], [0, 0, 1, 1], [], []>} : vector<8x32xf32>, vector<32x96xf32>, vector<8x96xf32> -> vector<8x96xf32>
    %92 = vector.extract_strided_slice %90 {offsets = [0, 0], sizes = [8, 32], strides = [1, 1]} : vector<8x96xf32> to vector<8x32xf32>
    %93 = vector.extract_strided_slice %91 {offsets = [0, 0], sizes = [8, 32], strides = [1, 1]} : vector<8x96xf32> to vector<8x32xf32>
    %94 = arith.addf %92, %93 : vector<8x32xf32>
    %95 = arith.negf %94 : vector<8x32xf32>
    %96 = math.exp %95 : vector<8x32xf32>
    %cst_47 = arith.constant 1.000000e+00 : f32
    %97 = vector.broadcast %cst_47 : f32 to vector<8x32xf32>
    %98 = arith.addf %97, %96 : vector<8x32xf32>
    %99 = arith.divf %97, %98 : vector<8x32xf32>
    %100 = vector.extract_strided_slice %90 {offsets = [0, 32], sizes = [8, 32], strides = [1, 1]} : vector<8x96xf32> to vector<8x32xf32>
    %101 = vector.extract_strided_slice %91 {offsets = [0, 32], sizes = [8, 32], strides = [1, 1]} : vector<8x96xf32> to vector<8x32xf32>
    %102 = arith.addf %100, %101 : vector<8x32xf32>
    %103 = arith.negf %102 : vector<8x32xf32>
    %104 = math.exp %103 : vector<8x32xf32>
    %cst_48 = arith.constant 1.000000e+00 : f32
    %105 = vector.broadcast %cst_48 : f32 to vector<8x32xf32>
    %106 = arith.addf %105, %104 : vector<8x32xf32>
    %107 = arith.divf %105, %106 : vector<8x32xf32>
    %108 = vector.extract_strided_slice %90 {offsets = [0, 64], sizes = [8, 32], strides = [1, 1]} : vector<8x96xf32> to vector<8x32xf32>
    %109 = vector.extract_strided_slice %91 {offsets = [0, 64], sizes = [8, 32], strides = [1, 1]} : vector<8x96xf32> to vector<8x32xf32>
    %110 = vector.broadcast %8 : vector<1x32xf32> to vector<8x32xf32>
    %111 = arith.addf %109, %110 : vector<8x32xf32>
    %112 = arith.mulf %99, %111 : vector<8x32xf32>
    %113 = arith.addf %108, %112 : vector<8x32xf32>
    %114 = math.tanh %113 : vector<8x32xf32>
    %cst_49 = arith.constant 1.000000e+00 : f32
    %115 = vector.broadcast %cst_49 : f32 to vector<8x32xf32>
    %116 = arith.subf %115, %107 : vector<8x32xf32>
    %117 = arith.mulf %116, %114 : vector<8x32xf32>
    %118 = arith.mulf %107, %81 : vector<8x32xf32>
    %119 = arith.addf %117, %118 : vector<8x32xf32>
    %c0_50 = arith.constant 0 : index
    %c2_51 = arith.constant 2 : index
    %c0_52 = arith.constant 0 : index
    %c0_53 = arith.constant 0 : index
    %120 = vector.load %arg5[%c0_50, %c2_51, %c0_52, %c0_53] : memref<2x4x8x32xf32, #tpu.memory_space<vmem>>, vector<1x1x8x32xf32>
    %121 = vector.shape_cast %120 : vector<1x1x8x32xf32> to vector<8x32xf32>
    %122 = vector.shape_cast %119 : vector<8x32xf32> to vector<1x1x8x32xf32>
    tpu.vector_store %arg5[%c0_50, %c2_51, %c0_52, %c0_53], %122 {strides = array<i32>} : memref<2x4x8x32xf32, #tpu.memory_space<vmem>>, vector<1x1x8x32xf32>,
    %c0_54 = arith.constant 0 : index
    %c3 = arith.constant 3 : index
    %c0_55 = arith.constant 0 : index
    %c0_56 = arith.constant 0 : index
    %123 = vector.load %arg1[%c0_54, %c3, %c0_55, %c0_56] : memref<2x4x8x96xf32, #tpu.memory_space<vmem>>, vector<1x1x8x96xf32>
    %124 = vector.shape_cast %123 : vector<1x1x8x96xf32> to vector<8x96xf32>
    %c0_57 = arith.constant 0 : index
    %c3_58 = arith.constant 3 : index
    %c0_59 = arith.constant 0 : index
    %c0_60 = arith.constant 0 : index
    %125 = vector.load %arg2[%c0_57, %c3_58, %c0_59, %c0_60] : memref<2x4x1x96xf32, #tpu.memory_space<vmem>>, vector<1x1x1x96xf32>
    %126 = vector.shape_cast %125 : vector<1x1x1x96xf32> to vector<1x96xf32>
    %127 = vector.broadcast %126 : vector<1x96xf32> to vector<8x96xf32>
    %128 = arith.addf %124, %127 : vector<8x96xf32>
    %cst_61 = arith.constant dense<0.000000e+00> : vector<8x96xf32>
    %129 = tpu.matmul %119, %6, %cst_61 {dimension_numbers = #tpu.dot_dimension_numbers<[1], [0], [0], [1], [0, 0, 1, 1], [], []>} : vector<8x32xf32>, vector<32x96xf32>, vector<8x96xf32> -> vector<8x96xf32>
    %130 = vector.extract_strided_slice %128 {offsets = [0, 0], sizes = [8, 32], strides = [1, 1]} : vector<8x96xf32> to vector<8x32xf32>
    %131 = vector.extract_strided_slice %129 {offsets = [0, 0], sizes = [8, 32], strides = [1, 1]} : vector<8x96xf32> to vector<8x32xf32>
    %132 = arith.addf %130, %131 : vector<8x32xf32>
    %133 = arith.negf %132 : vector<8x32xf32>
    %134 = math.exp %133 : vector<8x32xf32>
    %cst_62 = arith.constant 1.000000e+00 : f32
    %135 = vector.broadcast %cst_62 : f32 to vector<8x32xf32>
    %136 = arith.addf %135, %134 : vector<8x32xf32>
    %137 = arith.divf %135, %136 : vector<8x32xf32>
    %138 = vector.extract_strided_slice %128 {offsets = [0, 32], sizes = [8, 32], strides = [1, 1]} : vector<8x96xf32> to vector<8x32xf32>
    %139 = vector.extract_strided_slice %129 {offsets = [0, 32], sizes = [8, 32], strides = [1, 1]} : vector<8x96xf32> to vector<8x32xf32>
    %140 = arith.addf %138, %139 : vector<8x32xf32>
    %141 = arith.negf %140 : vector<8x32xf32>
    %142 = math.exp %141 : vector<8x32xf32>
    %cst_63 = arith.constant 1.000000e+00 : f32
    %143 = vector.broadcast %cst_63 : f32 to vector<8x32xf32>
    %144 = arith.addf %143, %142 : vector<8x32xf32>
    %145 = arith.divf %143, %144 : vector<8x32xf32>
    %146 = vector.extract_strided_slice %128 {offsets = [0, 64], sizes = [8, 32], strides = [1, 1]} : vector<8x96xf32> to vector<8x32xf32>
    %147 = vector.extract_strided_slice %129 {offsets = [0, 64], sizes = [8, 32], strides = [1, 1]} : vector<8x96xf32> to vector<8x32xf32>
    %148 = vector.broadcast %8 : vector<1x32xf32> to vector<8x32xf32>
    %149 = arith.addf %147, %148 : vector<8x32xf32>
    %150 = arith.mulf %137, %149 : vector<8x32xf32>
    %151 = arith.addf %146, %150 : vector<8x32xf32>
    %152 = math.tanh %151 : vector<8x32xf32>
    %cst_64 = arith.constant 1.000000e+00 : f32
    %153 = vector.broadcast %cst_64 : f32 to vector<8x32xf32>
    %154 = arith.subf %153, %145 : vector<8x32xf32>
    %155 = arith.mulf %154, %152 : vector<8x32xf32>
    %156 = arith.mulf %145, %119 : vector<8x32xf32>
    %157 = arith.addf %155, %156 : vector<8x32xf32>
    %c0_65 = arith.constant 0 : index
    %c3_66 = arith.constant 3 : index
    %c0_67 = arith.constant 0 : index
    %c0_68 = arith.constant 0 : index
    %158 = vector.load %arg5[%c0_65, %c3_66, %c0_67, %c0_68] : memref<2x4x8x32xf32, #tpu.memory_space<vmem>>, vector<1x1x8x32xf32>
    %159 = vector.shape_cast %158 : vector<1x1x8x32xf32> to vector<8x32xf32>
    %160 = vector.shape_cast %157 : vector<8x32xf32> to vector<1x1x8x32xf32>
    tpu.vector_store %arg5[%c0_65, %c3_66, %c0_67, %c0_68], %160 {strides = array<i32>} : memref<2x4x8x32xf32, #tpu.memory_space<vmem>>, vector<1x1x8x32xf32>,
    %c0_69 = arith.constant 0 : index
    %c0_70 = arith.constant 0 : index
    %c0_71 = arith.constant 0 : index
    %161 = vector.load %arg6[%c0_69, %c0_70, %c0_71] : memref<2x8x32xf32, #tpu.memory_space<vmem>>, vector<1x8x32xf32>
    %162 = vector.shape_cast %161 : vector<1x8x32xf32> to vector<8x32xf32>
    %163 = vector.shape_cast %157 : vector<8x32xf32> to vector<1x8x32xf32>
    tpu.vector_store %arg6[%c0_69, %c0_70, %c0_71], %163 {strides = array<i32>} : memref<2x8x32xf32, #tpu.memory_space<vmem>>, vector<1x8x32xf32>,
    %c1_72 = arith.constant 1 : index
    %c0_73 = arith.constant 0 : index
    %c0_74 = arith.constant 0 : index
    %164 = vector.load %arg6[%c1_72, %c0_73, %c0_74] : memref<2x8x32xf32, #tpu.memory_space<vmem>>, vector<1x8x32xf32>
    %165 = vector.shape_cast %164 : vector<1x8x32xf32> to vector<8x32xf32>
    %c1_75 = arith.constant 1 : index
    %c0_76 = arith.constant 0 : index
    %c0_77 = arith.constant 0 : index
    %166 = vector.load %arg3[%c1_75, %c0_76, %c0_77] : memref<2x32x96xf32, #tpu.memory_space<vmem>>, vector<1x32x96xf32>
    %167 = vector.shape_cast %166 : vector<1x32x96xf32> to vector<32x96xf32>
    %c1_78 = arith.constant 1 : index
    %c0_79 = arith.constant 0 : index
    %c0_80 = arith.constant 0 : index
    %168 = vector.load %arg4[%c1_78, %c0_79, %c0_80] : memref<2x1x32xf32, #tpu.memory_space<vmem>>, vector<1x1x32xf32>
    %169 = vector.shape_cast %168 : vector<1x1x32xf32> to vector<1x32xf32>
    %c1_81 = arith.constant 1 : index
    %c0_82 = arith.constant 0 : index
    %c0_83 = arith.constant 0 : index
    %c0_84 = arith.constant 0 : index
    %170 = vector.load %arg1[%c1_81, %c0_82, %c0_83, %c0_84] : memref<2x4x8x96xf32, #tpu.memory_space<vmem>>, vector<1x1x8x96xf32>
    %171 = vector.shape_cast %170 : vector<1x1x8x96xf32> to vector<8x96xf32>
    %c1_85 = arith.constant 1 : index
    %c0_86 = arith.constant 0 : index
    %c0_87 = arith.constant 0 : index
    %c0_88 = arith.constant 0 : index
    %172 = vector.load %arg2[%c1_85, %c0_86, %c0_87, %c0_88] : memref<2x4x1x96xf32, #tpu.memory_space<vmem>>, vector<1x1x1x96xf32>
    %173 = vector.shape_cast %172 : vector<1x1x1x96xf32> to vector<1x96xf32>
    %174 = vector.broadcast %173 : vector<1x96xf32> to vector<8x96xf32>
    %175 = arith.addf %171, %174 : vector<8x96xf32>
    %cst_89 = arith.constant dense<0.000000e+00> : vector<8x96xf32>
    %176 = tpu.matmul %165, %167, %cst_89 {dimension_numbers = #tpu.dot_dimension_numbers<[1], [0], [0], [1], [0, 0, 1, 1], [], []>} : vector<8x32xf32>, vector<32x96xf32>, vector<8x96xf32> -> vector<8x96xf32>
    %177 = vector.extract_strided_slice %175 {offsets = [0, 0], sizes = [8, 32], strides = [1, 1]} : vector<8x96xf32> to vector<8x32xf32>
    %178 = vector.extract_strided_slice %176 {offsets = [0, 0], sizes = [8, 32], strides = [1, 1]} : vector<8x96xf32> to vector<8x32xf32>
    %179 = arith.addf %177, %178 : vector<8x32xf32>
    %180 = arith.negf %179 : vector<8x32xf32>
    %181 = math.exp %180 : vector<8x32xf32>
    %cst_90 = arith.constant 1.000000e+00 : f32
    %182 = vector.broadcast %cst_90 : f32 to vector<8x32xf32>
    %183 = arith.addf %182, %181 : vector<8x32xf32>
    %184 = arith.divf %182, %183 : vector<8x32xf32>
    %185 = vector.extract_strided_slice %175 {offsets = [0, 32], sizes = [8, 32], strides = [1, 1]} : vector<8x96xf32> to vector<8x32xf32>
    %186 = vector.extract_strided_slice %176 {offsets = [0, 32], sizes = [8, 32], strides = [1, 1]} : vector<8x96xf32> to vector<8x32xf32>
    %187 = arith.addf %185, %186 : vector<8x32xf32>
    %188 = arith.negf %187 : vector<8x32xf32>
    %189 = math.exp %188 : vector<8x32xf32>
    %cst_91 = arith.constant 1.000000e+00 : f32
    %190 = vector.broadcast %cst_91 : f32 to vector<8x32xf32>
    %191 = arith.addf %190, %189 : vector<8x32xf32>
    %192 = arith.divf %190, %191 : vector<8x32xf32>
    %193 = vector.extract_strided_slice %175 {offsets = [0, 64], sizes = [8, 32], strides = [1, 1]} : vector<8x96xf32> to vector<8x32xf32>
    %194 = vector.extract_strided_slice %176 {offsets = [0, 64], sizes = [8, 32], strides = [1, 1]} : vector<8x96xf32> to vector<8x32xf32>
    %195 = vector.broadcast %169 : vector<1x32xf32> to vector<8x32xf32>
    %196 = arith.addf %194, %195 : vector<8x32xf32>
    %197 = arith.mulf %184, %196 : vector<8x32xf32>
    %198 = arith.addf %193, %197 : vector<8x32xf32>
    %199 = math.tanh %198 : vector<8x32xf32>
    %cst_92 = arith.constant 1.000000e+00 : f32
    %200 = vector.broadcast %cst_92 : f32 to vector<8x32xf32>
    %201 = arith.subf %200, %192 : vector<8x32xf32>
    %202 = arith.mulf %201, %199 : vector<8x32xf32>
    %203 = arith.mulf %192, %165 : vector<8x32xf32>
    %204 = arith.addf %202, %203 : vector<8x32xf32>
    %c1_93 = arith.constant 1 : index
    %c0_94 = arith.constant 0 : index
    %c0_95 = arith.constant 0 : index
    %c0_96 = arith.constant 0 : index
    %205 = vector.load %arg5[%c1_93, %c0_94, %c0_95, %c0_96] : memref<2x4x8x32xf32, #tpu.memory_space<vmem>>, vector<1x1x8x32xf32>
    %206 = vector.shape_cast %205 : vector<1x1x8x32xf32> to vector<8x32xf32>
    %207 = vector.shape_cast %204 : vector<8x32xf32> to vector<1x1x8x32xf32>
    tpu.vector_store %arg5[%c1_93, %c0_94, %c0_95, %c0_96], %207 {strides = array<i32>} : memref<2x4x8x32xf32, #tpu.memory_space<vmem>>, vector<1x1x8x32xf32>,
    %c1_97 = arith.constant 1 : index
    %c1_98 = arith.constant 1 : index
    %c0_99 = arith.constant 0 : index
    %c0_100 = arith.constant 0 : index
    %208 = vector.load %arg1[%c1_97, %c1_98, %c0_99, %c0_100] : memref<2x4x8x96xf32, #tpu.memory_space<vmem>>, vector<1x1x8x96xf32>
    %209 = vector.shape_cast %208 : vector<1x1x8x96xf32> to vector<8x96xf32>
    %c1_101 = arith.constant 1 : index
    %c1_102 = arith.constant 1 : index
    %c0_103 = arith.constant 0 : index
    %c0_104 = arith.constant 0 : index
    %210 = vector.load %arg2[%c1_101, %c1_102, %c0_103, %c0_104] : memref<2x4x1x96xf32, #tpu.memory_space<vmem>>, vector<1x1x1x96xf32>
    %211 = vector.shape_cast %210 : vector<1x1x1x96xf32> to vector<1x96xf32>
    %212 = vector.broadcast %211 : vector<1x96xf32> to vector<8x96xf32>
    %213 = arith.addf %209, %212 : vector<8x96xf32>
    %cst_105 = arith.constant dense<0.000000e+00> : vector<8x96xf32>
    %214 = tpu.matmul %204, %167, %cst_105 {dimension_numbers = #tpu.dot_dimension_numbers<[1], [0], [0], [1], [0, 0, 1, 1], [], []>} : vector<8x32xf32>, vector<32x96xf32>, vector<8x96xf32> -> vector<8x96xf32>
    %215 = vector.extract_strided_slice %213 {offsets = [0, 0], sizes = [8, 32], strides = [1, 1]} : vector<8x96xf32> to vector<8x32xf32>
    %216 = vector.extract_strided_slice %214 {offsets = [0, 0], sizes = [8, 32], strides = [1, 1]} : vector<8x96xf32> to vector<8x32xf32>
    %217 = arith.addf %215, %216 : vector<8x32xf32>
    %218 = arith.negf %217 : vector<8x32xf32>
    %219 = math.exp %218 : vector<8x32xf32>
    %cst_106 = arith.constant 1.000000e+00 : f32
    %220 = vector.broadcast %cst_106 : f32 to vector<8x32xf32>
    %221 = arith.addf %220, %219 : vector<8x32xf32>
    %222 = arith.divf %220, %221 : vector<8x32xf32>
    %223 = vector.extract_strided_slice %213 {offsets = [0, 32], sizes = [8, 32], strides = [1, 1]} : vector<8x96xf32> to vector<8x32xf32>
    %224 = vector.extract_strided_slice %214 {offsets = [0, 32], sizes = [8, 32], strides = [1, 1]} : vector<8x96xf32> to vector<8x32xf32>
    %225 = arith.addf %223, %224 : vector<8x32xf32>
    %226 = arith.negf %225 : vector<8x32xf32>
    %227 = math.exp %226 : vector<8x32xf32>
    %cst_107 = arith.constant 1.000000e+00 : f32
    %228 = vector.broadcast %cst_107 : f32 to vector<8x32xf32>
    %229 = arith.addf %228, %227 : vector<8x32xf32>
    %230 = arith.divf %228, %229 : vector<8x32xf32>
    %231 = vector.extract_strided_slice %213 {offsets = [0, 64], sizes = [8, 32], strides = [1, 1]} : vector<8x96xf32> to vector<8x32xf32>
    %232 = vector.extract_strided_slice %214 {offsets = [0, 64], sizes = [8, 32], strides = [1, 1]} : vector<8x96xf32> to vector<8x32xf32>
    %233 = vector.broadcast %169 : vector<1x32xf32> to vector<8x32xf32>
    %234 = arith.addf %232, %233 : vector<8x32xf32>
    %235 = arith.mulf %222, %234 : vector<8x32xf32>
    %236 = arith.addf %231, %235 : vector<8x32xf32>
    %237 = math.tanh %236 : vector<8x32xf32>
    %cst_108 = arith.constant 1.000000e+00 : f32
    %238 = vector.broadcast %cst_108 : f32 to vector<8x32xf32>
    %239 = arith.subf %238, %230 : vector<8x32xf32>
    %240 = arith.mulf %239, %237 : vector<8x32xf32>
    %241 = arith.mulf %230, %204 : vector<8x32xf32>
    %242 = arith.addf %240, %241 : vector<8x32xf32>
    %c1_109 = arith.constant 1 : index
    %c1_110 = arith.constant 1 : index
    %c0_111 = arith.constant 0 : index
    %c0_112 = arith.constant 0 : index
    %243 = vector.load %arg5[%c1_109, %c1_110, %c0_111, %c0_112] : memref<2x4x8x32xf32, #tpu.memory_space<vmem>>, vector<1x1x8x32xf32>
    %244 = vector.shape_cast %243 : vector<1x1x8x32xf32> to vector<8x32xf32>
    %245 = vector.shape_cast %242 : vector<8x32xf32> to vector<1x1x8x32xf32>
    tpu.vector_store %arg5[%c1_109, %c1_110, %c0_111, %c0_112], %245 {strides = array<i32>} : memref<2x4x8x32xf32, #tpu.memory_space<vmem>>, vector<1x1x8x32xf32>,
    %c1_113 = arith.constant 1 : index
    %c2_114 = arith.constant 2 : index
    %c0_115 = arith.constant 0 : index
    %c0_116 = arith.constant 0 : index
    %246 = vector.load %arg1[%c1_113, %c2_114, %c0_115, %c0_116] : memref<2x4x8x96xf32, #tpu.memory_space<vmem>>, vector<1x1x8x96xf32>
    %247 = vector.shape_cast %246 : vector<1x1x8x96xf32> to vector<8x96xf32>
    %c1_117 = arith.constant 1 : index
    %c2_118 = arith.constant 2 : index
    %c0_119 = arith.constant 0 : index
    %c0_120 = arith.constant 0 : index
    %248 = vector.load %arg2[%c1_117, %c2_118, %c0_119, %c0_120] : memref<2x4x1x96xf32, #tpu.memory_space<vmem>>, vector<1x1x1x96xf32>
    %249 = vector.shape_cast %248 : vector<1x1x1x96xf32> to vector<1x96xf32>
    %250 = vector.broadcast %249 : vector<1x96xf32> to vector<8x96xf32>
    %251 = arith.addf %247, %250 : vector<8x96xf32>
    %cst_121 = arith.constant dense<0.000000e+00> : vector<8x96xf32>
    %252 = tpu.matmul %242, %167, %cst_121 {dimension_numbers = #tpu.dot_dimension_numbers<[1], [0], [0], [1], [0, 0, 1, 1], [], []>} : vector<8x32xf32>, vector<32x96xf32>, vector<8x96xf32> -> vector<8x96xf32>
    %253 = vector.extract_strided_slice %251 {offsets = [0, 0], sizes = [8, 32], strides = [1, 1]} : vector<8x96xf32> to vector<8x32xf32>
    %254 = vector.extract_strided_slice %252 {offsets = [0, 0], sizes = [8, 32], strides = [1, 1]} : vector<8x96xf32> to vector<8x32xf32>
    %255 = arith.addf %253, %254 : vector<8x32xf32>
    %256 = arith.negf %255 : vector<8x32xf32>
    %257 = math.exp %256 : vector<8x32xf32>
    %cst_122 = arith.constant 1.000000e+00 : f32
    %258 = vector.broadcast %cst_122 : f32 to vector<8x32xf32>
    %259 = arith.addf %258, %257 : vector<8x32xf32>
    %260 = arith.divf %258, %259 : vector<8x32xf32>
    %261 = vector.extract_strided_slice %251 {offsets = [0, 32], sizes = [8, 32], strides = [1, 1]} : vector<8x96xf32> to vector<8x32xf32>
    %262 = vector.extract_strided_slice %252 {offsets = [0, 32], sizes = [8, 32], strides = [1, 1]} : vector<8x96xf32> to vector<8x32xf32>
    %263 = arith.addf %261, %262 : vector<8x32xf32>
    %264 = arith.negf %263 : vector<8x32xf32>
    %265 = math.exp %264 : vector<8x32xf32>
    %cst_123 = arith.constant 1.000000e+00 : f32
    %266 = vector.broadcast %cst_123 : f32 to vector<8x32xf32>
    %267 = arith.addf %266, %265 : vector<8x32xf32>
    %268 = arith.divf %266, %267 : vector<8x32xf32>
    %269 = vector.extract_strided_slice %251 {offsets = [0, 64], sizes = [8, 32], strides = [1, 1]} : vector<8x96xf32> to vector<8x32xf32>
    %270 = vector.extract_strided_slice %252 {offsets = [0, 64], sizes = [8, 32], strides = [1, 1]} : vector<8x96xf32> to vector<8x32xf32>
    %271 = vector.broadcast %169 : vector<1x32xf32> to vector<8x32xf32>
    %272 = arith.addf %270, %271 : vector<8x32xf32>
    %273 = arith.mulf %260, %272 : vector<8x32xf32>
    %274 = arith.addf %269, %273 : vector<8x32xf32>
    %275 = math.tanh %274 : vector<8x32xf32>
    %cst_124 = arith.constant 1.000000e+00 : f32
    %276 = vector.broadcast %cst_124 : f32 to vector<8x32xf32>
    %277 = arith.subf %276, %268 : vector<8x32xf32>
    %278 = arith.mulf %277, %275 : vector<8x32xf32>
    %279 = arith.mulf %268, %242 : vector<8x32xf32>
    %280 = arith.addf %278, %279 : vector<8x32xf32>
    %c1_125 = arith.constant 1 : index
    %c2_126 = arith.constant 2 : index
    %c0_127 = arith.constant 0 : index
    %c0_128 = arith.constant 0 : index
    %281 = vector.load %arg5[%c1_125, %c2_126, %c0_127, %c0_128] : memref<2x4x8x32xf32, #tpu.memory_space<vmem>>, vector<1x1x8x32xf32>
    %282 = vector.shape_cast %281 : vector<1x1x8x32xf32> to vector<8x32xf32>
    %283 = vector.shape_cast %280 : vector<8x32xf32> to vector<1x1x8x32xf32>
    tpu.vector_store %arg5[%c1_125, %c2_126, %c0_127, %c0_128], %283 {strides = array<i32>} : memref<2x4x8x32xf32, #tpu.memory_space<vmem>>, vector<1x1x8x32xf32>,
    %c1_129 = arith.constant 1 : index
    %c3_130 = arith.constant 3 : index
    %c0_131 = arith.constant 0 : index
    %c0_132 = arith.constant 0 : index
    %284 = vector.load %arg1[%c1_129, %c3_130, %c0_131, %c0_132] : memref<2x4x8x96xf32, #tpu.memory_space<vmem>>, vector<1x1x8x96xf32>
    %285 = vector.shape_cast %284 : vector<1x1x8x96xf32> to vector<8x96xf32>
    %c1_133 = arith.constant 1 : index
    %c3_134 = arith.constant 3 : index
    %c0_135 = arith.constant 0 : index
    %c0_136 = arith.constant 0 : index
    %286 = vector.load %arg2[%c1_133, %c3_134, %c0_135, %c0_136] : memref<2x4x1x96xf32, #tpu.memory_space<vmem>>, vector<1x1x1x96xf32>
    %287 = vector.shape_cast %286 : vector<1x1x1x96xf32> to vector<1x96xf32>
    %288 = vector.broadcast %287 : vector<1x96xf32> to vector<8x96xf32>
    %289 = arith.addf %285, %288 : vector<8x96xf32>
    %cst_137 = arith.constant dense<0.000000e+00> : vector<8x96xf32>
    %290 = tpu.matmul %280, %167, %cst_137 {dimension_numbers = #tpu.dot_dimension_numbers<[1], [0], [0], [1], [0, 0, 1, 1], [], []>} : vector<8x32xf32>, vector<32x96xf32>, vector<8x96xf32> -> vector<8x96xf32>
    %291 = vector.extract_strided_slice %289 {offsets = [0, 0], sizes = [8, 32], strides = [1, 1]} : vector<8x96xf32> to vector<8x32xf32>
    %292 = vector.extract_strided_slice %290 {offsets = [0, 0], sizes = [8, 32], strides = [1, 1]} : vector<8x96xf32> to vector<8x32xf32>
    %293 = arith.addf %291, %292 : vector<8x32xf32>
    %294 = arith.negf %293 : vector<8x32xf32>
    %295 = math.exp %294 : vector<8x32xf32>
    %cst_138 = arith.constant 1.000000e+00 : f32
    %296 = vector.broadcast %cst_138 : f32 to vector<8x32xf32>
    %297 = arith.addf %296, %295 : vector<8x32xf32>
    %298 = arith.divf %296, %297 : vector<8x32xf32>
    %299 = vector.extract_strided_slice %289 {offsets = [0, 32], sizes = [8, 32], strides = [1, 1]} : vector<8x96xf32> to vector<8x32xf32>
    %300 = vector.extract_strided_slice %290 {offsets = [0, 32], sizes = [8, 32], strides = [1, 1]} : vector<8x96xf32> to vector<8x32xf32>
    %301 = arith.addf %299, %300 : vector<8x32xf32>
    %302 = arith.negf %301 : vector<8x32xf32>
    %303 = math.exp %302 : vector<8x32xf32>
    %cst_139 = arith.constant 1.000000e+00 : f32
    %304 = vector.broadcast %cst_139 : f32 to vector<8x32xf32>
    %305 = arith.addf %304, %303 : vector<8x32xf32>
    %306 = arith.divf %304, %305 : vector<8x32xf32>
    %307 = vector.extract_strided_slice %289 {offsets = [0, 64], sizes = [8, 32], strides = [1, 1]} : vector<8x96xf32> to vector<8x32xf32>
    %308 = vector.extract_strided_slice %290 {offsets = [0, 64], sizes = [8, 32], strides = [1, 1]} : vector<8x96xf32> to vector<8x32xf32>
    %309 = vector.broadcast %169 : vector<1x32xf32> to vector<8x32xf32>
    %310 = arith.addf %308, %309 : vector<8x32xf32>
    %311 = arith.mulf %298, %310 : vector<8x32xf32>
    %312 = arith.addf %307, %311 : vector<8x32xf32>
    %313 = math.tanh %312 : vector<8x32xf32>
    %cst_140 = arith.constant 1.000000e+00 : f32
    %314 = vector.broadcast %cst_140 : f32 to vector<8x32xf32>
    %315 = arith.subf %314, %306 : vector<8x32xf32>
    %316 = arith.mulf %315, %313 : vector<8x32xf32>
    %317 = arith.mulf %306, %280 : vector<8x32xf32>
    %318 = arith.addf %316, %317 : vector<8x32xf32>
    %c1_141 = arith.constant 1 : index
    %c3_142 = arith.constant 3 : index
    %c0_143 = arith.constant 0 : index
    %c0_144 = arith.constant 0 : index
    %319 = vector.load %arg5[%c1_141, %c3_142, %c0_143, %c0_144] : memref<2x4x8x32xf32, #tpu.memory_space<vmem>>, vector<1x1x8x32xf32>
    %320 = vector.shape_cast %319 : vector<1x1x8x32xf32> to vector<8x32xf32>
    %321 = vector.shape_cast %318 : vector<8x32xf32> to vector<1x1x8x32xf32>
    tpu.vector_store %arg5[%c1_141, %c3_142, %c0_143, %c0_144], %321 {strides = array<i32>} : memref<2x4x8x32xf32, #tpu.memory_space<vmem>>, vector<1x1x8x32xf32>,
    %c1_145 = arith.constant 1 : index
    %c0_146 = arith.constant 0 : index
    %c0_147 = arith.constant 0 : index
    %322 = vector.load %arg6[%c1_145, %c0_146, %c0_147] : memref<2x8x32xf32, #tpu.memory_space<vmem>>, vector<1x8x32xf32>
    %323 = vector.shape_cast %322 : vector<1x8x32xf32> to vector<8x32xf32>
    %324 = vector.shape_cast %318 : vector<8x32xf32> to vector<1x8x32xf32>
    tpu.vector_store %arg6[%c1_145, %c0_146, %c0_147], %324 {strides = array<i32>} : memref<2x8x32xf32, #tpu.memory_space<vmem>>, vector<1x8x32xf32>,
    return
  }
  func.func @transform_0(%arg0: i32) -> (i32, i32, i32, i32) {
    %c2_i32 = arith.constant 2 : i32
    %c0_i32 = arith.constant 0 : i32
    %c0_i32_0 = arith.constant 0 : i32
    %c0_i32_1 = arith.constant 0 : i32
    return %c2_i32, %arg0, %c0_i32, %c0_i32_0 : i32, i32, i32, i32
  }
  func.func @transform_1(%arg0: i32) -> (i32, i32, i32, i32) {
    %c0_i32 = arith.constant 0 : i32
    %c0_i32_0 = arith.constant 0 : i32
    %c0_i32_1 = arith.constant 0 : i32
    %c0_i32_2 = arith.constant 0 : i32
    return %c0_i32, %arg0, %c0_i32_0, %c0_i32_1 : i32, i32, i32, i32
  }
  func.func @transform_2(%arg0: i32) -> (i32, i32, i32) {
    %c0_i32 = arith.constant 0 : i32
    %c0_i32_0 = arith.constant 0 : i32
    %c0_i32_1 = arith.constant 0 : i32
    %c0_i32_2 = arith.constant 0 : i32
    return %c0_i32, %c0_i32_0, %c0_i32_1 : i32, i32, i32
  }
  func.func @transform_3(%arg0: i32) -> (i32, i32, i32) {
    %c0_i32 = arith.constant 0 : i32
    %c0_i32_0 = arith.constant 0 : i32
    %c0_i32_1 = arith.constant 0 : i32
    %c0_i32_2 = arith.constant 0 : i32
    return %c0_i32, %c0_i32_0, %c0_i32_1 : i32, i32, i32
  }
  func.func @transform_4(%arg0: i32) -> (i32, i32, i32, i32) {
    %c0_i32 = arith.constant 0 : i32
    %c0_i32_0 = arith.constant 0 : i32
    %c0_i32_1 = arith.constant 0 : i32
    %c0_i32_2 = arith.constant 0 : i32
    return %c0_i32, %arg0, %c0_i32_0, %c0_i32_1 : i32, i32, i32, i32
  }
}

module attributes {stable_mosaic.version = 11 : i64} {
  func.func @_linear_kernel(%arg0: i32, %arg1: i32, %arg2: memref<64x32xf32, #tpu.memory_space<vmem>>, %arg3: memref<32x128xf32, #tpu.memory_space<vmem>>, %arg4: memref<1x128xf32, #tpu.memory_space<vmem>>, %arg5: memref<64x128xf32, #tpu.memory_space<vmem>>) attributes {dimension_semantics = [#tpu.dimension_semantics<parallel>, #tpu.dimension_semantics<parallel>], iteration_bounds = array<i64: 1, 1>, scalar_prefetch = 0 : i64, scratch_operands = 0 : i64, tpu.core_type = #tpu.core_type<tc>, window_params = [{transform_indices = @transform_0, window_bounds = array<i64: 64, 32>}, {transform_indices = @transform_1, window_bounds = array<i64: 32, 128>}, {transform_indices = @transform_2, window_bounds = array<i64: 1, 128>}, {transform_indices = @transform_3, window_bounds = array<i64: 64, 128>}]} {
    %c0 = arith.constant 0 : index
    %c0_0 = arith.constant 0 : index
    %0 = vector.load %arg2[%c0, %c0_0] : memref<64x32xf32, #tpu.memory_space<vmem>>, vector<64x32xf32>
    %c0_1 = arith.constant 0 : index
    %c0_2 = arith.constant 0 : index
    %1 = vector.load %arg3[%c0_1, %c0_2] : memref<32x128xf32, #tpu.memory_space<vmem>>, vector<32x128xf32>
    %cst = arith.constant dense<0.000000e+00> : vector<64x128xf32>
    %2 = tpu.matmul %0, %1, %cst {dimension_numbers = #tpu.dot_dimension_numbers<[1], [0], [0], [1], [0, 0, 1, 1], [], []>} : vector<64x32xf32>, vector<32x128xf32>, vector<64x128xf32> -> vector<64x128xf32>
    %c0_3 = arith.constant 0 : index
    %c0_4 = arith.constant 0 : index
    %3 = vector.load %arg4[%c0_3, %c0_4] : memref<1x128xf32, #tpu.memory_space<vmem>>, vector<1x128xf32>
    %4 = vector.broadcast %3 : vector<1x128xf32> to vector<64x128xf32>
    %5 = arith.addf %2, %4 : vector<64x128xf32>
    %c0_5 = arith.constant 0 : index
    %c0_6 = arith.constant 0 : index
    %6 = vector.load %arg5[%c0_5, %c0_6] : memref<64x128xf32, #tpu.memory_space<vmem>>, vector<64x128xf32>
    tpu.vector_store %arg5[%c0_5, %c0_6], %5 {strides = array<i32>} : memref<64x128xf32, #tpu.memory_space<vmem>>, vector<64x128xf32>,
    return
  }
  func.func @transform_0(%arg0: i32, %arg1: i32) -> (i32, i32) {
    %c0_i32 = arith.constant 0 : i32
    %c0_i32_0 = arith.constant 0 : i32
    return %arg1, %c0_i32 : i32, i32
  }
  func.func @transform_1(%arg0: i32, %arg1: i32) -> (i32, i32) {
    %c0_i32 = arith.constant 0 : i32
    %c0_i32_0 = arith.constant 0 : i32
    return %c0_i32, %arg0 : i32, i32
  }
  func.func @transform_2(%arg0: i32, %arg1: i32) -> (i32, i32) {
    %c0_i32 = arith.constant 0 : i32
    %c0_i32_0 = arith.constant 0 : i32
    return %c0_i32, %arg0 : i32, i32
  }
  func.func @transform_3(%arg0: i32, %arg1: i32) -> (i32, i32) {
    %c0_i32 = arith.constant 0 : i32
    return %arg1, %arg0 : i32, i32
  }
}

</mosaic_0001>

<llo_original>
// kernel: user_item_encoder_forward.7
$region0: #{user_item_encoder_forward.7}
  #allocation0 [shape = 'u32[]', space=smem, size = 0x4, offset = 0x4, fixed_abs, tag = 'smem constant byte address 0x4 - core index']
  #allocation1 [shape = 'u32[144,128]{1,0:T(1,128)}', space=vmem, size = 0x12000, scoped, tag = 'internal scratch']
  %s0 = inlined_call_operand.vmem [shape: f32[4,128], index: 0, kind: input, shape index: {}]
  %s1 = inlined_call_operand.vmem [shape: f32[128,32], index: 1, kind: input, shape index: {}]
  %s2 = inlined_call_operand.vmem [shape: f32[1,32], index: 2, kind: input, shape index: {}]
  %s3 = inlined_call_operand.vmem [shape: f32[32,64], index: 3, kind: input, shape index: {}]
  %s4 = inlined_call_operand.vmem [shape: f32[1,64], index: 4, kind: input, shape index: {}]
  %s5 = inlined_call_operand.vmem [shape: f32[64,192], index: 5, kind: input, shape index: {}]
  %s6 = inlined_call_operand.vmem [shape: f32[2,4,96], index: 6, kind: output, shape index: {}]
  %s7 = sld [smem:[#allocation0]]
  $region34: #{user_item_encoder_forward.7} parent=0
    _
  %s9 = ssub.s32 1, %s7
  %s10 = scalar_select 0, %s9, %s7
  // Predicated region
  $region2: #{user_item_encoder_forward.7} parent=0 // pred_check
    _
  $region3: #{user_item_encoder_forward.7} parent=0 // pred_check_branch
    %12 = sbr.rel (0) target = $region5
  $region4: #{user_item_encoder_forward.7} parent=0 // pred_region
    _
  $region5: #{user_item_encoder_forward.7} parent=0 // pred_fallthru
    _
  // Predicated region
  $region6: #{user_item_encoder_forward.7} parent=0 // pred_check
    _
  $region7: #{user_item_encoder_forward.7} parent=0 // pred_check_branch
    %14 = sbr.rel (0) target = $region9
  $region8: #{user_item_encoder_forward.7} parent=0 // pred_region
    _
  $region9: #{user_item_encoder_forward.7} parent=0 // pred_fallthru
    _
  // Predicated region
  $region10: #{user_item_encoder_forward.7} parent=0 // pred_check
    _
  $region11: #{user_item_encoder_forward.7} parent=0 // pred_check_branch
    %16 = sbr.rel (0) target = $region13
  $region12: #{user_item_encoder_forward.7} parent=0 // pred_region
    _
  $region13: #{user_item_encoder_forward.7} parent=0 // pred_fallthru
    _
  // Predicated region
  $region14: #{user_item_encoder_forward.7} parent=0 // pred_check
    _
  $region15: #{user_item_encoder_forward.7} parent=0 // pred_check_branch
    %18 = sbr.rel (0) target = $region17
  $region16: #{user_item_encoder_forward.7} parent=0 // pred_region
    _
  $region17: #{user_item_encoder_forward.7} parent=0 // pred_fallthru
    _
  // Predicated region
  $region18: #{user_item_encoder_forward.7} parent=0 // pred_check
    _
  $region19: #{user_item_encoder_forward.7} parent=0 // pred_check_branch
    %20 = sbr.rel (0) target = $region21
  $region20: #{user_item_encoder_forward.7} parent=0 // pred_region
    _
  $region21: #{user_item_encoder_forward.7} parent=0 // pred_fallthru
    _
  // Predicated region
  $region22: #{user_item_encoder_forward.7} parent=0 // pred_check
    _
  $region23: #{user_item_encoder_forward.7} parent=0 // pred_check_branch
    %22 = sbr.rel (0) target = $region25
  $region24: #{user_item_encoder_forward.7} parent=0 // pred_region
    _
  $region25: #{user_item_encoder_forward.7} parent=0 // pred_fallthru
    _
  %v23 = vld [vmem:[%s0] sm:$0xf]
  %v24 = vld [vmem:[%s1] sm:$0xff]
  %v25 = vld [vmem:[%s1 + $0x8] sm:$0xff]
  %v26 = vld [vmem:[%s1 + $0x10] sm:$0xff]
  %v27 = vld [vmem:[%s1 + $0x18] sm:$0xff]
  %v28 = vld [vmem:[%s1 + $0x20] sm:$0xff]
  %v29 = vld [vmem:[%s1 + $0x28] sm:$0xff]
  %v30 = vld [vmem:[%s1 + $0x30] sm:$0xff]
  %v31 = vld [vmem:[%s1 + $0x38] sm:$0xff]
  %v32 = vld [vmem:[%s1 + $0x40] sm:$0xff]
  %v33 = vld [vmem:[%s1 + $0x48] sm:$0xff]
  %v34 = vld [vmem:[%s1 + $0x50] sm:$0xff]
  %v35 = vld [vmem:[%s1 + $0x58] sm:$0xff]
  %v36 = vld [vmem:[%s1 + $0x60] sm:$0xff]
  %v37 = vld [vmem:[%s1 + $0x68] sm:$0xff]
  %v38 = vld [vmem:[%s1 + $0x70] sm:$0xff]
  %v39 = vld [vmem:[%s1 + $0x78] sm:$0xff]
  %v40 = vld [vmem:[%s2] sm:$0x1]
  %v42 = vlaneseq
  %v43 = vshrl.u32 %v42, 7
  %v44 = vsub.s32 0, %v43
  %v45 = vrot.slane %v40, %v44
  %47 = vmatprep.subr.mxu0 0.0
  %48 = vmatpush1.msra.mxu0 %v39
  %49 = vmatprep.subr.mxu0 0.0
  %50 = vmatpush1.msra.mxu0 %v38
  %51 = vmatprep.subr.mxu0 0.0
  %52 = vmatpush1.msra.mxu0 %v37
  %53 = vmatprep.subr.mxu0 0.0
  %54 = vmatpush1.msra.mxu0 %v36
  %55 = vmatprep.subr.mxu0 0.0
  %56 = vmatpush1.msra.mxu0 %v35
  %57 = vmatprep.subr.mxu0 0.0
  %58 = vmatpush1.msra.mxu0 %v34
  %59 = vmatprep.subr.mxu0 0.0
  %60 = vmatpush1.msra.mxu0 %v33
  %61 = vmatprep.subr.mxu0 0.0
  %62 = vmatpush1.msra.mxu0 %v32
  %63 = vmatprep.subr.mxu0 0.0
  %64 = vmatpush1.msra.mxu0 %v31
  %65 = vmatprep.subr.mxu0 0.0
  %66 = vmatpush1.msra.mxu0 %v30
  %67 = vmatprep.subr.mxu0 0.0
  %68 = vmatpush1.msra.mxu0 %v29
  %69 = vmatprep.subr.mxu0 0.0
  %70 = vmatpush1.msra.mxu0 %v28
  %71 = vmatprep.subr.mxu0 0.0
  %72 = vmatpush1.msra.mxu0 %v27
  %73 = vmatprep.subr.mxu0 0.0
  %74 = vmatpush1.msra.mxu0 %v26
  %75 = vmatprep.subr.mxu0 0.0
  %76 = vmatpush1.msra.mxu0 %v25
  %77 = vmatprep.subr.mxu0 0.0
  %78 = vmatpush1.msra.mxu0 %v24
  %79 = vmatprep.subr.mxu0 0.0
  %80 = vmatpush2.msra.mxu0 0.0
  %81 = vmatprep.subr.mxu0 0.0
  %82 = vmatpush2.msra.mxu0 0.0
  %83 = vmatprep.subr.mxu0 0.0
  %84 = vmatpush2.msra.mxu0 0.0
  %85 = vmatprep.subr.mxu0 0.0
  %86 = vmatpush2.msra.mxu0 0.0
  %87 = vmatprep.subr.mxu0 0.0
  %88 = vmatpush2.msra.mxu0 0.0
  %89 = vmatprep.subr.mxu0 0.0
  %90 = vmatpush2.msra.mxu0 0.0
  %91 = vmatprep.subr.mxu0 0.0
  %92 = vmatpush2.msra.mxu0 0.0
  %93 = vmatprep.subr.mxu0 0.0
  %94 = vmatpush2.msra.mxu0 0.0
  %95 = vmatprep.subr.mxu0 0.0
  %96 = vmatpush2.msra.mxu0 0.0
  %97 = vmatprep.subr.mxu0 0.0
  %98 = vmatpush2.msra.mxu0 0.0
  %99 = vmatprep.subr.mxu0 0.0
  %100 = vmatpush2.msra.mxu0 0.0
  %101 = vmatprep.subr.mxu0 0.0
  %102 = vmatpush2.msra.mxu0 0.0
  %103 = vmatprep.subr.mxu0 0.0
  %104 = vmatpush2.msra.mxu0 0.0
  %105 = vmatprep.subr.mxu0 0.0
  %106 = vmatpush2.msra.mxu0 0.0
  %107 = vmatprep.subr.mxu0 0.0
  %108 = vmatpush2.msra.mxu0 0.0
  %109 = vmatprep.subr.mxu0 0.0
  %110 = vmatpush2.msra.mxu0 0.0
  %111 = vmatprep.mubr.f32.mxu0 0.0
  %112 = vmatmul.mubr.f32.gmra.mxu0 %v23
  %v113 = vpop.f32.mrf.mxu0
  %v114 = vadd.f32 %v45, %v113
  %v115 = vpop.f32.mrf.mxu0
  %116 = vdwg.mxu0
  %v117 = vtanh.pop %v114
  %v118 = vld [vmem:[%s3] sm:$0xff]
  %v119 = vld [vmem:[%s3 + $0x8] sm:$0xff]
  %v120 = vld [vmem:[%s3 + $0x10] sm:$0xff]
  %v121 = vld [vmem:[%s3 + $0x18] sm:$0xff]
  %v122 = vld [vmem:[%s4] sm:$0x1]
  %v124 = vlaneseq
  %v125 = vshrl.u32 %v124, 7
  %v126 = vsub.s32 0, %v125
  %v127 = vrot.slane %v122, %v126
  %vm129 = vcmask 261120
  %v131 = vsel %vm129, %v117, 0
  %133 = vmatprep.subr.mxu0 0.0
  %134 = vmatpush1.msra.mxu0 0.0
  %135 = vmatprep.subr.mxu0 0.0
  %136 = vmatpush1.msra.mxu0 0.0
  %137 = vmatprep.subr.mxu0 0.0
  %138 = vmatpush1.msra.mxu0 0.0
  %139 = vmatprep.subr.mxu0 0.0
  %140 = vmatpush1.msra.mxu0 0.0
  %141 = vmatprep.subr.mxu0 0.0
  %142 = vmatpush1.msra.mxu0 0.0
  %143 = vmatprep.subr.mxu0 0.0
  %144 = vmatpush1.msra.mxu0 0.0
  %145 = vmatprep.subr.mxu0 0.0
  %146 = vmatpush1.msra.mxu0 0.0
  %147 = vmatprep.subr.mxu0 0.0
  %148 = vmatpush1.msra.mxu0 0.0
  %149 = vmatprep.subr.mxu0 0.0
  %150 = vmatpush1.msra.mxu0 0.0
  %151 = vmatprep.subr.mxu0 0.0
  %152 = vmatpush1.msra.mxu0 0.0
  %153 = vmatprep.subr.mxu0 0.0
  %154 = vmatpush1.msra.mxu0 0.0
  %155 = vmatprep.subr.mxu0 0.0
  %156 = vmatpush1.msra.mxu0 0.0
  %157 = vmatprep.subr.mxu0 0.0
  %158 = vmatpush1.msra.mxu0 %v121
  %159 = vmatprep.subr.mxu0 0.0
  %160 = vmatpush1.msra.mxu0 %v120
  %161 = vmatprep.subr.mxu0 0.0
  %162 = vmatpush1.msra.mxu0 %v119
  %163 = vmatprep.subr.mxu0 0.0
  %164 = vmatpush1.msra.mxu0 %v118
  %165 = vmatprep.subr.mxu0 0.0
  %166 = vmatpush2.msra.mxu0 0.0
  %167 = vmatprep.subr.mxu0 0.0
  %168 = vmatpush2.msra.mxu0 0.0
  %169 = vmatprep.subr.mxu0 0.0
  %170 = vmatpush2.msra.mxu0 0.0
  %171 = vmatprep.subr.mxu0 0.0
  %172 = vmatpush2.msra.mxu0 0.0
  %173 = vmatprep.subr.mxu0 0.0
  %174 = vmatpush2.msra.mxu0 0.0
  %175 = vmatprep.subr.mxu0 0.0
  %176 = vmatpush2.msra.mxu0 0.0
  %177 = vmatprep.subr.mxu0 0.0
  %178 = vmatpush2.msra.mxu0 0.0
  %179 = vmatprep.subr.mxu0 0.0
  %180 = vmatpush2.msra.mxu0 0.0
  %181 = vmatprep.subr.mxu0 0.0
  %182 = vmatpush2.msra.mxu0 0.0
  %183 = vmatprep.subr.mxu0 0.0
  %184 = vmatpush2.msra.mxu0 0.0
  %185 = vmatprep.subr.mxu0 0.0
  %186 = vmatpush2.msra.mxu0 0.0
  %187 = vmatprep.subr.mxu0 0.0
  %188 = vmatpush2.msra.mxu0 0.0
  %189 = vmatprep.subr.mxu0 0.0
  %190 = vmatpush2.msra.mxu0 0.0
  %191 = vmatprep.subr.mxu0 0.0
  %192 = vmatpush2.msra.mxu0 0.0
  %193 = vmatprep.subr.mxu0 0.0
  %194 = vmatpush2.msra.mxu0 0.0
  %195 = vmatprep.subr.mxu0 0.0
  %196 = vmatpush2.msra.mxu0 0.0
  %197 = vmatprep.mubr.f32.mxu0 0.0
  %198 = vmatmul.mubr.f32.gmra.mxu0 %v131
  %v199 = vpop.f32.mrf.mxu0
  %v200 = vadd.f32 %v127, %v199
  %v201 = vpop.f32.mrf.mxu0
  %202 = vdwg.mxu0
  %v203 = vld [vmem:[%s5] sm:$0xff]
  %v204 = vld [vmem:[%s5 + $0x8] sm:$0xff]
  %v205 = vld [vmem:[%s5 + $0x10] sm:$0xff]
  %v206 = vld [vmem:[%s5 + $0x18] sm:$0xff]
  %v207 = vld [vmem:[%s5 + $0x20] sm:$0xff]
  %v208 = vld [vmem:[%s5 + $0x28] sm:$0xff]
  %v209 = vld [vmem:[%s5 + $0x30] sm:$0xff]
  %v210 = vld [vmem:[%s5 + $0x38] sm:$0xff]
  %v211 = vld [vmem:[%s5 + $0x40] sm:$0xff]
  %v212 = vld [vmem:[%s5 + $0x48] sm:$0xff]
  %v213 = vld [vmem:[%s5 + $0x50] sm:$0xff]
  %v214 = vld [vmem:[%s5 + $0x58] sm:$0xff]
  %v215 = vld [vmem:[%s5 + $0x60] sm:$0xff]
  %v216 = vld [vmem:[%s5 + $0x68] sm:$0xff]
  %v217 = vld [vmem:[%s5 + $0x70] sm:$0xff]
  %v218 = vld [vmem:[%s5 + $0x78] sm:$0xff]
  %vm219 = vcmask 523264
  %v221 = vsel %vm219, %v200, 0
  %223 = vmatprep.subr.mxu0 0.0
  %224 = vmatpush1.msra.mxu0 0.0
  %225 = vmatprep.subr.mxu0 0.0
  %226 = vmatpush1.msra.mxu0 0.0
  %227 = vmatprep.subr.mxu0 0.0
  %228 = vmatpush1.msra.mxu0 0.0
  %229 = vmatprep.subr.mxu0 0.0
  %230 = vmatpush1.msra.mxu0 0.0
  %231 = vmatprep.subr.mxu0 0.0
  %232 = vmatpush1.msra.mxu0 0.0
  %233 = vmatprep.subr.mxu0 0.0
  %234 = vmatpush1.msra.mxu0 0.0
  %235 = vmatprep.subr.mxu0 0.0
  %236 = vmatpush1.msra.mxu0 0.0
  %237 = vmatprep.subr.mxu0 0.0
  %238 = vmatpush1.msra.mxu0 0.0
  %239 = vmatprep.subr.mxu0 %v218
  %240 = vmatpush1.msra.mxu0 %v217
  %241 = vmatprep.subr.mxu0 %v216
  %242 = vmatpush1.msra.mxu0 %v215
  %243 = vmatprep.subr.mxu0 %v214
  %244 = vmatpush1.msra.mxu0 %v213
  %245 = vmatprep.subr.mxu0 %v212
  %246 = vmatpush1.msra.mxu0 %v211
  %247 = vmatprep.subr.mxu0 %v210
  %248 = vmatpush1.msra.mxu0 %v209
  %249 = vmatprep.subr.mxu0 %v208
  %250 = vmatpush1.msra.mxu0 %v207
  %251 = vmatprep.subr.mxu0 %v206
  %252 = vmatpush1.msra.mxu0 %v205
  %253 = vmatprep.subr.mxu0 %v204
  %254 = vmatpush1.msra.mxu0 %v203
  %255 = vmatprep.subr.mxu0 0.0
  %256 = vmatpush2.msra.mxu0 0.0
  %257 = vmatprep.subr.mxu0 0.0
  %258 = vmatpush2.msra.mxu0 0.0
  %259 = vmatprep.subr.mxu0 0.0
  %260 = vmatpush2.msra.mxu0 0.0
  %261 = vmatprep.subr.mxu0 0.0
  %262 = vmatpush2.msra.mxu0 0.0
  %263 = vmatprep.subr.mxu0 0.0
  %264 = vmatpush2.msra.mxu0 0.0
  %265 = vmatprep.subr.mxu0 0.0
  %266 = vmatpush2.msra.mxu0 0.0
  %267 = vmatprep.subr.mxu0 0.0
  %268 = vmatpush2.msra.mxu0 0.0
  %269 = vmatprep.subr.mxu0 0.0
  %270 = vmatpush2.msra.mxu0 0.0
  %271 = vmatprep.subr.mxu0 0.0
  %272 = vmatpush2.msra.mxu0 0.0
  %273 = vmatprep.subr.mxu0 0.0
  %274 = vmatpush2.msra.mxu0 0.0
  %275 = vmatprep.subr.mxu0 0.0
  %276 = vmatpush2.msra.mxu0 0.0
  %277 = vmatprep.subr.mxu0 0.0
  %278 = vmatpush2.msra.mxu0 0.0
  %279 = vmatprep.subr.mxu0 0.0
  %280 = vmatpush2.msra.mxu0 0.0
  %281 = vmatprep.subr.mxu0 0.0
  %282 = vmatpush2.msra.mxu0 0.0
  %283 = vmatprep.subr.mxu0 0.0
  %284 = vmatpush2.msra.mxu0 0.0
  %285 = vmatprep.subr.mxu0 0.0
  %286 = vmatpush2.msra.mxu0 0.0
  %287 = vmatprep.mubr.f32.mxu0 0.0
  %288 = vmatmul.mubr.f32.gmra.mxu0 %v221
  %v289 = vpop.f32.mrf.mxu0
  %v290 = vadd.f32 0.0, %v289
  %v291 = vpop.f32.mrf.mxu0
  %v292 = vadd.f32 0.0, %v291
  %293 = vdwg.mxu0
  %vm294 = vcmask 781312
  %295 = vst.msk [vmem:[%s6] sm:$0xf] %vm294, %v290
  %298 = vrot.lane.b32.xlu0 %v290, 32
  %v299 = vpop.permute.xlu0 %298
  %300 = vrot.lane.b32.xlu0 %v292, 32
  %v301 = vpop.permute.xlu0 %300
  %v302 = vsel %vm129, %v299, %v301
  %s304 = scalar_lea.vmem %s6, 4
  %305 = vst.msk [vmem:[%s304] sm:$0xf] %vm294, %v302
  // Predicated region
  $region26: #{user_item_encoder_forward.7} parent=0 // pred_check
    _
  $region27: #{user_item_encoder_forward.7} parent=0 // pred_check_branch
    %307 = sbr.rel (0) target = $region29
  $region28: #{user_item_encoder_forward.7} parent=0 // pred_region
    _
  $region29: #{user_item_encoder_forward.7} parent=0 // pred_fallthru
    _
  // Predicated region
  $region30: #{user_item_encoder_forward.7} parent=0 // pred_check
    _
  $region31: #{user_item_encoder_forward.7} parent=0 // pred_check_branch
    %309 = sbr.rel (0) target = $region33
  $region32: #{user_item_encoder_forward.7} parent=0 // pred_region
    _
  $region33: #{user_item_encoder_forward.7} parent=0 // pred_fallthru
    _

// kernel: user_item_encoder_forward.5
$region0: #{user_item_encoder_forward.5}
  #allocation0 [shape = 'u32[]', space=smem, size = 0x4, offset = 0x4, fixed_abs, tag = 'smem constant byte address 0x4 - core index']
  #allocation1 [shape = 'u32[144,128]{1,0:T(1,128)}', space=vmem, size = 0x12000, scoped, tag = 'internal scratch']
  %s0 = inlined_call_operand.vmem [shape: f32[4,8,32], index: 0, kind: input, shape index: {}]
  %s1 = inlined_call_operand.vmem [shape: f32[6,32,96], index: 1, kind: input, shape index: {}]
  %s2 = inlined_call_operand.vmem [shape: f32[6,1,96], index: 2, kind: input, shape index: {}]
  %s3 = inlined_call_operand.vmem [shape: f32[6,4,8,96], index: 3, kind: output, shape index: {}]
  %s4 = sld [smem:[#allocation0]]
  $region45: #{user_item_encoder_forward.5} parent=0
    _
  %s6 = ssub.s32 1, %s4
  %s7 = scalar_select 0, %s6, %s4
  loop: start=0, step=1, limit=8
  $region2: #{user_item_encoder_forward.5} parent=0 // loop_pre_header
    _
  $region3: #{user_item_encoder_forward.5} parent=0 // loop_header
    %s9 = sphi 0, %s13
    %p10 = scmp.ge.s32.totalorder %s9, 8
    %s16 = sphi 0, %s28
    %s17 = sphi 0, %s24
    %s18 = sphi 0, %s16
    %s19 = sphi 0, %s17
    %s20 = sphi 0, %s18
    %s21 = sphi 0, %s19
    %s31 = sphi 0, %s33
    %s34 = sphi 0, %s31
    %s35 = sphi 0, %s34
    %s51 = sphi 0, %s35
    %s57 = sphi 0, %s59
    %s60 = sphi 0, %s57
    %s61 = sphi 0, %s60
    %s77 = sphi 0, %s61
    %s83 = sphi 0, %s85
    %s86 = sphi 0, %s83
    %s87 = sphi 0, %s86
    %s103 = sphi 0, %s87
    %s111 = sphi 0, %s113
    %s114 = sphi 0, %s111
    %s115 = sphi 0, %s114
    %s131 = sphi 0, %s115
  $region4: #{user_item_encoder_forward.5} parent=0 // loop_header_branch
    %12 = sbr.rel (%p10) target = $region8
  $region5: #{user_item_encoder_forward.5} parent=0 // loop_body
    %s14 = ssub.s32 %s9, 1
    %s15 = ssub.s32 %s9, 2
    %s22 = sadd.s32 1, %s17
    %p23 = scmp.ge.s32.totalorder %s22, 1
    %s24 = scalar_select %p23, 0, %s22
    %s25 = sadd.s32 1, %s16
    %s26 = scalar_select %p23, %s25, %s16
    %p27 = scmp.ge.s32.totalorder %s26, 6
    %s28 = scalar_select %p27, 0, %s26
    %s29 = ssub.s32 %s17, %s24
    %p30 = scmp.eq.s32.totalorder %s29, 0
    %s32 = sadd.s32 %s31, 1
    %s33 = scalar_select %p30, %s31, %s32
    %p36 = pneg %p30
    %p37 = scmp.eq.s32.totalorder %s9, 5
    %p38 = por %p36, %p37
    %p39 = scmp.ne.s32.totalorder %s31, %s34
    %p40 = scmp.eq.s32.totalorder %s9, 0
    %p41 = por %p39, %p40
    %p42 = scmp.ne.s32.totalorder %s31, %s34
    %p43 = scmp.eq.s32.totalorder %s14, 5
    %p44 = por %p42, %p43
    %p45 = scmp.ne.s32.totalorder %s34, %s35
    %p46 = scmp.eq.s32.totalorder %s14, 0
    %p47 = por %p45, %p46
    %p48 = scmp.ne.s32.totalorder %s34, %s35
    %p49 = scmp.eq.s32.totalorder %s15, 5
    %p50 = por %p48, %p49
    %p52 = scmp.ne.s32.totalorder %s35, %s51
    %p53 = scmp.eq.s32.totalorder %s15, 0
    %p54 = por %p52, %p53
    %s55 = ssub.s32 %s16, %s28
    %p56 = scmp.eq.s32.totalorder %s55, 0
    %s58 = sadd.s32 %s57, 1
    %s59 = scalar_select %p56, %s57, %s58
    %p62 = pneg %p56
    %p63 = scmp.eq.s32.totalorder %s9, 5
    %p64 = por %p62, %p63
    %p65 = scmp.ne.s32.totalorder %s57, %s60
    %p66 = scmp.eq.s32.totalorder %s9, 0
    %p67 = por %p65, %p66
    %p68 = scmp.ne.s32.totalorder %s57, %s60
    %p69 = scmp.eq.s32.totalorder %s14, 5
    %p70 = por %p68, %p69
    %p71 = scmp.ne.s32.totalorder %s60, %s61
    %p72 = scmp.eq.s32.totalorder %s14, 0
    %p73 = por %p71, %p72
    %p74 = scmp.ne.s32.totalorder %s60, %s61
    %p75 = scmp.eq.s32.totalorder %s15, 5
    %p76 = por %p74, %p75
    %p78 = scmp.ne.s32.totalorder %s61, %s77
    %p79 = scmp.eq.s32.totalorder %s15, 0
    %p80 = por %p78, %p79
    %s81 = ssub.s32 %s16, %s28
    %p82 = scmp.eq.s32.totalorder %s81, 0
    %s84 = sadd.s32 %s83, 1
    %s85 = scalar_select %p82, %s83, %s84
    %p88 = pneg %p82
    %p89 = scmp.eq.s32.totalorder %s9, 5
    %p90 = por %p88, %p89
    %p91 = scmp.ne.s32.totalorder %s83, %s86
    %p92 = scmp.eq.s32.totalorder %s9, 0
    %p93 = por %p91, %p92
    %p94 = scmp.ne.s32.totalorder %s83, %s86
    %p95 = scmp.eq.s32.totalorder %s14, 5
    %p96 = por %p94, %p95
    %p97 = scmp.ne.s32.totalorder %s86, %s87
    %p98 = scmp.eq.s32.totalorder %s14, 0
    %p99 = por %p97, %p98
    %p100 = scmp.ne.s32.totalorder %s86, %s87
    %p101 = scmp.eq.s32.totalorder %s15, 5
    %p102 = por %p100, %p101
    %p104 = scmp.ne.s32.totalorder %s87, %s103
    %p105 = scmp.eq.s32.totalorder %s15, 0
    %p106 = por %p104, %p105
    %s107 = ssub.s32 %s16, %s28
    %s108 = ssub.s32 %s17, %s24
    %s109 = sor.u32 %s107, %s108
    %p110 = scmp.eq.s32.totalorder %s109, 0
    %s112 = sadd.s32 %s111, 1
    %s113 = scalar_select %p110, %s111, %s112
    %p116 = pneg %p110
    %p117 = scmp.eq.s32.totalorder %s9, 5
    %p118 = por %p116, %p117
    %p119 = scmp.ne.s32.totalorder %s111, %s114
    %p120 = scmp.eq.s32.totalorder %s9, 0
    %p121 = por %p119, %p120
    %p122 = scmp.ne.s32.totalorder %s111, %s114
    %p123 = scmp.eq.s32.totalorder %s14, 5
    %p124 = por %p122, %p123
    %p125 = scmp.ne.s32.totalorder %s114, %s115
    %p126 = scmp.eq.s32.totalorder %s14, 0
    %p127 = por %p125, %p126
    %p128 = scmp.ne.s32.totalorder %s114, %s115
    %p129 = scmp.eq.s32.totalorder %s15, 5
    %p130 = por %p128, %p129
    %p132 = scmp.ne.s32.totalorder %s115, %s131
    %p133 = scmp.eq.s32.totalorder %s15, 0
    %p134 = por %p132, %p133
    %p135 = scmp.le.s32.totalorder 1, %s9
    %p136 = scmp.lt.s32.totalorder %s9, 7
    %p137 = pnand %p135, %p136
    %p138 = pneg %p137
    // Predicated region
    $region9: #{user_item_encoder_forward.5} parent=5 // pred_check
      _
    $region10: #{user_item_encoder_forward.5} parent=5 // pred_check_branch
      %140 = sbr.rel (%p137) target = $region12
    $region11: #{user_item_encoder_forward.5} parent=5 // pred_region
      %s141 = ssub.s32 %s9, 1
      // Predicated region
      $region13: #{user_item_encoder_forward.5} parent=11 // pred_check
        %p142 = pneg %p47
      $region14: #{user_item_encoder_forward.5} parent=11 // pred_check_branch
        %144 = sbr.rel (%p142) target = $region16
      $region15: #{user_item_encoder_forward.5} parent=11 // pred_region
        %s145 = smul.u32 4, %s19
        %p146 = scmp.lt.s32.totalorder %s145, 3
        %s147 = scalar_select %p146, %s145, 3
        %s148 = smul.addr %s147, 8
        %s149 = scalar_lea.vmem %s0, %s148
        %s150 = smul.u32 4, %s19
      $region16: #{user_item_encoder_forward.5} parent=11 // pred_fallthru
        _
    $region12: #{user_item_encoder_forward.5} parent=5 // pred_fallthru
      _
    %p151 = scmp.lt.s32.totalorder %s9, 6
    // Predicated region
    $region17: #{user_item_encoder_forward.5} parent=5 // pred_check
      %p152 = pneg %p151
    $region18: #{user_item_encoder_forward.5} parent=5 // pred_check_branch
      %154 = sbr.rel (%p152) target = $region20
    $region19: #{user_item_encoder_forward.5} parent=5 // pred_region
      // Predicated region
      $region21: #{user_item_encoder_forward.5} parent=19 // pred_check
        %p155 = pneg %p67
      $region22: #{user_item_encoder_forward.5} parent=19 // pred_check_branch
        %157 = sbr.rel (%p155) target = $region24
      $region23: #{user_item_encoder_forward.5} parent=19 // pred_region
        %p158 = scmp.lt.s32.totalorder %s16, 5
        %s159 = scalar_select %p158, %s16, 5
        %s160 = smul.addr %s159, 4
        %s161 = smul.addr %s160, 8
        %s162 = scalar_lea.vmem %s1, %s161
      $region24: #{user_item_encoder_forward.5} parent=19 // pred_fallthru
        _
      // Predicated region
      $region25: #{user_item_encoder_forward.5} parent=19 // pred_check
        %p163 = pneg %p93
      $region26: #{user_item_encoder_forward.5} parent=19 // pred_check_branch
        %165 = sbr.rel (%p163) target = $region28
      $region27: #{user_item_encoder_forward.5} parent=19 // pred_region
        %p166 = scmp.lt.s32.totalorder %s16, 5
        %s167 = scalar_select %p166, %s16, 5
        %s168 = scalar_lea.vmem %s2, %s167
      $region28: #{user_item_encoder_forward.5} parent=19 // pred_fallthru
        _
    $region20: #{user_item_encoder_forward.5} parent=5 // pred_fallthru
      _
    %p169 = scmp.le.s32.totalorder 1, %s9
    %p170 = scmp.lt.s32.totalorder %s9, 7
    %p171 = pnand %p169, %p170
    %p172 = pneg %p171
    // Predicated region
    $region29: #{user_item_encoder_forward.5} parent=5 // pred_check
      _
    $region30: #{user_item_encoder_forward.5} parent=5 // pred_check_branch
      %174 = sbr.rel (%p171) target = $region32
    $region31: #{user_item_encoder_forward.5} parent=5 // pred_region
      %s175 = ssub.s32 %s9, 1
      %s176 = smul.u32 4, %s19
      %p177 = scmp.lt.s32.totalorder %s176, 3
      %s178 = scalar_select %p177, %s176, 3
      %s179 = smul.addr %s178, 8
      %s180 = scalar_lea.vmem %s0, %s179
      %p181 = pneg %p47
      %p182 = pneg %p44
      %p183 = scmp.lt.s32.totalorder %s18, 5
      %s184 = scalar_select %p183, %s18, 5
      %s185 = smul.addr %s184, 4
      %s186 = smul.addr %s185, 8
      %s187 = scalar_lea.vmem %s1, %s186
      %p188 = pneg %p73
      %p189 = pneg %p70
      %p190 = scmp.lt.s32.totalorder %s18, 5
      %s191 = scalar_select %p190, %s18, 5
      %s192 = scalar_lea.vmem %s2, %s191
      %p193 = pneg %p99
      %p194 = pneg %p96
      %p195 = pneg %p127
      %p196 = pneg %p124
      %s197 = smul.u32 4, %s19
      %p198 = scmp.lt.s32.totalorder %s18, 5
      %s199 = scalar_select %p198, %s18, 5
      %p200 = scmp.lt.s32.totalorder %s197, 3
      %s201 = scalar_select %p200, %s197, 3
      %s202 = smul.addr %s199, 4
      %s203 = sadd.s32 %s201, %s202
      %s204 = smul.addr %s203, 8
      %s205 = scalar_lea.vmem %s3, %s204
      %s206 = smul.u32 4, %s19
      %p207 = scmp.lt.s32.totalorder %s206, 3
      %s208 = scalar_select %p207, %s206, 3
      %s209 = smul.addr %s208, 8
      %s210 = scalar_lea.vmem %s0, %s209
      %s211 = smul.u32 4, %s19
      %p212 = scmp.lt.s32.totalorder %s18, 5
      %s213 = scalar_select %p212, %s18, 5
      %s214 = smul.addr %s213, 4
      %s215 = smul.addr %s214, 8
      %s216 = scalar_lea.vmem %s1, %s215
      %p217 = scmp.lt.s32.totalorder %s18, 5
      %s218 = scalar_select %p217, %s18, 5
      %s219 = scalar_lea.vmem %s2, %s218
      %s220 = smul.u32 4, %s19
      %p221 = scmp.lt.s32.totalorder %s18, 5
      %s222 = scalar_select %p221, %s18, 5
      %p223 = scmp.lt.s32.totalorder %s220, 3
      %s224 = scalar_select %p223, %s220, 3
      %s225 = smul.addr %s222, 4
      %s226 = sadd.s32 %s224, %s225
      %s227 = smul.addr %s226, 8
      %s228 = scalar_lea.vmem %s3, %s227
      %s229 = smul.u32 4, %s19
      %v230 = vld [vmem:[%s216] sm:$0xff]
      %v231 = vld [vmem:[%s216 + $0x8] sm:$0xff]
      %v232 = vld [vmem:[%s216 + $0x10] sm:$0xff]
      %v233 = vld [vmem:[%s216 + $0x18] sm:$0xff]
      %v234 = vld [vmem:[%s219] sm:$0x1]
      %v235 = vld [vmem:[%s210] sm:$0xff]
      %v237 = vlaneseq
      %v238 = vshrl.u32 %v237, 7
      %v239 = vsub.s32 0, %v238
      %v240 = vrot.slane %v234, %v239
      %vm242 = vcmask 261120
      %v244 = vsel %vm242, %v235, 0
      %246 = vmatprep.subr.mxu0 0.0
      %247 = vmatpush1.msra.mxu0 0.0
      %248 = vmatprep.subr.mxu0 0.0
      %249 = vmatpush1.msra.mxu0 0.0
      %250 = vmatprep.subr.mxu0 0.0
      %251 = vmatpush1.msra.mxu0 0.0
      %252 = vmatprep.subr.mxu0 0.0
      %253 = vmatpush1.msra.mxu0 0.0
      %254 = vmatprep.subr.mxu0 0.0
      %255 = vmatpush1.msra.mxu0 0.0
      %256 = vmatprep.subr.mxu0 0.0
      %257 = vmatpush1.msra.mxu0 0.0
      %258 = vmatprep.subr.mxu0 0.0
      %259 = vmatpush1.msra.mxu0 0.0
      %260 = vmatprep.subr.mxu0 0.0
      %261 = vmatpush1.msra.mxu0 0.0
      %262 = vmatprep.subr.mxu0 0.0
      %263 = vmatpush1.msra.mxu0 0.0
      %264 = vmatprep.subr.mxu0 0.0
      %265 = vmatpush1.msra.mxu0 0.0
      %266 = vmatprep.subr.mxu0 0.0
      %267 = vmatpush1.msra.mxu0 0.0
      %268 = vmatprep.subr.mxu0 0.0
      %269 = vmatpush1.msra.mxu0 0.0
      %270 = vmatprep.subr.mxu0 0.0
      %271 = vmatpush1.msra.mxu0 %v233
      %272 = vmatprep.subr.mxu0 0.0
      %273 = vmatpush1.msra.mxu0 %v232
      %274 = vmatprep.subr.mxu0 0.0
      %275 = vmatpush1.msra.mxu0 %v231
      %276 = vmatprep.subr.mxu0 0.0
      %277 = vmatpush1.msra.mxu0 %v230
      %278 = vmatprep.subr.mxu0 0.0
      %279 = vmatpush2.msra.mxu0 0.0
      %280 = vmatprep.subr.mxu0 0.0
      %281 = vmatpush2.msra.mxu0 0.0
      %282 = vmatprep.subr.mxu0 0.0
      %283 = vmatpush2.msra.mxu0 0.0
      %284 = vmatprep.subr.mxu0 0.0
      %285 = vmatpush2.msra.mxu0 0.0
      %286 = vmatprep.subr.mxu0 0.0
      %287 = vmatpush2.msra.mxu0 0.0
      %288 = vmatprep.subr.mxu0 0.0
      %289 = vmatpush2.msra.mxu0 0.0
      %290 = vmatprep.subr.mxu0 0.0
      %291 = vmatpush2.msra.mxu0 0.0
      %292 = vmatprep.subr.mxu0 0.0
      %293 = vmatpush2.msra.mxu0 0.0
      %294 = vmatprep.subr.mxu0 0.0
      %295 = vmatpush2.msra.mxu0 0.0
      %296 = vmatprep.subr.mxu0 0.0
      %297 = vmatpush2.msra.mxu0 0.0
      %298 = vmatprep.subr.mxu0 0.0
      %299 = vmatpush2.msra.mxu0 0.0
      %300 = vmatprep.subr.mxu0 0.0
      %301 = vmatpush2.msra.mxu0 0.0
      %302 = vmatprep.subr.mxu0 0.0
      %303 = vmatpush2.msra.mxu0 0.0
      %304 = vmatprep.subr.mxu0 0.0
      %305 = vmatpush2.msra.mxu0 0.0
      %306 = vmatprep.subr.mxu0 0.0
      %307 = vmatpush2.msra.mxu0 0.0
      %308 = vmatprep.subr.mxu0 0.0
      %309 = vmatpush2.msra.mxu0 0.0
      %310 = vmatprep.mubr.f32.mxu0 0.0
      %311 = vmatmul.mubr.f32.gmra.mxu0 %v244
      %v312 = vpop.f32.mrf.mxu0
      %v313 = vadd.f32 %v240, %v312
      %v314 = vpop.f32.mrf.mxu0
      %315 = vdwg.mxu0
      %vm316 = vcmask 785408
      %317 = vst.msk [vmem:[%s228] sm:$0xff] %vm316, %v313
      %s318 = scalar_lea.vmem %s210, 8
      %v319 = vld [vmem:[%s318] sm:$0xff]
      %v321 = vsel %vm242, %v319, 0
      %323 = vmatprep.subr.mxu0 0.0
      %324 = vmatpush1.msra.mxu0 0.0
      %325 = vmatprep.subr.mxu0 0.0
      %326 = vmatpush1.msra.mxu0 0.0
      %327 = vmatprep.subr.mxu0 0.0
      %328 = vmatpush1.msra.mxu0 0.0
      %329 = vmatprep.subr.mxu0 0.0
      %330 = vmatpush1.msra.mxu0 0.0
      %331 = vmatprep.subr.mxu0 0.0
      %332 = vmatpush1.msra.mxu0 0.0
      %333 = vmatprep.subr.mxu0 0.0
      %334 = vmatpush1.msra.mxu0 0.0
      %335 = vmatprep.subr.mxu0 0.0
      %336 = vmatpush1.msra.mxu0 0.0
      %337 = vmatprep.subr.mxu0 0.0
      %338 = vmatpush1.msra.mxu0 0.0
      %339 = vmatprep.subr.mxu0 0.0
      %340 = vmatpush1.msra.mxu0 0.0
      %341 = vmatprep.subr.mxu0 0.0
      %342 = vmatpush1.msra.mxu0 0.0
      %343 = vmatprep.subr.mxu0 0.0
      %344 = vmatpush1.msra.mxu0 0.0
      %345 = vmatprep.subr.mxu0 0.0
      %346 = vmatpush1.msra.mxu0 0.0
      %347 = vmatprep.subr.mxu0 0.0
      %348 = vmatpush1.msra.mxu0 %v233
      %349 = vmatprep.subr.mxu0 0.0
      %350 = vmatpush1.msra.mxu0 %v232
      %351 = vmatprep.subr.mxu0 0.0
      %352 = vmatpush1.msra.mxu0 %v231
      %353 = vmatprep.subr.mxu0 0.0
      %354 = vmatpush1.msra.mxu0 %v230
      %355 = vmatprep.subr.mxu0 0.0
      %356 = vmatpush2.msra.mxu0 0.0
      %357 = vmatprep.subr.mxu0 0.0
      %358 = vmatpush2.msra.mxu0 0.0
      %359 = vmatprep.subr.mxu0 0.0
      %360 = vmatpush2.msra.mxu0 0.0
      %361 = vmatprep.subr.mxu0 0.0
      %362 = vmatpush2.msra.mxu0 0.0
      %363 = vmatprep.subr.mxu0 0.0
      %364 = vmatpush2.msra.mxu0 0.0
      %365 = vmatprep.subr.mxu0 0.0
      %366 = vmatpush2.msra.mxu0 0.0
      %367 = vmatprep.subr.mxu0 0.0
      %368 = vmatpush2.msra.mxu0 0.0
      %369 = vmatprep.subr.mxu0 0.0
      %370 = vmatpush2.msra.mxu0 0.0
      %371 = vmatprep.subr.mxu0 0.0
      %372 = vmatpush2.msra.mxu0 0.0
      %373 = vmatprep.subr.mxu0 0.0
      %374 = vmatpush2.msra.mxu0 0.0
      %375 = vmatprep.subr.mxu0 0.0
      %376 = vmatpush2.msra.mxu0 0.0
      %377 = vmatprep.subr.mxu0 0.0
      %378 = vmatpush2.msra.mxu0 0.0
      %379 = vmatprep.subr.mxu0 0.0
      %380 = vmatpush2.msra.mxu0 0.0
      %381 = vmatprep.subr.mxu0 0.0
      %382 = vmatpush2.msra.mxu0 0.0
      %383 = vmatprep.subr.mxu0 0.0
      %384 = vmatpush2.msra.mxu0 0.0
      %385 = vmatprep.subr.mxu0 0.0
      %386 = vmatpush2.msra.mxu0 0.0
      %387 = vmatprep.mubr.f32.mxu0 0.0
      %388 = vmatmul.mubr.f32.gmra.mxu0 %v321
      %v389 = vpop.f32.mrf.mxu0
      %v390 = vadd.f32 %v240, %v389
      %v391 = vpop.f32.mrf.mxu0
      %392 = vdwg.mxu0
      %s393 = scalar_lea.vmem %s228, 8
      %394 = vst.msk [vmem:[%s393] sm:$0xff] %vm316, %v390
      %s395 = scalar_lea.vmem %s210, 16
      %v396 = vld [vmem:[%s395] sm:$0xff]
      %v398 = vsel %vm242, %v396, 0
      %400 = vmatprep.subr.mxu0 0.0
      %401 = vmatpush1.msra.mxu0 0.0
      %402 = vmatprep.subr.mxu0 0.0
      %403 = vmatpush1.msra.mxu0 0.0
      %404 = vmatprep.subr.mxu0 0.0
      %405 = vmatpush1.msra.mxu0 0.0
      %406 = vmatprep.subr.mxu0 0.0
      %407 = vmatpush1.msra.mxu0 0.0
      %408 = vmatprep.subr.mxu0 0.0
      %409 = vmatpush1.msra.mxu0 0.0
      %410 = vmatprep.subr.mxu0 0.0
      %411 = vmatpush1.msra.mxu0 0.0
      %412 = vmatprep.subr.mxu0 0.0
      %413 = vmatpush1.msra.mxu0 0.0
      %414 = vmatprep.subr.mxu0 0.0
      %415 = vmatpush1.msra.mxu0 0.0
      %416 = vmatprep.subr.mxu0 0.0
      %417 = vmatpush1.msra.mxu0 0.0
      %418 = vmatprep.subr.mxu0 0.0
      %419 = vmatpush1.msra.mxu0 0.0
      %420 = vmatprep.subr.mxu0 0.0
      %421 = vmatpush1.msra.mxu0 0.0
      %422 = vmatprep.subr.mxu0 0.0
      %423 = vmatpush1.msra.mxu0 0.0
      %424 = vmatprep.subr.mxu0 0.0
      %425 = vmatpush1.msra.mxu0 %v233
      %426 = vmatprep.subr.mxu0 0.0
      %427 = vmatpush1.msra.mxu0 %v232
      %428 = vmatprep.subr.mxu0 0.0
      %429 = vmatpush1.msra.mxu0 %v231
      %430 = vmatprep.subr.mxu0 0.0
      %431 = vmatpush1.msra.mxu0 %v230
      %432 = vmatprep.subr.mxu0 0.0
      %433 = vmatpush2.msra.mxu0 0.0
      %434 = vmatprep.subr.mxu0 0.0
      %435 = vmatpush2.msra.mxu0 0.0
      %436 = vmatprep.subr.mxu0 0.0
      %437 = vmatpush2.msra.mxu0 0.0
      %438 = vmatprep.subr.mxu0 0.0
      %439 = vmatpush2.msra.mxu0 0.0
      %440 = vmatprep.subr.mxu0 0.0
      %441 = vmatpush2.msra.mxu0 0.0
      %442 = vmatprep.subr.mxu0 0.0
      %443 = vmatpush2.msra.mxu0 0.0
      %444 = vmatprep.subr.mxu0 0.0
      %445 = vmatpush2.msra.mxu0 0.0
      %446 = vmatprep.subr.mxu0 0.0
      %447 = vmatpush2.msra.mxu0 0.0
      %448 = vmatprep.subr.mxu0 0.0
      %449 = vmatpush2.msra.mxu0 0.0
      %450 = vmatprep.subr.mxu0 0.0
      %451 = vmatpush2.msra.mxu0 0.0
      %452 = vmatprep.subr.mxu0 0.0
      %453 = vmatpush2.msra.mxu0 0.0
      %454 = vmatprep.subr.mxu0 0.0
      %455 = vmatpush2.msra.mxu0 0.0
      %456 = vmatprep.subr.mxu0 0.0
      %457 = vmatpush2.msra.mxu0 0.0
      %458 = vmatprep.subr.mxu0 0.0
      %459 = vmatpush2.msra.mxu0 0.0
      %460 = vmatprep.subr.mxu0 0.0
      %461 = vmatpush2.msra.mxu0 0.0
      %462 = vmatprep.subr.mxu0 0.0
      %463 = vmatpush2.msra.mxu0 0.0
      %464 = vmatprep.mubr.f32.mxu0 0.0
      %465 = vmatmul.mubr.f32.gmra.mxu0 %v398
      %v466 = vpop.f32.mrf.mxu0
      %v467 = vadd.f32 %v240, %v466
      %v468 = vpop.f32.mrf.mxu0
      %469 = vdwg.mxu0
      %s470 = scalar_lea.vmem %s228, 16
      %471 = vst.msk [vmem:[%s470] sm:$0xff] %vm316, %v467
      %s472 = scalar_lea.vmem %s210, 24
      %v473 = vld [vmem:[%s472] sm:$0xff]
      %v475 = vsel %vm242, %v473, 0
      %477 = vmatprep.subr.mxu0 0.0
      %478 = vmatpush1.msra.mxu0 0.0
      %479 = vmatprep.subr.mxu0 0.0
      %480 = vmatpush1.msra.mxu0 0.0
      %481 = vmatprep.subr.mxu0 0.0
      %482 = vmatpush1.msra.mxu0 0.0
      %483 = vmatprep.subr.mxu0 0.0
      %484 = vmatpush1.msra.mxu0 0.0
      %485 = vmatprep.subr.mxu0 0.0
      %486 = vmatpush1.msra.mxu0 0.0
      %487 = vmatprep.subr.mxu0 0.0
      %488 = vmatpush1.msra.mxu0 0.0
      %489 = vmatprep.subr.mxu0 0.0
      %490 = vmatpush1.msra.mxu0 0.0
      %491 = vmatprep.subr.mxu0 0.0
      %492 = vmatpush1.msra.mxu0 0.0
      %493 = vmatprep.subr.mxu0 0.0
      %494 = vmatpush1.msra.mxu0 0.0
      %495 = vmatprep.subr.mxu0 0.0
      %496 = vmatpush1.msra.mxu0 0.0
      %497 = vmatprep.subr.mxu0 0.0
      %498 = vmatpush1.msra.mxu0 0.0
      %499 = vmatprep.subr.mxu0 0.0
      %500 = vmatpush1.msra.mxu0 0.0
      %501 = vmatprep.subr.mxu0 0.0
      %502 = vmatpush1.msra.mxu0 %v233
      %503 = vmatprep.subr.mxu0 0.0
      %504 = vmatpush1.msra.mxu0 %v232
      %505 = vmatprep.subr.mxu0 0.0
      %506 = vmatpush1.msra.mxu0 %v231
      %507 = vmatprep.subr.mxu0 0.0
      %508 = vmatpush1.msra.mxu0 %v230
      %509 = vmatprep.subr.mxu0 0.0
      %510 = vmatpush2.msra.mxu0 0.0
      %511 = vmatprep.subr.mxu0 0.0
      %512 = vmatpush2.msra.mxu0 0.0
      %513 = vmatprep.subr.mxu0 0.0
      %514 = vmatpush2.msra.mxu0 0.0
      %515 = vmatprep.subr.mxu0 0.0
      %516 = vmatpush2.msra.mxu0 0.0
      %517 = vmatprep.subr.mxu0 0.0
      %518 = vmatpush2.msra.mxu0 0.0
      %519 = vmatprep.subr.mxu0 0.0
      %520 = vmatpush2.msra.mxu0 0.0
      %521 = vmatprep.subr.mxu0 0.0
      %522 = vmatpush2.msra.mxu0 0.0
      %523 = vmatprep.subr.mxu0 0.0
      %524 = vmatpush2.msra.mxu0 0.0
      %525 = vmatprep.subr.mxu0 0.0
      %526 = vmatpush2.msra.mxu0 0.0
      %527 = vmatprep.subr.mxu0 0.0
      %528 = vmatpush2.msra.mxu0 0.0
      %529 = vmatprep.subr.mxu0 0.0
      %530 = vmatpush2.msra.mxu0 0.0
      %531 = vmatprep.subr.mxu0 0.0
      %532 = vmatpush2.msra.mxu0 0.0
      %533 = vmatprep.subr.mxu0 0.0
      %534 = vmatpush2.msra.mxu0 0.0
      %535 = vmatprep.subr.mxu0 0.0
      %536 = vmatpush2.msra.mxu0 0.0
      %537 = vmatprep.subr.mxu0 0.0
      %538 = vmatpush2.msra.mxu0 0.0
      %539 = vmatprep.subr.mxu0 0.0
      %540 = vmatpush2.msra.mxu0 0.0
      %541 = vmatprep.mubr.f32.mxu0 0.0
      %542 = vmatmul.mubr.f32.gmra.mxu0 %v475
      %v543 = vpop.f32.mrf.mxu0
      %v544 = vadd.f32 %v240, %v543
      %v545 = vpop.f32.mrf.mxu0
      %546 = vdwg.mxu0
      %s547 = scalar_lea.vmem %s228, 24
      %548 = vst.msk [vmem:[%s547] sm:$0xff] %vm316, %v544
      %s549 = smul.u32 4, %s19
      %p550 = scmp.lt.s32.totalorder %s18, 5
      %s551 = scalar_select %p550, %s18, 5
      %p552 = scmp.lt.s32.totalorder %s549, 3
      %s553 = scalar_select %p552, %s549, 3
      %s554 = smul.addr %s551, 4
      %s555 = sadd.s32 %s553, %s554
      %s556 = smul.addr %s555, 8
      %s557 = scalar_lea.vmem %s3, %s556
      // Predicated region
      $region33: #{user_item_encoder_forward.5} parent=31 // pred_check
        %p558 = pneg %p124
      $region34: #{user_item_encoder_forward.5} parent=31 // pred_check_branch
        %560 = sbr.rel (%p558) target = $region36
      $region35: #{user_item_encoder_forward.5} parent=31 // pred_region
        %s561 = smul.u32 4, %s19
      $region36: #{user_item_encoder_forward.5} parent=31 // pred_fallthru
        _
    $region32: #{user_item_encoder_forward.5} parent=5 // pred_fallthru
      _
    %p562 = scmp.le.s32.totalorder 2, %s9
    // Predicated region
    $region37: #{user_item_encoder_forward.5} parent=5 // pred_check
      %p563 = pneg %p562
    $region38: #{user_item_encoder_forward.5} parent=5 // pred_check_branch
      %565 = sbr.rel (%p563) target = $region40
    $region39: #{user_item_encoder_forward.5} parent=5 // pred_region
      %s566 = ssub.s32 %s9, 2
      // Predicated region
      $region41: #{user_item_encoder_forward.5} parent=39 // pred_check
        %p567 = pneg %p130
      $region42: #{user_item_encoder_forward.5} parent=39 // pred_check_branch
        %569 = sbr.rel (%p567) target = $region44
      $region43: #{user_item_encoder_forward.5} parent=39 // pred_region
        %s570 = smul.u32 4, %s21
        %p571 = scmp.lt.s32.totalorder %s20, 5
        %s572 = scalar_select %p571, %s20, 5
        %p573 = scmp.lt.s32.totalorder %s570, 3
        %s574 = scalar_select %p573, %s570, 3
        %s575 = smul.addr %s572, 4
        %s576 = sadd.s32 %s574, %s575
        %s577 = smul.addr %s576, 8
        %s578 = scalar_lea.vmem %s3, %s577
      $region44: #{user_item_encoder_forward.5} parent=39 // pred_fallthru
        _
    $region40: #{user_item_encoder_forward.5} parent=5 // pred_fallthru
      _
  $region6: #{user_item_encoder_forward.5} parent=0 // loop_footer
    %s13 = sadd.s32 1, %s9
  $region7: #{user_item_encoder_forward.5} parent=0 // loop_footer_branch
    %8 = sbr.rel target = $region3
  $region8: #{user_item_encoder_forward.5} parent=0 // loop_exit
    _

// kernel: user_item_encoder_forward.8
$region0: #{user_item_encoder_forward.8}
  #allocation0 [shape = 'u32[]', space=smem, size = 0x4, offset = 0x4, fixed_abs, tag = 'smem constant byte address 0x4 - core index']
  #allocation1 [shape = 'u32[144,128]{1,0:T(1,128)}', space=vmem, size = 0x12000, scoped, tag = 'internal scratch']
  #allocation2 [shape = 'f32[2,8,32]{2,1,0:T(8,128)}', space=vmem, size = 0x2000, scoped, tag = 'scratch operand']
  %s0 = inlined_call_operand.vmem [shape: f32[6,4,8,96], index: 0, kind: input, shape index: {}]
  %s1 = inlined_call_operand.vmem [shape: f32[2,4,1,96], index: 1, kind: input, shape index: {}]
  %s2 = inlined_call_operand.vmem [shape: f32[2,32,96], index: 2, kind: input, shape index: {}]
  %s3 = inlined_call_operand.vmem [shape: f32[2,1,32], index: 3, kind: input, shape index: {}]
  %s4 = inlined_call_operand.vmem [shape: f32[2,4,8,32], index: 4, kind: output, shape index: {}]
  %s5 = sld [smem:[#allocation0]]
  $region30: #{user_item_encoder_forward.8} parent=0
    _
  %s7 = ssub.s32 1, %s5
  %s8 = scalar_select 0, %s7, %s5
  // Predicated region
  $region2: #{user_item_encoder_forward.8} parent=0 // pred_check
    _
  $region3: #{user_item_encoder_forward.8} parent=0 // pred_check_branch
    %10 = sbr.rel (0) target = $region5
  $region4: #{user_item_encoder_forward.8} parent=0 // pred_region
    %s11 = scalar_lea.vmem %s0, 128
  $region5: #{user_item_encoder_forward.8} parent=0 // pred_fallthru
    _
  // Predicated region
  $region6: #{user_item_encoder_forward.8} parent=0 // pred_check
    _
  $region7: #{user_item_encoder_forward.8} parent=0 // pred_check_branch
    %13 = sbr.rel (0) target = $region9
  $region8: #{user_item_encoder_forward.8} parent=0 // pred_region
    _
  $region9: #{user_item_encoder_forward.8} parent=0 // pred_fallthru
    _
  // Predicated region
  $region10: #{user_item_encoder_forward.8} parent=0 // pred_check
    _
  $region11: #{user_item_encoder_forward.8} parent=0 // pred_check_branch
    %15 = sbr.rel (0) target = $region13
  $region12: #{user_item_encoder_forward.8} parent=0 // pred_region
    _
  $region13: #{user_item_encoder_forward.8} parent=0 // pred_fallthru
    _
  // Predicated region
  $region14: #{user_item_encoder_forward.8} parent=0 // pred_check
    _
  $region15: #{user_item_encoder_forward.8} parent=0 // pred_check_branch
    %17 = sbr.rel (0) target = $region17
  $region16: #{user_item_encoder_forward.8} parent=0 // pred_region
    _
  $region17: #{user_item_encoder_forward.8} parent=0 // pred_fallthru
    _
  %s18 = scalar_lea.vmem %s0, 128
  %s19 = scalar_lea.vmem %s0, 128
  %p20 = scmp.eq.s32.totalorder 0, 0
  // Predicated region
  $region18: #{user_item_encoder_forward.8} parent=0 // pred_check
    %p21 = pneg %p20
  $region19: #{user_item_encoder_forward.8} parent=0 // pred_check_branch
    %23 = sbr.rel (%p21) target = $region21
  $region20: #{user_item_encoder_forward.8} parent=0 // pred_region
    %vm24 = vcmask 261120
    %25 = vst.msk [vmem:[#allocation2] sm:$0xff] %vm24, 0.0
    %26 = vst.msk [vmem:[#allocation2 + $0x8] sm:$0xff] %vm24, 0.0
  $region21: #{user_item_encoder_forward.8} parent=0 // pred_fallthru
    _
  %v27 = vld [vmem:[#allocation2] sm:$0xff]
  %v28 = vld [vmem:[%s2] sm:$0xff]
  %v29 = vld [vmem:[%s2 + $0x8] sm:$0xff]
  %v30 = vld [vmem:[%s2 + $0x10] sm:$0xff]
  %v31 = vld [vmem:[%s2 + $0x18] sm:$0xff]
  %v32 = vld [vmem:[%s3] sm:$0x1]
  %v33 = vld [vmem:[%s19] sm:$0xff]
  %v34 = vld [vmem:[%s1] sm:$0x1]
  %v36 = vlaneseq
  %v37 = vshrl.u32 %v36, 7
  %v38 = vsub.s32 0, %v37
  %v39 = vrot.slane %v34, %v38
  %v41 = vadd.f32 %v33, %v39
  %vm42 = vcmask 261120
  %v44 = vsel %vm42, %v27, 0
  %46 = vmatprep.subr.mxu0 0.0
  %47 = vmatpush1.msra.mxu0 0.0
  %48 = vmatprep.subr.mxu0 0.0
  %49 = vmatpush1.msra.mxu0 0.0
  %50 = vmatprep.subr.mxu0 0.0
  %51 = vmatpush1.msra.mxu0 0.0
  %52 = vmatprep.subr.mxu0 0.0
  %53 = vmatpush1.msra.mxu0 0.0
  %54 = vmatprep.subr.mxu0 0.0
  %55 = vmatpush1.msra.mxu0 0.0
  %56 = vmatprep.subr.mxu0 0.0
  %57 = vmatpush1.msra.mxu0 0.0
  %58 = vmatprep.subr.mxu0 0.0
  %59 = vmatpush1.msra.mxu0 0.0
  %60 = vmatprep.subr.mxu0 0.0
  %61 = vmatpush1.msra.mxu0 0.0
  %62 = vmatprep.subr.mxu0 0.0
  %63 = vmatpush1.msra.mxu0 0.0
  %64 = vmatprep.subr.mxu0 0.0
  %65 = vmatpush1.msra.mxu0 0.0
  %66 = vmatprep.subr.mxu0 0.0
  %67 = vmatpush1.msra.mxu0 0.0
  %68 = vmatprep.subr.mxu0 0.0
  %69 = vmatpush1.msra.mxu0 0.0
  %70 = vmatprep.subr.mxu0 0.0
  %71 = vmatpush1.msra.mxu0 %v31
  %72 = vmatprep.subr.mxu0 0.0
  %73 = vmatpush1.msra.mxu0 %v30
  %74 = vmatprep.subr.mxu0 0.0
  %75 = vmatpush1.msra.mxu0 %v29
  %76 = vmatprep.subr.mxu0 0.0
  %77 = vmatpush1.msra.mxu0 %v28
  %78 = vmatprep.subr.mxu0 0.0
  %79 = vmatpush2.msra.mxu0 0.0
  %80 = vmatprep.subr.mxu0 0.0
  %81 = vmatpush2.msra.mxu0 0.0
  %82 = vmatprep.subr.mxu0 0.0
  %83 = vmatpush2.msra.mxu0 0.0
  %84 = vmatprep.subr.mxu0 0.0
  %85 = vmatpush2.msra.mxu0 0.0
  %86 = vmatprep.subr.mxu0 0.0
  %87 = vmatpush2.msra.mxu0 0.0
  %88 = vmatprep.subr.mxu0 0.0
  %89 = vmatpush2.msra.mxu0 0.0
  %90 = vmatprep.subr.mxu0 0.0
  %91 = vmatpush2.msra.mxu0 0.0
  %92 = vmatprep.subr.mxu0 0.0
  %93 = vmatpush2.msra.mxu0 0.0
  %94 = vmatprep.subr.mxu0 0.0
  %95 = vmatpush2.msra.mxu0 0.0
  %96 = vmatprep.subr.mxu0 0.0
  %97 = vmatpush2.msra.mxu0 0.0
  %98 = vmatprep.subr.mxu0 0.0
  %99 = vmatpush2.msra.mxu0 0.0
  %100 = vmatprep.subr.mxu0 0.0
  %101 = vmatpush2.msra.mxu0 0.0
  %102 = vmatprep.subr.mxu0 0.0
  %103 = vmatpush2.msra.mxu0 0.0
  %104 = vmatprep.subr.mxu0 0.0
  %105 = vmatpush2.msra.mxu0 0.0
  %106 = vmatprep.subr.mxu0 0.0
  %107 = vmatpush2.msra.mxu0 0.0
  %108 = vmatprep.subr.mxu0 0.0
  %109 = vmatpush2.msra.mxu0 0.0
  %110 = vmatprep.mubr.f32.mxu0 0.0
  %111 = vmatmul.mubr.f32.gmra.mxu0 %v44
  %v112 = vpop.f32.mrf.mxu0
  %v113 = vadd.f32 0.0, %v112
  %v114 = vpop.f32.mrf.mxu0
  %115 = vdwg.mxu0
  %v116 = vadd.f32 %v41, %v113
  %v117 = vxor.u32 %v116, 2147483648
  %v118 = vmul.f32 %v117, 1.442695
  %v119 = vpow.pop %v118
  %v120 = vadd.f32 %v119, 1.0
  %v121 = vrcp.pop %v120
  %v122 = vmul.f32 1.0, %v121
  %v124 = vlaneseq
  %v125 = vshrl.u32 %v124, 7
  %v126 = vsub.s32 0, %v125
  %v127 = vrot.slane %v32, %v126
  %128 = vrot.lane.b32.xlu0 %v127, 64
  %v129 = vpop.permute.xlu0 %128
  %v131 = vadd.f32 %v113, %v129
  %133 = vrot.lane.b32.xlu0 %v131, 64
  %v134 = vpop.permute.xlu0 %133
  %v136 = vmul.f32 %v122, %v134
  %138 = vrot.lane.b32.xlu0 %v136, 64
  %v139 = vpop.permute.xlu0 %138
  %v141 = vadd.f32 %v41, %v139
  %v142 = vtanh.pop %v141
  %v143 = vsub.f32 1.0, %v122
  %145 = vrot.lane.b32.xlu0 %v142, 96
  %v146 = vpop.permute.xlu0 %145
  %v148 = vmul.f32 %v143, %v146
  %149 = vrot.lane.b32.xlu0 %v27, 32
  %v150 = vpop.permute.xlu0 %149
  %v152 = vmul.f32 %v122, %v150
  %v153 = vadd.f32 %v148, %v152
  %155 = vrot.lane.b32.xlu0 %v153, 96
  %v156 = vpop.permute.xlu0 %155
  %158 = vst.msk [vmem:[%s4] sm:$0xff] %vm42, %v156
  %s159 = scalar_lea.vmem %s19, 8
  %v160 = vld [vmem:[%s159] sm:$0xff]
  %s161 = scalar_lea.vmem %s1, 1
  %v162 = vld [vmem:[%s161] sm:$0x1]
  %v164 = vlaneseq
  %v165 = vshrl.u32 %v164, 7
  %v166 = vsub.s32 0, %v165
  %v167 = vrot.slane %v162, %v166
  %v169 = vadd.f32 %v160, %v167
  %v170 = vsel %vm42, %v156, 0
  %172 = vmatprep.subr.mxu0 0.0
  %173 = vmatpush1.msra.mxu0 0.0
  %174 = vmatprep.subr.mxu0 0.0
  %175 = vmatpush1.msra.mxu0 0.0
  %176 = vmatprep.subr.mxu0 0.0
  %177 = vmatpush1.msra.mxu0 0.0
  %178 = vmatprep.subr.mxu0 0.0
  %179 = vmatpush1.msra.mxu0 0.0
  %180 = vmatprep.subr.mxu0 0.0
  %181 = vmatpush1.msra.mxu0 0.0
  %182 = vmatprep.subr.mxu0 0.0
  %183 = vmatpush1.msra.mxu0 0.0
  %184 = vmatprep.subr.mxu0 0.0
  %185 = vmatpush1.msra.mxu0 0.0
  %186 = vmatprep.subr.mxu0 0.0
  %187 = vmatpush1.msra.mxu0 0.0
  %188 = vmatprep.subr.mxu0 0.0
  %189 = vmatpush1.msra.mxu0 0.0
  %190 = vmatprep.subr.mxu0 0.0
  %191 = vmatpush1.msra.mxu0 0.0
  %192 = vmatprep.subr.mxu0 0.0
  %193 = vmatpush1.msra.mxu0 0.0
  %194 = vmatprep.subr.mxu0 0.0
  %195 = vmatpush1.msra.mxu0 0.0
  %196 = vmatprep.subr.mxu0 0.0
  %197 = vmatpush1.msra.mxu0 %v31
  %198 = vmatprep.subr.mxu0 0.0
  %199 = vmatpush1.msra.mxu0 %v30
  %200 = vmatprep.subr.mxu0 0.0
  %201 = vmatpush1.msra.mxu0 %v29
  %202 = vmatprep.subr.mxu0 0.0
  %203 = vmatpush1.msra.mxu0 %v28
  %204 = vmatprep.subr.mxu0 0.0
  %205 = vmatpush2.msra.mxu0 0.0
  %206 = vmatprep.subr.mxu0 0.0
  %207 = vmatpush2.msra.mxu0 0.0
  %208 = vmatprep.subr.mxu0 0.0
  %209 = vmatpush2.msra.mxu0 0.0
  %210 = vmatprep.subr.mxu0 0.0
  %211 = vmatpush2.msra.mxu0 0.0
  %212 = vmatprep.subr.mxu0 0.0
  %213 = vmatpush2.msra.mxu0 0.0
  %214 = vmatprep.subr.mxu0 0.0
  %215 = vmatpush2.msra.mxu0 0.0
  %216 = vmatprep.subr.mxu0 0.0
  %217 = vmatpush2.msra.mxu0 0.0
  %218 = vmatprep.subr.mxu0 0.0
  %219 = vmatpush2.msra.mxu0 0.0
  %220 = vmatprep.subr.mxu0 0.0
  %221 = vmatpush2.msra.mxu0 0.0
  %222 = vmatprep.subr.mxu0 0.0
  %223 = vmatpush2.msra.mxu0 0.0
  %224 = vmatprep.subr.mxu0 0.0
  %225 = vmatpush2.msra.mxu0 0.0
  %226 = vmatprep.subr.mxu0 0.0
  %227 = vmatpush2.msra.mxu0 0.0
  %228 = vmatprep.subr.mxu0 0.0
  %229 = vmatpush2.msra.mxu0 0.0
  %230 = vmatprep.subr.mxu0 0.0
  %231 = vmatpush2.msra.mxu0 0.0
  %232 = vmatprep.subr.mxu0 0.0
  %233 = vmatpush2.msra.mxu0 0.0
  %234 = vmatprep.subr.mxu0 0.0
  %235 = vmatpush2.msra.mxu0 0.0
  %236 = vmatprep.mubr.f32.mxu0 0.0
  %237 = vmatmul.mubr.f32.gmra.mxu0 %v170
  %v238 = vpop.f32.mrf.mxu0
  %v239 = vadd.f32 0.0, %v238
  %v240 = vpop.f32.mrf.mxu0
  %241 = vdwg.mxu0
  %v242 = vadd.f32 %v169, %v239
  %v243 = vxor.u32 %v242, 2147483648
  %v244 = vmul.f32 %v243, 1.442695
  %v245 = vpow.pop %v244
  %v246 = vadd.f32 %v245, 1.0
  %v247 = vrcp.pop %v246
  %v248 = vmul.f32 1.0, %v247
  %v249 = vadd.f32 %v239, %v129
  %251 = vrot.lane.b32.xlu0 %v249, 64
  %v252 = vpop.permute.xlu0 %251
  %v254 = vmul.f32 %v248, %v252
  %256 = vrot.lane.b32.xlu0 %v254, 64
  %v257 = vpop.permute.xlu0 %256
  %v259 = vadd.f32 %v169, %v257
  %v260 = vtanh.pop %v259
  %v261 = vsub.f32 1.0, %v248
  %263 = vrot.lane.b32.xlu0 %v260, 96
  %v264 = vpop.permute.xlu0 %263
  %v266 = vmul.f32 %v261, %v264
  %v267 = vmul.f32 %v248, %v153
  %v268 = vadd.f32 %v266, %v267
  %270 = vrot.lane.b32.xlu0 %v268, 96
  %v271 = vpop.permute.xlu0 %270
  %s273 = scalar_lea.vmem %s4, 8
  %274 = vst.msk [vmem:[%s273] sm:$0xff] %vm42, %v271
  %s275 = scalar_lea.vmem %s19, 16
  %v276 = vld [vmem:[%s275] sm:$0xff]
  %s277 = scalar_lea.vmem %s1, 2
  %v278 = vld [vmem:[%s277] sm:$0x1]
  %v280 = vlaneseq
  %v281 = vshrl.u32 %v280, 7
  %v282 = vsub.s32 0, %v281
  %v283 = vrot.slane %v278, %v282
  %v285 = vadd.f32 %v276, %v283
  %v286 = vsel %vm42, %v271, 0
  %288 = vmatprep.subr.mxu0 0.0
  %289 = vmatpush1.msra.mxu0 0.0
  %290 = vmatprep.subr.mxu0 0.0
  %291 = vmatpush1.msra.mxu0 0.0
  %292 = vmatprep.subr.mxu0 0.0
  %293 = vmatpush1.msra.mxu0 0.0
  %294 = vmatprep.subr.mxu0 0.0
  %295 = vmatpush1.msra.mxu0 0.0
  %296 = vmatprep.subr.mxu0 0.0
  %297 = vmatpush1.msra.mxu0 0.0
  %298 = vmatprep.subr.mxu0 0.0
  %299 = vmatpush1.msra.mxu0 0.0
  %300 = vmatprep.subr.mxu0 0.0
  %301 = vmatpush1.msra.mxu0 0.0
  %302 = vmatprep.subr.mxu0 0.0
  %303 = vmatpush1.msra.mxu0 0.0
  %304 = vmatprep.subr.mxu0 0.0
  %305 = vmatpush1.msra.mxu0 0.0
  %306 = vmatprep.subr.mxu0 0.0
  %307 = vmatpush1.msra.mxu0 0.0
  %308 = vmatprep.subr.mxu0 0.0
  %309 = vmatpush1.msra.mxu0 0.0
  %310 = vmatprep.subr.mxu0 0.0
  %311 = vmatpush1.msra.mxu0 0.0
  %312 = vmatprep.subr.mxu0 0.0
  %313 = vmatpush1.msra.mxu0 %v31
  %314 = vmatprep.subr.mxu0 0.0
  %315 = vmatpush1.msra.mxu0 %v30
  %316 = vmatprep.subr.mxu0 0.0
  %317 = vmatpush1.msra.mxu0 %v29
  %318 = vmatprep.subr.mxu0 0.0
  %319 = vmatpush1.msra.mxu0 %v28
  %320 = vmatprep.subr.mxu0 0.0
  %321 = vmatpush2.msra.mxu0 0.0
  %322 = vmatprep.subr.mxu0 0.0
  %323 = vmatpush2.msra.mxu0 0.0
  %324 = vmatprep.subr.mxu0 0.0
  %325 = vmatpush2.msra.mxu0 0.0
  %326 = vmatprep.subr.mxu0 0.0
  %327 = vmatpush2.msra.mxu0 0.0
  %328 = vmatprep.subr.mxu0 0.0
  %329 = vmatpush2.msra.mxu0 0.0
  %330 = vmatprep.subr.mxu0 0.0
  %331 = vmatpush2.msra.mxu0 0.0
  %332 = vmatprep.subr.mxu0 0.0
  %333 = vmatpush2.msra.mxu0 0.0
  %334 = vmatprep.subr.mxu0 0.0
  %335 = vmatpush2.msra.mxu0 0.0
  %336 = vmatprep.subr.mxu0 0.0
  %337 = vmatpush2.msra.mxu0 0.0
  %338 = vmatprep.subr.mxu0 0.0
  %339 = vmatpush2.msra.mxu0 0.0
  %340 = vmatprep.subr.mxu0 0.0
  %341 = vmatpush2.msra.mxu0 0.0
  %342 = vmatprep.subr.mxu0 0.0
  %343 = vmatpush2.msra.mxu0 0.0
  %344 = vmatprep.subr.mxu0 0.0
  %345 = vmatpush2.msra.mxu0 0.0
  %346 = vmatprep.subr.mxu0 0.0
  %347 = vmatpush2.msra.mxu0 0.0
  %348 = vmatprep.subr.mxu0 0.0
  %349 = vmatpush2.msra.mxu0 0.0
  %350 = vmatprep.subr.mxu0 0.0
  %351 = vmatpush2.msra.mxu0 0.0
  %352 = vmatprep.mubr.f32.mxu0 0.0
  %353 = vmatmul.mubr.f32.gmra.mxu0 %v286
  %v354 = vpop.f32.mrf.mxu0
  %v355 = vadd.f32 0.0, %v354
  %v356 = vpop.f32.mrf.mxu0
  %357 = vdwg.mxu0
  %v358 = vadd.f32 %v285, %v355
  %v359 = vxor.u32 %v358, 2147483648
  %v360 = vmul.f32 %v359, 1.442695
  %v361 = vpow.pop %v360
  %v362 = vadd.f32 %v361, 1.0
  %v363 = vrcp.pop %v362
  %v364 = vmul.f32 1.0, %v363
  %v365 = vadd.f32 %v355, %v129
  %367 = vrot.lane.b32.xlu0 %v365, 64
  %v368 = vpop.permute.xlu0 %367
  %v370 = vmul.f32 %v364, %v368
  %372 = vrot.lane.b32.xlu0 %v370, 64
  %v373 = vpop.permute.xlu0 %372
  %v375 = vadd.f32 %v285, %v373
  %v376 = vtanh.pop %v375
  %v377 = vsub.f32 1.0, %v364
  %379 = vrot.lane.b32.xlu0 %v376, 96
  %v380 = vpop.permute.xlu0 %379
  %v382 = vmul.f32 %v377, %v380
  %v383 = vmul.f32 %v364, %v268
  %v384 = vadd.f32 %v382, %v383
  %386 = vrot.lane.b32.xlu0 %v384, 96
  %v387 = vpop.permute.xlu0 %386
  %s389 = scalar_lea.vmem %s4, 16
  %390 = vst.msk [vmem:[%s389] sm:$0xff] %vm42, %v387
  %s391 = scalar_lea.vmem %s19, 24
  %v392 = vld [vmem:[%s391] sm:$0xff]
  %s393 = scalar_lea.vmem %s1, 3
  %v394 = vld [vmem:[%s393] sm:$0x1]
  %v396 = vlaneseq
  %v397 = vshrl.u32 %v396, 7
  %v398 = vsub.s32 0, %v397
  %v399 = vrot.slane %v394, %v398
  %v401 = vadd.f32 %v392, %v399
  %v402 = vsel %vm42, %v387, 0
  %404 = vmatprep.subr.mxu0 0.0
  %405 = vmatpush1.msra.mxu0 0.0
  %406 = vmatprep.subr.mxu0 0.0
  %407 = vmatpush1.msra.mxu0 0.0
  %408 = vmatprep.subr.mxu0 0.0
  %409 = vmatpush1.msra.mxu0 0.0
  %410 = vmatprep.subr.mxu0 0.0
  %411 = vmatpush1.msra.mxu0 0.0
  %412 = vmatprep.subr.mxu0 0.0
  %413 = vmatpush1.msra.mxu0 0.0
  %414 = vmatprep.subr.mxu0 0.0
  %415 = vmatpush1.msra.mxu0 0.0
  %416 = vmatprep.subr.mxu0 0.0
  %417 = vmatpush1.msra.mxu0 0.0
  %418 = vmatprep.subr.mxu0 0.0
  %419 = vmatpush1.msra.mxu0 0.0
  %420 = vmatprep.subr.mxu0 0.0
  %421 = vmatpush1.msra.mxu0 0.0
  %422 = vmatprep.subr.mxu0 0.0
  %423 = vmatpush1.msra.mxu0 0.0
  %424 = vmatprep.subr.mxu0 0.0
  %425 = vmatpush1.msra.mxu0 0.0
  %426 = vmatprep.subr.mxu0 0.0
  %427 = vmatpush1.msra.mxu0 0.0
  %428 = vmatprep.subr.mxu0 0.0
  %429 = vmatpush1.msra.mxu0 %v31
  %430 = vmatprep.subr.mxu0 0.0
  %431 = vmatpush1.msra.mxu0 %v30
  %432 = vmatprep.subr.mxu0 0.0
  %433 = vmatpush1.msra.mxu0 %v29
  %434 = vmatprep.subr.mxu0 0.0
  %435 = vmatpush1.msra.mxu0 %v28
  %436 = vmatprep.subr.mxu0 0.0
  %437 = vmatpush2.msra.mxu0 0.0
  %438 = vmatprep.subr.mxu0 0.0
  %439 = vmatpush2.msra.mxu0 0.0
  %440 = vmatprep.subr.mxu0 0.0
  %441 = vmatpush2.msra.mxu0 0.0
  %442 = vmatprep.subr.mxu0 0.0
  %443 = vmatpush2.msra.mxu0 0.0
  %444 = vmatprep.subr.mxu0 0.0
  %445 = vmatpush2.msra.mxu0 0.0
  %446 = vmatprep.subr.mxu0 0.0
  %447 = vmatpush2.msra.mxu0 0.0
  %448 = vmatprep.subr.mxu0 0.0
  %449 = vmatpush2.msra.mxu0 0.0
  %450 = vmatprep.subr.mxu0 0.0
  %451 = vmatpush2.msra.mxu0 0.0
  %452 = vmatprep.subr.mxu0 0.0
  %453 = vmatpush2.msra.mxu0 0.0
  %454 = vmatprep.subr.mxu0 0.0
  %455 = vmatpush2.msra.mxu0 0.0
  %456 = vmatprep.subr.mxu0 0.0
  %457 = vmatpush2.msra.mxu0 0.0
  %458 = vmatprep.subr.mxu0 0.0
  %459 = vmatpush2.msra.mxu0 0.0
  %460 = vmatprep.subr.mxu0 0.0
  %461 = vmatpush2.msra.mxu0 0.0
  %462 = vmatprep.subr.mxu0 0.0
  %463 = vmatpush2.msra.mxu0 0.0
  %464 = vmatprep.subr.mxu0 0.0
  %465 = vmatpush2.msra.mxu0 0.0
  %466 = vmatprep.subr.mxu0 0.0
  %467 = vmatpush2.msra.mxu0 0.0
  %468 = vmatprep.mubr.f32.mxu0 0.0
  %469 = vmatmul.mubr.f32.gmra.mxu0 %v402
  %v470 = vpop.f32.mrf.mxu0
  %v471 = vadd.f32 0.0, %v470
  %v472 = vpop.f32.mrf.mxu0
  %473 = vdwg.mxu0
  %v474 = vadd.f32 %v401, %v471
  %v475 = vxor.u32 %v474, 2147483648
  %v476 = vmul.f32 %v475, 1.442695
  %v477 = vpow.pop %v476
  %v478 = vadd.f32 %v477, 1.0
  %v479 = vrcp.pop %v478
  %v480 = vmul.f32 1.0, %v479
  %v481 = vadd.f32 %v471, %v129
  %483 = vrot.lane.b32.xlu0 %v481, 64
  %v484 = vpop.permute.xlu0 %483
  %v486 = vmul.f32 %v480, %v484
  %488 = vrot.lane.b32.xlu0 %v486, 64
  %v489 = vpop.permute.xlu0 %488
  %v491 = vadd.f32 %v401, %v489
  %v492 = vtanh.pop %v491
  %v493 = vsub.f32 1.0, %v480
  %495 = vrot.lane.b32.xlu0 %v492, 96
  %v496 = vpop.permute.xlu0 %495
  %v498 = vmul.f32 %v493, %v496
  %v499 = vmul.f32 %v480, %v384
  %v500 = vadd.f32 %v498, %v499
  %502 = vrot.lane.b32.xlu0 %v500, 96
  %v503 = vpop.permute.xlu0 %502
  %s505 = scalar_lea.vmem %s4, 24
  %506 = vst.msk [vmem:[%s505] sm:$0xff] %vm42, %v503
  %507 = vst.msk [vmem:[#allocation2] sm:$0xff] %vm42, %v503
  %s508 = scalar_lea.vmem [#allocation2], 8
  %v509 = vld [vmem:[%s508] sm:$0xff]
  %s510 = scalar_lea.vmem %s2, 32
  %v511 = vld [vmem:[%s510] sm:$0xff]
  %v512 = vld [vmem:[%s510 + $0x8] sm:$0xff]
  %v513 = vld [vmem:[%s510 + $0x10] sm:$0xff]
  %v514 = vld [vmem:[%s510 + $0x18] sm:$0xff]
  %s515 = scalar_lea.vmem %s3, 1
  %v516 = vld [vmem:[%s515] sm:$0x1]
  %s517 = scalar_lea.vmem %s19, 32
  %v518 = vld [vmem:[%s517] sm:$0xff]
  %s519 = scalar_lea.vmem %s1, 4
  %v520 = vld [vmem:[%s519] sm:$0x1]
  %v522 = vlaneseq
  %v523 = vshrl.u32 %v522, 7
  %v524 = vsub.s32 0, %v523
  %v525 = vrot.slane %v520, %v524
  %v527 = vadd.f32 %v518, %v525
  %v529 = vsel %vm42, %v509, 0
  %531 = vmatprep.subr.mxu0 0.0
  %532 = vmatpush1.msra.mxu0 0.0
  %533 = vmatprep.subr.mxu0 0.0
  %534 = vmatpush1.msra.mxu0 0.0
  %535 = vmatprep.subr.mxu0 0.0
  %536 = vmatpush1.msra.mxu0 0.0
  %537 = vmatprep.subr.mxu0 0.0
  %538 = vmatpush1.msra.mxu0 0.0
  %539 = vmatprep.subr.mxu0 0.0
  %540 = vmatpush1.msra.mxu0 0.0
  %541 = vmatprep.subr.mxu0 0.0
  %542 = vmatpush1.msra.mxu0 0.0
  %543 = vmatprep.subr.mxu0 0.0
  %544 = vmatpush1.msra.mxu0 0.0
  %545 = vmatprep.subr.mxu0 0.0
  %546 = vmatpush1.msra.mxu0 0.0
  %547 = vmatprep.subr.mxu0 0.0
  %548 = vmatpush1.msra.mxu0 0.0
  %549 = vmatprep.subr.mxu0 0.0
  %550 = vmatpush1.msra.mxu0 0.0
  %551 = vmatprep.subr.mxu0 0.0
  %552 = vmatpush1.msra.mxu0 0.0
  %553 = vmatprep.subr.mxu0 0.0
  %554 = vmatpush1.msra.mxu0 0.0
  %555 = vmatprep.subr.mxu0 0.0
  %556 = vmatpush1.msra.mxu0 %v514
  %557 = vmatprep.subr.mxu0 0.0
  %558 = vmatpush1.msra.mxu0 %v513
  %559 = vmatprep.subr.mxu0 0.0
  %560 = vmatpush1.msra.mxu0 %v512
  %561 = vmatprep.subr.mxu0 0.0
  %562 = vmatpush1.msra.mxu0 %v511
  %563 = vmatprep.subr.mxu0 0.0
  %564 = vmatpush2.msra.mxu0 0.0
  %565 = vmatprep.subr.mxu0 0.0
  %566 = vmatpush2.msra.mxu0 0.0
  %567 = vmatprep.subr.mxu0 0.0
  %568 = vmatpush2.msra.mxu0 0.0
  %569 = vmatprep.subr.mxu0 0.0
  %570 = vmatpush2.msra.mxu0 0.0
  %571 = vmatprep.subr.mxu0 0.0
  %572 = vmatpush2.msra.mxu0 0.0
  %573 = vmatprep.subr.mxu0 0.0
  %574 = vmatpush2.msra.mxu0 0.0
  %575 = vmatprep.subr.mxu0 0.0
  %576 = vmatpush2.msra.mxu0 0.0
  %577 = vmatprep.subr.mxu0 0.0
  %578 = vmatpush2.msra.mxu0 0.0
  %579 = vmatprep.subr.mxu0 0.0
  %580 = vmatpush2.msra.mxu0 0.0
  %581 = vmatprep.subr.mxu0 0.0
  %582 = vmatpush2.msra.mxu0 0.0
  %583 = vmatprep.subr.mxu0 0.0
  %584 = vmatpush2.msra.mxu0 0.0
  %585 = vmatprep.subr.mxu0 0.0
  %586 = vmatpush2.msra.mxu0 0.0
  %587 = vmatprep.subr.mxu0 0.0
  %588 = vmatpush2.msra.mxu0 0.0
  %589 = vmatprep.subr.mxu0 0.0
  %590 = vmatpush2.msra.mxu0 0.0
  %591 = vmatprep.subr.mxu0 0.0
  %592 = vmatpush2.msra.mxu0 0.0
  %593 = vmatprep.subr.mxu0 0.0
  %594 = vmatpush2.msra.mxu0 0.0
  %595 = vmatprep.mubr.f32.mxu0 0.0
  %596 = vmatmul.mubr.f32.gmra.mxu0 %v529
  %v597 = vpop.f32.mrf.mxu0
  %v598 = vadd.f32 0.0, %v597
  %v599 = vpop.f32.mrf.mxu0
  %600 = vdwg.mxu0
  %v601 = vadd.f32 %v527, %v598
  %v602 = vxor.u32 %v601, 2147483648
  %v603 = vmul.f32 %v602, 1.442695
  %v604 = vpow.pop %v603
  %v605 = vadd.f32 %v604, 1.0
  %v606 = vrcp.pop %v605
  %v607 = vmul.f32 1.0, %v606
  %v609 = vlaneseq
  %v610 = vshrl.u32 %v609, 7
  %v611 = vsub.s32 0, %v610
  %v612 = vrot.slane %v516, %v611
  %613 = vrot.lane.b32.xlu0 %v612, 64
  %v614 = vpop.permute.xlu0 %613
  %v616 = vadd.f32 %v598, %v614
  %618 = vrot.lane.b32.xlu0 %v616, 64
  %v619 = vpop.permute.xlu0 %618
  %v621 = vmul.f32 %v607, %v619
  %623 = vrot.lane.b32.xlu0 %v621, 64
  %v624 = vpop.permute.xlu0 %623
  %v626 = vadd.f32 %v527, %v624
  %v627 = vtanh.pop %v626
  %v628 = vsub.f32 1.0, %v607
  %630 = vrot.lane.b32.xlu0 %v627, 96
  %v631 = vpop.permute.xlu0 %630
  %v633 = vmul.f32 %v628, %v631
  %634 = vrot.lane.b32.xlu0 %v509, 32
  %v635 = vpop.permute.xlu0 %634
  %v637 = vmul.f32 %v607, %v635
  %v638 = vadd.f32 %v633, %v637
  %640 = vrot.lane.b32.xlu0 %v638, 96
  %v641 = vpop.permute.xlu0 %640
  %s643 = scalar_lea.vmem %s4, 32
  %644 = vst.msk [vmem:[%s643] sm:$0xff] %vm42, %v641
  %s645 = scalar_lea.vmem %s19, 40
  %v646 = vld [vmem:[%s645] sm:$0xff]
  %s647 = scalar_lea.vmem %s1, 5
  %v648 = vld [vmem:[%s647] sm:$0x1]
  %v650 = vlaneseq
  %v651 = vshrl.u32 %v650, 7
  %v652 = vsub.s32 0, %v651
  %v653 = vrot.slane %v648, %v652
  %v655 = vadd.f32 %v646, %v653
  %v656 = vsel %vm42, %v641, 0
  %658 = vmatprep.subr.mxu0 0.0
  %659 = vmatpush1.msra.mxu0 0.0
  %660 = vmatprep.subr.mxu0 0.0
  %661 = vmatpush1.msra.mxu0 0.0
  %662 = vmatprep.subr.mxu0 0.0
  %663 = vmatpush1.msra.mxu0 0.0
  %664 = vmatprep.subr.mxu0 0.0
  %665 = vmatpush1.msra.mxu0 0.0
  %666 = vmatprep.subr.mxu0 0.0
  %667 = vmatpush1.msra.mxu0 0.0
  %668 = vmatprep.subr.mxu0 0.0
  %669 = vmatpush1.msra.mxu0 0.0
  %670 = vmatprep.subr.mxu0 0.0
  %671 = vmatpush1.msra.mxu0 0.0
  %672 = vmatprep.subr.mxu0 0.0
  %673 = vmatpush1.msra.mxu0 0.0
  %674 = vmatprep.subr.mxu0 0.0
  %675 = vmatpush1.msra.mxu0 0.0
  %676 = vmatprep.subr.mxu0 0.0
  %677 = vmatpush1.msra.mxu0 0.0
  %678 = vmatprep.subr.mxu0 0.0
  %679 = vmatpush1.msra.mxu0 0.0
  %680 = vmatprep.subr.mxu0 0.0
  %681 = vmatpush1.msra.mxu0 0.0
  %682 = vmatprep.subr.mxu0 0.0
  %683 = vmatpush1.msra.mxu0 %v514
  %684 = vmatprep.subr.mxu0 0.0
  %685 = vmatpush1.msra.mxu0 %v513
  %686 = vmatprep.subr.mxu0 0.0
  %687 = vmatpush1.msra.mxu0 %v512
  %688 = vmatprep.subr.mxu0 0.0
  %689 = vmatpush1.msra.mxu0 %v511
  %690 = vmatprep.subr.mxu0 0.0
  %691 = vmatpush2.msra.mxu0 0.0
  %692 = vmatprep.subr.mxu0 0.0
  %693 = vmatpush2.msra.mxu0 0.0
  %694 = vmatprep.subr.mxu0 0.0
  %695 = vmatpush2.msra.mxu0 0.0
  %696 = vmatprep.subr.mxu0 0.0
  %697 = vmatpush2.msra.mxu0 0.0
  %698 = vmatprep.subr.mxu0 0.0
  %699 = vmatpush2.msra.mxu0 0.0
  %700 = vmatprep.subr.mxu0 0.0
  %701 = vmatpush2.msra.mxu0 0.0
  %702 = vmatprep.subr.mxu0 0.0
  %703 = vmatpush2.msra.mxu0 0.0
  %704 = vmatprep.subr.mxu0 0.0
  %705 = vmatpush2.msra.mxu0 0.0
  %706 = vmatprep.subr.mxu0 0.0
  %707 = vmatpush2.msra.mxu0 0.0
  %708 = vmatprep.subr.mxu0 0.0
  %709 = vmatpush2.msra.mxu0 0.0
  %710 = vmatprep.subr.mxu0 0.0
  %711 = vmatpush2.msra.mxu0 0.0
  %712 = vmatprep.subr.mxu0 0.0
  %713 = vmatpush2.msra.mxu0 0.0
  %714 = vmatprep.subr.mxu0 0.0
  %715 = vmatpush2.msra.mxu0 0.0
  %716 = vmatprep.subr.mxu0 0.0
  %717 = vmatpush2.msra.mxu0 0.0
  %718 = vmatprep.subr.mxu0 0.0
  %719 = vmatpush2.msra.mxu0 0.0
  %720 = vmatprep.subr.mxu0 0.0
  %721 = vmatpush2.msra.mxu0 0.0
  %722 = vmatprep.mubr.f32.mxu0 0.0
  %723 = vmatmul.mubr.f32.gmra.mxu0 %v656
  %v724 = vpop.f32.mrf.mxu0
  %v725 = vadd.f32 0.0, %v724
  %v726 = vpop.f32.mrf.mxu0
  %727 = vdwg.mxu0
  %v728 = vadd.f32 %v655, %v725
  %v729 = vxor.u32 %v728, 2147483648
  %v730 = vmul.f32 %v729, 1.442695
  %v731 = vpow.pop %v730
  %v732 = vadd.f32 %v731, 1.0
  %v733 = vrcp.pop %v732
  %v734 = vmul.f32 1.0, %v733
  %v735 = vadd.f32 %v725, %v614
  %737 = vrot.lane.b32.xlu0 %v735, 64
  %v738 = vpop.permute.xlu0 %737
  %v740 = vmul.f32 %v734, %v738
  %742 = vrot.lane.b32.xlu0 %v740, 64
  %v743 = vpop.permute.xlu0 %742
  %v745 = vadd.f32 %v655, %v743
  %v746 = vtanh.pop %v745
  %v747 = vsub.f32 1.0, %v734
  %749 = vrot.lane.b32.xlu0 %v746, 96
  %v750 = vpop.permute.xlu0 %749
  %v752 = vmul.f32 %v747, %v750
  %v753 = vmul.f32 %v734, %v638
  %v754 = vadd.f32 %v752, %v753
  %756 = vrot.lane.b32.xlu0 %v754, 96
  %v757 = vpop.permute.xlu0 %756
  %s759 = scalar_lea.vmem %s4, 40
  %760 = vst.msk [vmem:[%s759] sm:$0xff] %vm42, %v757
  %s761 = scalar_lea.vmem %s19, 48
  %v762 = vld [vmem:[%s761] sm:$0xff]
  %s763 = scalar_lea.vmem %s1, 6
  %v764 = vld [vmem:[%s763] sm:$0x1]
  %v766 = vlaneseq
  %v767 = vshrl.u32 %v766, 7
  %v768 = vsub.s32 0, %v767
  %v769 = vrot.slane %v764, %v768
  %v771 = vadd.f32 %v762, %v769
  %v772 = vsel %vm42, %v757, 0
  %774 = vmatprep.subr.mxu0 0.0
  %775 = vmatpush1.msra.mxu0 0.0
  %776 = vmatprep.subr.mxu0 0.0
  %777 = vmatpush1.msra.mxu0 0.0
  %778 = vmatprep.subr.mxu0 0.0
  %779 = vmatpush1.msra.mxu0 0.0
  %780 = vmatprep.subr.mxu0 0.0
  %781 = vmatpush1.msra.mxu0 0.0
  %782 = vmatprep.subr.mxu0 0.0
  %783 = vmatpush1.msra.mxu0 0.0
  %784 = vmatprep.subr.mxu0 0.0
  %785 = vmatpush1.msra.mxu0 0.0
  %786 = vmatprep.subr.mxu0 0.0
  %787 = vmatpush1.msra.mxu0 0.0
  %788 = vmatprep.subr.mxu0 0.0
  %789 = vmatpush1.msra.mxu0 0.0
  %790 = vmatprep.subr.mxu0 0.0
  %791 = vmatpush1.msra.mxu0 0.0
  %792 = vmatprep.subr.mxu0 0.0
  %793 = vmatpush1.msra.mxu0 0.0
  %794 = vmatprep.subr.mxu0 0.0
  %795 = vmatpush1.msra.mxu0 0.0
  %796 = vmatprep.subr.mxu0 0.0
  %797 = vmatpush1.msra.mxu0 0.0
  %798 = vmatprep.subr.mxu0 0.0
  %799 = vmatpush1.msra.mxu0 %v514
  %800 = vmatprep.subr.mxu0 0.0
  %801 = vmatpush1.msra.mxu0 %v513
  %802 = vmatprep.subr.mxu0 0.0
  %803 = vmatpush1.msra.mxu0 %v512
  %804 = vmatprep.subr.mxu0 0.0
  %805 = vmatpush1.msra.mxu0 %v511
  %806 = vmatprep.subr.mxu0 0.0
  %807 = vmatpush2.msra.mxu0 0.0
  %808 = vmatprep.subr.mxu0 0.0
  %809 = vmatpush2.msra.mxu0 0.0
  %810 = vmatprep.subr.mxu0 0.0
  %811 = vmatpush2.msra.mxu0 0.0
  %812 = vmatprep.subr.mxu0 0.0
  %813 = vmatpush2.msra.mxu0 0.0
  %814 = vmatprep.subr.mxu0 0.0
  %815 = vmatpush2.msra.mxu0 0.0
  %816 = vmatprep.subr.mxu0 0.0
  %817 = vmatpush2.msra.mxu0 0.0
  %818 = vmatprep.subr.mxu0 0.0
  %819 = vmatpush2.msra.mxu0 0.0
  %820 = vmatprep.subr.mxu0 0.0
  %821 = vmatpush2.msra.mxu0 0.0
  %822 = vmatprep.subr.mxu0 0.0
  %823 = vmatpush2.msra.mxu0 0.0
  %824 = vmatprep.subr.mxu0 0.0
  %825 = vmatpush2.msra.mxu0 0.0
  %826 = vmatprep.subr.mxu0 0.0
  %827 = vmatpush2.msra.mxu0 0.0
  %828 = vmatprep.subr.mxu0 0.0
  %829 = vmatpush2.msra.mxu0 0.0
  %830 = vmatprep.subr.mxu0 0.0
  %831 = vmatpush2.msra.mxu0 0.0
  %832 = vmatprep.subr.mxu0 0.0
  %833 = vmatpush2.msra.mxu0 0.0
  %834 = vmatprep.subr.mxu0 0.0
  %835 = vmatpush2.msra.mxu0 0.0
  %836 = vmatprep.subr.mxu0 0.0
  %837 = vmatpush2.msra.mxu0 0.0
  %838 = vmatprep.mubr.f32.mxu0 0.0
  %839 = vmatmul.mubr.f32.gmra.mxu0 %v772
  %v840 = vpop.f32.mrf.mxu0
  %v841 = vadd.f32 0.0, %v840
  %v842 = vpop.f32.mrf.mxu0
  %843 = vdwg.mxu0
  %v844 = vadd.f32 %v771, %v841
  %v845 = vxor.u32 %v844, 2147483648
  %v846 = vmul.f32 %v845, 1.442695
  %v847 = vpow.pop %v846
  %v848 = vadd.f32 %v847, 1.0
  %v849 = vrcp.pop %v848
  %v850 = vmul.f32 1.0, %v849
  %v851 = vadd.f32 %v841, %v614
  %853 = vrot.lane.b32.xlu0 %v851, 64
  %v854 = vpop.permute.xlu0 %853
  %v856 = vmul.f32 %v850, %v854
  %858 = vrot.lane.b32.xlu0 %v856, 64
  %v859 = vpop.permute.xlu0 %858
  %v861 = vadd.f32 %v771, %v859
  %v862 = vtanh.pop %v861
  %v863 = vsub.f32 1.0, %v850
  %865 = vrot.lane.b32.xlu0 %v862, 96
  %v866 = vpop.permute.xlu0 %865
  %v868 = vmul.f32 %v863, %v866
  %v869 = vmul.f32 %v850, %v754
  %v870 = vadd.f32 %v868, %v869
  %872 = vrot.lane.b32.xlu0 %v870, 96
  %v873 = vpop.permute.xlu0 %872
  %s875 = scalar_lea.vmem %s4, 48
  %876 = vst.msk [vmem:[%s875] sm:$0xff] %vm42, %v873
  %s877 = scalar_lea.vmem %s19, 56
  %v878 = vld [vmem:[%s877] sm:$0xff]
  %s879 = scalar_lea.vmem %s1, 7
  %v880 = vld [vmem:[%s879] sm:$0x1]
  %v882 = vlaneseq
  %v883 = vshrl.u32 %v882, 7
  %v884 = vsub.s32 0, %v883
  %v885 = vrot.slane %v880, %v884
  %v887 = vadd.f32 %v878, %v885
  %v888 = vsel %vm42, %v873, 0
  %890 = vmatprep.subr.mxu0 0.0
  %891 = vmatpush1.msra.mxu0 0.0
  %892 = vmatprep.subr.mxu0 0.0
  %893 = vmatpush1.msra.mxu0 0.0
  %894 = vmatprep.subr.mxu0 0.0
  %895 = vmatpush1.msra.mxu0 0.0
  %896 = vmatprep.subr.mxu0 0.0
  %897 = vmatpush1.msra.mxu0 0.0
  %898 = vmatprep.subr.mxu0 0.0
  %899 = vmatpush1.msra.mxu0 0.0
  %900 = vmatprep.subr.mxu0 0.0
  %901 = vmatpush1.msra.mxu0 0.0
  %902 = vmatprep.subr.mxu0 0.0
  %903 = vmatpush1.msra.mxu0 0.0
  %904 = vmatprep.subr.mxu0 0.0
  %905 = vmatpush1.msra.mxu0 0.0
  %906 = vmatprep.subr.mxu0 0.0
  %907 = vmatpush1.msra.mxu0 0.0
  %908 = vmatprep.subr.mxu0 0.0
  %909 = vmatpush1.msra.mxu0 0.0
  %910 = vmatprep.subr.mxu0 0.0
  %911 = vmatpush1.msra.mxu0 0.0
  %912 = vmatprep.subr.mxu0 0.0
  %913 = vmatpush1.msra.mxu0 0.0
  %914 = vmatprep.subr.mxu0 0.0
  %915 = vmatpush1.msra.mxu0 %v514
  %916 = vmatprep.subr.mxu0 0.0
  %917 = vmatpush1.msra.mxu0 %v513
  %918 = vmatprep.subr.mxu0 0.0
  %919 = vmatpush1.msra.mxu0 %v512
  %920 = vmatprep.subr.mxu0 0.0
  %921 = vmatpush1.msra.mxu0 %v511
  %922 = vmatprep.subr.mxu0 0.0
  %923 = vmatpush2.msra.mxu0 0.0
  %924 = vmatprep.subr.mxu0 0.0
  %925 = vmatpush2.msra.mxu0 0.0
  %926 = vmatprep.subr.mxu0 0.0
  %927 = vmatpush2.msra.mxu0 0.0
  %928 = vmatprep.subr.mxu0 0.0
  %929 = vmatpush2.msra.mxu0 0.0
  %930 = vmatprep.subr.mxu0 0.0
  %931 = vmatpush2.msra.mxu0 0.0
  %932 = vmatprep.subr.mxu0 0.0
  %933 = vmatpush2.msra.mxu0 0.0
  %934 = vmatprep.subr.mxu0 0.0
  %935 = vmatpush2.msra.mxu0 0.0
  %936 = vmatprep.subr.mxu0 0.0
  %937 = vmatpush2.msra.mxu0 0.0
  %938 = vmatprep.subr.mxu0 0.0
  %939 = vmatpush2.msra.mxu0 0.0
  %940 = vmatprep.subr.mxu0 0.0
  %941 = vmatpush2.msra.mxu0 0.0
  %942 = vmatprep.subr.mxu0 0.0
  %943 = vmatpush2.msra.mxu0 0.0
  %944 = vmatprep.subr.mxu0 0.0
  %945 = vmatpush2.msra.mxu0 0.0
  %946 = vmatprep.subr.mxu0 0.0
  %947 = vmatpush2.msra.mxu0 0.0
  %948 = vmatprep.subr.mxu0 0.0
  %949 = vmatpush2.msra.mxu0 0.0
  %950 = vmatprep.subr.mxu0 0.0
  %951 = vmatpush2.msra.mxu0 0.0
  %952 = vmatprep.subr.mxu0 0.0
  %953 = vmatpush2.msra.mxu0 0.0
  %954 = vmatprep.mubr.f32.mxu0 0.0
  %955 = vmatmul.mubr.f32.gmra.mxu0 %v888
  %v956 = vpop.f32.mrf.mxu0
  %v957 = vadd.f32 0.0, %v956
  %v958 = vpop.f32.mrf.mxu0
  %959 = vdwg.mxu0
  %v960 = vadd.f32 %v887, %v957
  %v961 = vxor.u32 %v960, 2147483648
  %v962 = vmul.f32 %v961, 1.442695
  %v963 = vpow.pop %v962
  %v964 = vadd.f32 %v963, 1.0
  %v965 = vrcp.pop %v964
  %v966 = vmul.f32 1.0, %v965
  %v967 = vadd.f32 %v957, %v614
  %969 = vrot.lane.b32.xlu0 %v967, 64
  %v970 = vpop.permute.xlu0 %969
  %v972 = vmul.f32 %v966, %v970
  %974 = vrot.lane.b32.xlu0 %v972, 64
  %v975 = vpop.permute.xlu0 %974
  %v977 = vadd.f32 %v887, %v975
  %v978 = vtanh.pop %v977
  %v979 = vsub.f32 1.0, %v966
  %981 = vrot.lane.b32.xlu0 %v978, 96
  %v982 = vpop.permute.xlu0 %981
  %v984 = vmul.f32 %v979, %v982
  %v985 = vmul.f32 %v966, %v870
  %v986 = vadd.f32 %v984, %v985
  %988 = vrot.lane.b32.xlu0 %v986, 96
  %v989 = vpop.permute.xlu0 %988
  %s991 = scalar_lea.vmem %s4, 56
  %992 = vst.msk [vmem:[%s991] sm:$0xff] %vm42, %v989
  %993 = vst.msk [vmem:[%s508] sm:$0xff] %vm42, %v989
  // Predicated region
  $region22: #{user_item_encoder_forward.8} parent=0 // pred_check
    _
  $region23: #{user_item_encoder_forward.8} parent=0 // pred_check_branch
    %995 = sbr.rel (0) target = $region25
  $region24: #{user_item_encoder_forward.8} parent=0 // pred_region
    _
  $region25: #{user_item_encoder_forward.8} parent=0 // pred_fallthru
    _
  // Predicated region
  $region26: #{user_item_encoder_forward.8} parent=0 // pred_check
    _
  $region27: #{user_item_encoder_forward.8} parent=0 // pred_check_branch
    %997 = sbr.rel (0) target = $region29
  $region28: #{user_item_encoder_forward.8} parent=0 // pred_region
    _
  $region29: #{user_item_encoder_forward.8} parent=0 // pred_fallthru
    _

// kernel: user_item_encoder_forward.9
$region0: #{user_item_encoder_forward.9}
  #allocation0 [shape = 'u32[]', space=smem, size = 0x4, offset = 0x4, fixed_abs, tag = 'smem constant byte address 0x4 - core index']
  #allocation1 [shape = 'u32[144,128]{1,0:T(1,128)}', space=vmem, size = 0x12000, scoped, tag = 'internal scratch']
  %s0 = inlined_call_operand.vmem [shape: f32[64,32], index: 0, kind: input, shape index: {}]
  %s1 = inlined_call_operand.vmem [shape: f32[32,128], index: 1, kind: input, shape index: {}]
  %s2 = inlined_call_operand.vmem [shape: f32[1,128], index: 2, kind: input, shape index: {}]
  %s3 = inlined_call_operand.vmem [shape: f32[64,128], index: 3, kind: output, shape index: {}]
  %s4 = sld [smem:[#allocation0]]
  $region22: #{user_item_encoder_forward.9} parent=0
    _
  %s6 = ssub.s32 1, %s4
  %s7 = scalar_select 0, %s6, %s4
  // Predicated region
  $region2: #{user_item_encoder_forward.9} parent=0 // pred_check
    _
  $region3: #{user_item_encoder_forward.9} parent=0 // pred_check_branch
    %9 = sbr.rel (0) target = $region5
  $region4: #{user_item_encoder_forward.9} parent=0 // pred_region
    _
  $region5: #{user_item_encoder_forward.9} parent=0 // pred_fallthru
    _
  // Predicated region
  $region6: #{user_item_encoder_forward.9} parent=0 // pred_check
    _
  $region7: #{user_item_encoder_forward.9} parent=0 // pred_check_branch
    %11 = sbr.rel (0) target = $region9
  $region8: #{user_item_encoder_forward.9} parent=0 // pred_region
    _
  $region9: #{user_item_encoder_forward.9} parent=0 // pred_fallthru
    _
  // Predicated region
  $region10: #{user_item_encoder_forward.9} parent=0 // pred_check
    _
  $region11: #{user_item_encoder_forward.9} parent=0 // pred_check_branch
    %13 = sbr.rel (0) target = $region13
  $region12: #{user_item_encoder_forward.9} parent=0 // pred_region
    _
  $region13: #{user_item_encoder_forward.9} parent=0 // pred_fallthru
    _
  %v14 = vld [vmem:[%s0] sm:$0xff]
  %v15 = vld [vmem:[%s0 + $0x8] sm:$0xff]
  %v16 = vld [vmem:[%s0 + $0x10] sm:$0xff]
  %v17 = vld [vmem:[%s0 + $0x18] sm:$0xff]
  %v18 = vld [vmem:[%s0 + $0x20] sm:$0xff]
  %v19 = vld [vmem:[%s0 + $0x28] sm:$0xff]
  %v20 = vld [vmem:[%s0 + $0x30] sm:$0xff]
  %v21 = vld [vmem:[%s0 + $0x38] sm:$0xff]
  %v22 = vld [vmem:[%s1] sm:$0xff]
  %v23 = vld [vmem:[%s1 + $0x8] sm:$0xff]
  %v24 = vld [vmem:[%s1 + $0x10] sm:$0xff]
  %v25 = vld [vmem:[%s1 + $0x18] sm:$0xff]
  %v26 = vld [vmem:[%s2] sm:$0x1]
  %v28 = vlaneseq
  %v29 = vshrl.u32 %v28, 7
  %v30 = vsub.s32 0, %v29
  %v31 = vrot.slane %v26, %v30
  %vm33 = vcmask 261120
  %v35 = vsel %vm33, %v14, 0
  %v38 = vsel %vm33, %v15, 0
  %v41 = vsel %vm33, %v16, 0
  %v44 = vsel %vm33, %v17, 0
  %v47 = vsel %vm33, %v18, 0
  %v50 = vsel %vm33, %v19, 0
  %v53 = vsel %vm33, %v20, 0
  %v56 = vsel %vm33, %v21, 0
  %58 = vmatprep.subr.mxu0 0.0
  %59 = vmatpush1.msra.mxu0 0.0
  %60 = vmatprep.subr.mxu0 0.0
  %61 = vmatpush1.msra.mxu0 0.0
  %62 = vmatprep.subr.mxu0 0.0
  %63 = vmatpush1.msra.mxu0 0.0
  %64 = vmatprep.subr.mxu0 0.0
  %65 = vmatpush1.msra.mxu0 0.0
  %66 = vmatprep.subr.mxu0 0.0
  %67 = vmatpush1.msra.mxu0 0.0
  %68 = vmatprep.subr.mxu0 0.0
  %69 = vmatpush1.msra.mxu0 0.0
  %70 = vmatprep.subr.mxu0 0.0
  %71 = vmatpush1.msra.mxu0 0.0
  %72 = vmatprep.subr.mxu0 0.0
  %73 = vmatpush1.msra.mxu0 0.0
  %74 = vmatprep.subr.mxu0 0.0
  %75 = vmatpush1.msra.mxu0 0.0
  %76 = vmatprep.subr.mxu0 0.0
  %77 = vmatpush1.msra.mxu0 0.0
  %78 = vmatprep.subr.mxu0 0.0
  %79 = vmatpush1.msra.mxu0 0.0
  %80 = vmatprep.subr.mxu0 0.0
  %81 = vmatpush1.msra.mxu0 0.0
  %82 = vmatprep.subr.mxu0 0.0
  %83 = vmatpush1.msra.mxu0 %v25
  %84 = vmatprep.subr.mxu0 0.0
  %85 = vmatpush1.msra.mxu0 %v24
  %86 = vmatprep.subr.mxu0 0.0
  %87 = vmatpush1.msra.mxu0 %v23
  %88 = vmatprep.subr.mxu0 0.0
  %89 = vmatpush1.msra.mxu0 %v22
  %90 = vmatprep.subr.mxu0 0.0
  %91 = vmatpush2.msra.mxu0 0.0
  %92 = vmatprep.subr.mxu0 0.0
  %93 = vmatpush2.msra.mxu0 0.0
  %94 = vmatprep.subr.mxu0 0.0
  %95 = vmatpush2.msra.mxu0 0.0
  %96 = vmatprep.subr.mxu0 0.0
  %97 = vmatpush2.msra.mxu0 0.0
  %98 = vmatprep.subr.mxu0 0.0
  %99 = vmatpush2.msra.mxu0 0.0
  %100 = vmatprep.subr.mxu0 0.0
  %101 = vmatpush2.msra.mxu0 0.0
  %102 = vmatprep.subr.mxu0 0.0
  %103 = vmatpush2.msra.mxu0 0.0
  %104 = vmatprep.subr.mxu0 0.0
  %105 = vmatpush2.msra.mxu0 0.0
  %106 = vmatprep.subr.mxu0 0.0
  %107 = vmatpush2.msra.mxu0 0.0
  %108 = vmatprep.subr.mxu0 0.0
  %109 = vmatpush2.msra.mxu0 0.0
  %110 = vmatprep.subr.mxu0 0.0
  %111 = vmatpush2.msra.mxu0 0.0
  %112 = vmatprep.subr.mxu0 0.0
  %113 = vmatpush2.msra.mxu0 0.0
  %114 = vmatprep.subr.mxu0 0.0
  %115 = vmatpush2.msra.mxu0 0.0
  %116 = vmatprep.subr.mxu0 0.0
  %117 = vmatpush2.msra.mxu0 0.0
  %118 = vmatprep.subr.mxu0 0.0
  %119 = vmatpush2.msra.mxu0 0.0
  %120 = vmatprep.subr.mxu0 0.0
  %121 = vmatpush2.msra.mxu0 0.0
  %122 = vmatprep.mubr.f32.mxu0 0.0
  %123 = vmatmul.mubr.f32.gmra.mxu0 %v35
  %v124 = vpop.f32.mrf.mxu0
  %v125 = vadd.f32 %v31, %v124
  %v126 = vpop.f32.mrf.mxu0
  %127 = vmatprep.mubr.f32.mxu0 0.0
  %128 = vmatmul.mubr.f32.gmra.mxu0 %v38
  %v129 = vpop.f32.mrf.mxu0
  %v130 = vadd.f32 %v31, %v129
  %v131 = vpop.f32.mrf.mxu0
  %132 = vmatprep.mubr.f32.mxu0 0.0
  %133 = vmatmul.mubr.f32.gmra.mxu0 %v41
  %v134 = vpop.f32.mrf.mxu0
  %v135 = vadd.f32 %v31, %v134
  %v136 = vpop.f32.mrf.mxu0
  %137 = vmatprep.mubr.f32.mxu0 0.0
  %138 = vmatmul.mubr.f32.gmra.mxu0 %v44
  %v139 = vpop.f32.mrf.mxu0
  %v140 = vadd.f32 %v31, %v139
  %v141 = vpop.f32.mrf.mxu0
  %142 = vmatprep.mubr.f32.mxu0 0.0
  %143 = vmatmul.mubr.f32.gmra.mxu0 %v47
  %v144 = vpop.f32.mrf.mxu0
  %v145 = vadd.f32 %v31, %v144
  %v146 = vpop.f32.mrf.mxu0
  %147 = vmatprep.mubr.f32.mxu0 0.0
  %148 = vmatmul.mubr.f32.gmra.mxu0 %v50
  %v149 = vpop.f32.mrf.mxu0
  %v150 = vadd.f32 %v31, %v149
  %v151 = vpop.f32.mrf.mxu0
  %152 = vmatprep.mubr.f32.mxu0 0.0
  %153 = vmatmul.mubr.f32.gmra.mxu0 %v53
  %v154 = vpop.f32.mrf.mxu0
  %v155 = vadd.f32 %v31, %v154
  %v156 = vpop.f32.mrf.mxu0
  %157 = vmatprep.mubr.f32.mxu0 0.0
  %158 = vmatmul.mubr.f32.gmra.mxu0 %v56
  %v159 = vpop.f32.mrf.mxu0
  %v160 = vadd.f32 %v31, %v159
  %v161 = vpop.f32.mrf.mxu0
  %162 = vdwg.mxu0
  %163 = vst [vmem:[%s3] sm:$0xff] %v125
  %164 = vst [vmem:[%s3 + $0x8] sm:$0xff] %v130
  %165 = vst [vmem:[%s3 + $0x10] sm:$0xff] %v135
  %166 = vst [vmem:[%s3 + $0x18] sm:$0xff] %v140
  %167 = vst [vmem:[%s3 + $0x20] sm:$0xff] %v145
  %168 = vst [vmem:[%s3 + $0x28] sm:$0xff] %v150
  %169 = vst [vmem:[%s3 + $0x30] sm:$0xff] %v155
  %170 = vst [vmem:[%s3 + $0x38] sm:$0xff] %v160
  // Predicated region
  $region14: #{user_item_encoder_forward.9} parent=0 // pred_check
    _
  $region15: #{user_item_encoder_forward.9} parent=0 // pred_check_branch
    %172 = sbr.rel (0) target = $region17
  $region16: #{user_item_encoder_forward.9} parent=0 // pred_region
    _
  $region17: #{user_item_encoder_forward.9} parent=0 // pred_fallthru
    _
  // Predicated region
  $region18: #{user_item_encoder_forward.9} parent=0 // pred_check
    _
  $region19: #{user_item_encoder_forward.9} parent=0 // pred_check_branch
    %174 = sbr.rel (0) target = $region21
  $region20: #{user_item_encoder_forward.9} parent=0 // pred_region
    _
  $region21: #{user_item_encoder_forward.9} parent=0 // pred_fallthru
    _

// kernel: user_item_encoder_forward.6
$region0: #{user_item_encoder_forward.6}
  #allocation0 [shape = 'u32[]', space=smem, size = 0x4, offset = 0x4, fixed_abs, tag = 'smem constant byte address 0x4 - core index']
  #allocation1 [shape = 'u32[144,128]{1,0:T(1,128)}', space=vmem, size = 0x12000, scoped, tag = 'internal scratch']
  #allocation2 [shape = 'f32[2,8,32]{2,1,0:T(8,128)}', space=vmem, size = 0x2000, scoped, tag = 'scratch operand']
  #allocation3 [shape = 'f32[2,8,32]{2,1,0:T(8,128)}', space=vmem, size = 0x2000, scoped, tag = 'scratch operand']
  %s0 = inlined_call_operand.vmem [shape: f32[6,4,8,96], index: 0, kind: input, shape index: {}, may-alias: {0,1}]
  %s1 = inlined_call_operand.vmem [shape: f32[6,4,8,96], index: 1, kind: input, shape index: {}, may-alias: {0,1}]
  %s2 = inlined_call_operand.vmem [shape: f32[2,32,96], index: 2, kind: input, shape index: {}]
  %s3 = inlined_call_operand.vmem [shape: f32[2,32,96], index: 3, kind: input, shape index: {}]
  %s4 = inlined_call_operand.vmem [shape: f32[2,1,32], index: 4, kind: input, shape index: {}]
  %s5 = inlined_call_operand.vmem [shape: f32[2,1,32], index: 5, kind: input, shape index: {}]
  %s6 = inlined_call_operand.vmem [shape: f32[2,4,8,32], index: 6, kind: output, shape index: {0}]
  %s7 = inlined_call_operand.vmem [shape: f32[2,4,8,32], index: 7, kind: output, shape index: {1}]
  %8 = xla_tuple %s6, %s7
  %s9 = sld [smem:[#allocation0]]
  $region46: #{user_item_encoder_forward.6} parent=0
    _
  %s11 = ssub.s32 1, %s9
  %s12 = scalar_select 0, %s11, %s9
  // Predicated region
  $region2: #{user_item_encoder_forward.6} parent=0 // pred_check
    _
  $region3: #{user_item_encoder_forward.6} parent=0 // pred_check_branch
    %14 = sbr.rel (0) target = $region5
  $region4: #{user_item_encoder_forward.6} parent=0 // pred_region
    _
  $region5: #{user_item_encoder_forward.6} parent=0 // pred_fallthru
    _
  // Predicated region
  $region6: #{user_item_encoder_forward.6} parent=0 // pred_check
    _
  $region7: #{user_item_encoder_forward.6} parent=0 // pred_check_branch
    %16 = sbr.rel (0) target = $region9
  $region8: #{user_item_encoder_forward.6} parent=0 // pred_region
    %s17 = ssub.s32 0, 0
    %s18 = smul.u32 4, %s17
    %p19 = scmp.lt.s32.totalorder %s18, 3
    %s20 = scalar_select %p19, %s18, 3
    %s21 = sadd.s32 %s20, 8
    %s22 = smul.addr %s21, 8
    %s23 = scalar_lea.vmem %s1, %s22
    %s24 = ssub.s32 0, 0
    %s25 = smul.u32 4, %s24
  $region9: #{user_item_encoder_forward.6} parent=0 // pred_fallthru
    _
  // Predicated region
  $region10: #{user_item_encoder_forward.6} parent=0 // pred_check
    _
  $region11: #{user_item_encoder_forward.6} parent=0 // pred_check_branch
    %27 = sbr.rel (0) target = $region13
  $region12: #{user_item_encoder_forward.6} parent=0 // pred_region
    _
  $region13: #{user_item_encoder_forward.6} parent=0 // pred_fallthru
    _
  // Predicated region
  $region14: #{user_item_encoder_forward.6} parent=0 // pred_check
    _
  $region15: #{user_item_encoder_forward.6} parent=0 // pred_check_branch
    %29 = sbr.rel (0) target = $region17
  $region16: #{user_item_encoder_forward.6} parent=0 // pred_region
    _
  $region17: #{user_item_encoder_forward.6} parent=0 // pred_fallthru
    _
  // Predicated region
  $region18: #{user_item_encoder_forward.6} parent=0 // pred_check
    _
  $region19: #{user_item_encoder_forward.6} parent=0 // pred_check_branch
    %31 = sbr.rel (0) target = $region21
  $region20: #{user_item_encoder_forward.6} parent=0 // pred_region
    _
  $region21: #{user_item_encoder_forward.6} parent=0 // pred_fallthru
    _
  // Predicated region
  $region22: #{user_item_encoder_forward.6} parent=0 // pred_check
    _
  $region23: #{user_item_encoder_forward.6} parent=0 // pred_check_branch
    %33 = sbr.rel (0) target = $region25
  $region24: #{user_item_encoder_forward.6} parent=0 // pred_region
    _
  $region25: #{user_item_encoder_forward.6} parent=0 // pred_fallthru
    _
  %s34 = ssub.s32 0, 0
  %s35 = smul.u32 4, %s34
  %p36 = scmp.lt.s32.totalorder %s35, 3
  %s37 = scalar_select %p36, %s35, 3
  %s38 = sadd.s32 %s37, 8
  %s39 = smul.addr %s38, 8
  %s40 = scalar_lea.vmem %s1, %s39
  %s41 = ssub.s32 0, 0
  %s42 = smul.u32 4, %s41
  %p43 = scmp.lt.s32.totalorder %s42, 3
  %s44 = scalar_select %p43, %s42, 3
  %s45 = smul.addr %s44, 8
  %s46 = scalar_lea.vmem %s7, %s45
  %s47 = ssub.s32 0, 0
  %s48 = smul.u32 4, %s47
  %p49 = scmp.lt.s32.totalorder %s48, 3
  %s50 = scalar_select %p49, %s48, 3
  %s51 = sadd.s32 %s50, 8
  %s52 = smul.addr %s51, 8
  %s53 = scalar_lea.vmem %s1, %s52
  %s54 = ssub.s32 0, 0
  %s55 = smul.u32 4, %s54
  %s56 = ssub.s32 0, 0
  %s57 = smul.u32 4, %s56
  %p58 = scmp.lt.s32.totalorder %s57, 3
  %s59 = scalar_select %p58, %s57, 3
  %s60 = smul.addr %s59, 8
  %s61 = scalar_lea.vmem %s7, %s60
  %s62 = ssub.s32 0, 0
  %s63 = smul.u32 4, %s62
  %p64 = scmp.eq.s32.totalorder 0, 0
  // Predicated region
  $region26: #{user_item_encoder_forward.6} parent=0 // pred_check
    %p65 = pneg %p64
  $region27: #{user_item_encoder_forward.6} parent=0 // pred_check_branch
    %67 = sbr.rel (%p65) target = $region29
  $region28: #{user_item_encoder_forward.6} parent=0 // pred_region
    %vm68 = vcmask 261120
    %69 = vst.msk [vmem:[#allocation2] sm:$0xff] %vm68, 0.0
    %70 = vst.msk [vmem:[#allocation2 + $0x8] sm:$0xff] %vm68, 0.0
    %71 = vst.msk [vmem:[#allocation3] sm:$0xff] %vm68, 0.0
    %72 = vst.msk [vmem:[#allocation3 + $0x8] sm:$0xff] %vm68, 0.0
  $region29: #{user_item_encoder_forward.6} parent=0 // pred_fallthru
    _
  %v73 = vld [vmem:[#allocation2] sm:$0xff]
  %v74 = vld [vmem:[%s2] sm:$0xff]
  %v75 = vld [vmem:[%s2 + $0x8] sm:$0xff]
  %v76 = vld [vmem:[%s2 + $0x10] sm:$0xff]
  %v77 = vld [vmem:[%s2 + $0x18] sm:$0xff]
  %v78 = vld [vmem:[%s4] sm:$0x1]
  %v79 = vld [vmem:[%s0] sm:$0xff]
  %vm80 = vcmask 261120
  %v82 = vsel %vm80, %v73, 0
  %84 = vmatprep.subr.mxu0 0.0
  %85 = vmatpush1.msra.mxu0 0.0
  %86 = vmatprep.subr.mxu0 0.0
  %87 = vmatpush1.msra.mxu0 0.0
  %88 = vmatprep.subr.mxu0 0.0
  %89 = vmatpush1.msra.mxu0 0.0
  %90 = vmatprep.subr.mxu0 0.0
  %91 = vmatpush1.msra.mxu0 0.0
  %92 = vmatprep.subr.mxu0 0.0
  %93 = vmatpush1.msra.mxu0 0.0
  %94 = vmatprep.subr.mxu0 0.0
  %95 = vmatpush1.msra.mxu0 0.0
  %96 = vmatprep.subr.mxu0 0.0
  %97 = vmatpush1.msra.mxu0 0.0
  %98 = vmatprep.subr.mxu0 0.0
  %99 = vmatpush1.msra.mxu0 0.0
  %100 = vmatprep.subr.mxu0 0.0
  %101 = vmatpush1.msra.mxu0 0.0
  %102 = vmatprep.subr.mxu0 0.0
  %103 = vmatpush1.msra.mxu0 0.0
  %104 = vmatprep.subr.mxu0 0.0
  %105 = vmatpush1.msra.mxu0 0.0
  %106 = vmatprep.subr.mxu0 0.0
  %107 = vmatpush1.msra.mxu0 0.0
  %108 = vmatprep.subr.mxu0 0.0
  %109 = vmatpush1.msra.mxu0 %v77
  %110 = vmatprep.subr.mxu0 0.0
  %111 = vmatpush1.msra.mxu0 %v76
  %112 = vmatprep.subr.mxu0 0.0
  %113 = vmatpush1.msra.mxu0 %v75
  %114 = vmatprep.subr.mxu0 0.0
  %115 = vmatpush1.msra.mxu0 %v74
  %116 = vmatprep.subr.mxu0 0.0
  %117 = vmatpush2.msra.mxu0 0.0
  %118 = vmatprep.subr.mxu0 0.0
  %119 = vmatpush2.msra.mxu0 0.0
  %120 = vmatprep.subr.mxu0 0.0
  %121 = vmatpush2.msra.mxu0 0.0
  %122 = vmatprep.subr.mxu0 0.0
  %123 = vmatpush2.msra.mxu0 0.0
  %124 = vmatprep.subr.mxu0 0.0
  %125 = vmatpush2.msra.mxu0 0.0
  %126 = vmatprep.subr.mxu0 0.0
  %127 = vmatpush2.msra.mxu0 0.0
  %128 = vmatprep.subr.mxu0 0.0
  %129 = vmatpush2.msra.mxu0 0.0
  %130 = vmatprep.subr.mxu0 0.0
  %131 = vmatpush2.msra.mxu0 0.0
  %132 = vmatprep.subr.mxu0 0.0
  %133 = vmatpush2.msra.mxu0 0.0
  %134 = vmatprep.subr.mxu0 0.0
  %135 = vmatpush2.msra.mxu0 0.0
  %136 = vmatprep.subr.mxu0 0.0
  %137 = vmatpush2.msra.mxu0 0.0
  %138 = vmatprep.subr.mxu0 0.0
  %139 = vmatpush2.msra.mxu0 0.0
  %140 = vmatprep.subr.mxu0 0.0
  %141 = vmatpush2.msra.mxu0 0.0
  %142 = vmatprep.subr.mxu0 0.0
  %143 = vmatpush2.msra.mxu0 0.0
  %144 = vmatprep.subr.mxu0 0.0
  %145 = vmatpush2.msra.mxu0 0.0
  %146 = vmatprep.subr.mxu0 0.0
  %147 = vmatpush2.msra.mxu0 0.0
  %148 = vmatprep.mubr.f32.mxu0 0.0
  %149 = vmatmul.mubr.f32.gmra.mxu0 %v82
  %v150 = vpop.f32.mrf.mxu0
  %v151 = vadd.f32 0.0, %v150
  %v152 = vpop.f32.mrf.mxu0
  %153 = vdwg.mxu0
  %v154 = vadd.f32 %v79, %v151
  %v155 = vxor.u32 %v154, 2147483648
  %v156 = vmul.f32 %v155, 1.442695
  %v157 = vpow.pop %v156
  %v158 = vadd.f32 %v157, 1.0
  %v159 = vrcp.pop %v158
  %v160 = vmul.f32 1.0, %v159
  %v162 = vlaneseq
  %v163 = vshrl.u32 %v162, 7
  %v164 = vsub.s32 0, %v163
  %v165 = vrot.slane %v78, %v164
  %166 = vrot.lane.b32.xlu0 %v165, 64
  %v167 = vpop.permute.xlu0 %166
  %v169 = vadd.f32 %v151, %v167
  %171 = vrot.lane.b32.xlu0 %v169, 64
  %v172 = vpop.permute.xlu0 %171
  %v174 = vmul.f32 %v160, %v172
  %176 = vrot.lane.b32.xlu0 %v174, 64
  %v177 = vpop.permute.xlu0 %176
  %v179 = vadd.f32 %v79, %v177
  %v180 = vtanh.pop %v179
  %v181 = vsub.f32 1.0, %v160
  %183 = vrot.lane.b32.xlu0 %v180, 96
  %v184 = vpop.permute.xlu0 %183
  %v186 = vmul.f32 %v181, %v184
  %187 = vrot.lane.b32.xlu0 %v73, 32
  %v188 = vpop.permute.xlu0 %187
  %v190 = vmul.f32 %v160, %v188
  %v191 = vadd.f32 %v186, %v190
  %193 = vrot.lane.b32.xlu0 %v191, 96
  %v194 = vpop.permute.xlu0 %193
  %196 = vst.msk [vmem:[%s6] sm:$0xff] %vm80, %v194
  %s197 = scalar_lea.vmem %s0, 8
  %v198 = vld [vmem:[%s197] sm:$0xff]
  %v199 = vsel %vm80, %v194, 0
  %201 = vmatprep.subr.mxu0 0.0
  %202 = vmatpush1.msra.mxu0 0.0
  %203 = vmatprep.subr.mxu0 0.0
  %204 = vmatpush1.msra.mxu0 0.0
  %205 = vmatprep.subr.mxu0 0.0
  %206 = vmatpush1.msra.mxu0 0.0
  %207 = vmatprep.subr.mxu0 0.0
  %208 = vmatpush1.msra.mxu0 0.0
  %209 = vmatprep.subr.mxu0 0.0
  %210 = vmatpush1.msra.mxu0 0.0
  %211 = vmatprep.subr.mxu0 0.0
  %212 = vmatpush1.msra.mxu0 0.0
  %213 = vmatprep.subr.mxu0 0.0
  %214 = vmatpush1.msra.mxu0 0.0
  %215 = vmatprep.subr.mxu0 0.0
  %216 = vmatpush1.msra.mxu0 0.0
  %217 = vmatprep.subr.mxu0 0.0
  %218 = vmatpush1.msra.mxu0 0.0
  %219 = vmatprep.subr.mxu0 0.0
  %220 = vmatpush1.msra.mxu0 0.0
  %221 = vmatprep.subr.mxu0 0.0
  %222 = vmatpush1.msra.mxu0 0.0
  %223 = vmatprep.subr.mxu0 0.0
  %224 = vmatpush1.msra.mxu0 0.0
  %225 = vmatprep.subr.mxu0 0.0
  %226 = vmatpush1.msra.mxu0 %v77
  %227 = vmatprep.subr.mxu0 0.0
  %228 = vmatpush1.msra.mxu0 %v76
  %229 = vmatprep.subr.mxu0 0.0
  %230 = vmatpush1.msra.mxu0 %v75
  %231 = vmatprep.subr.mxu0 0.0
  %232 = vmatpush1.msra.mxu0 %v74
  %233 = vmatprep.subr.mxu0 0.0
  %234 = vmatpush2.msra.mxu0 0.0
  %235 = vmatprep.subr.mxu0 0.0
  %236 = vmatpush2.msra.mxu0 0.0
  %237 = vmatprep.subr.mxu0 0.0
  %238 = vmatpush2.msra.mxu0 0.0
  %239 = vmatprep.subr.mxu0 0.0
  %240 = vmatpush2.msra.mxu0 0.0
  %241 = vmatprep.subr.mxu0 0.0
  %242 = vmatpush2.msra.mxu0 0.0
  %243 = vmatprep.subr.mxu0 0.0
  %244 = vmatpush2.msra.mxu0 0.0
  %245 = vmatprep.subr.mxu0 0.0
  %246 = vmatpush2.msra.mxu0 0.0
  %247 = vmatprep.subr.mxu0 0.0
  %248 = vmatpush2.msra.mxu0 0.0
  %249 = vmatprep.subr.mxu0 0.0
  %250 = vmatpush2.msra.mxu0 0.0
  %251 = vmatprep.subr.mxu0 0.0
  %252 = vmatpush2.msra.mxu0 0.0
  %253 = vmatprep.subr.mxu0 0.0
  %254 = vmatpush2.msra.mxu0 0.0
  %255 = vmatprep.subr.mxu0 0.0
  %256 = vmatpush2.msra.mxu0 0.0
  %257 = vmatprep.subr.mxu0 0.0
  %258 = vmatpush2.msra.mxu0 0.0
  %259 = vmatprep.subr.mxu0 0.0
  %260 = vmatpush2.msra.mxu0 0.0
  %261 = vmatprep.subr.mxu0 0.0
  %262 = vmatpush2.msra.mxu0 0.0
  %263 = vmatprep.subr.mxu0 0.0
  %264 = vmatpush2.msra.mxu0 0.0
  %265 = vmatprep.mubr.f32.mxu0 0.0
  %266 = vmatmul.mubr.f32.gmra.mxu0 %v199
  %v267 = vpop.f32.mrf.mxu0
  %v268 = vadd.f32 0.0, %v267
  %v269 = vpop.f32.mrf.mxu0
  %270 = vdwg.mxu0
  %v271 = vadd.f32 %v198, %v268
  %v272 = vxor.u32 %v271, 2147483648
  %v273 = vmul.f32 %v272, 1.442695
  %v274 = vpow.pop %v273
  %v275 = vadd.f32 %v274, 1.0
  %v276 = vrcp.pop %v275
  %v277 = vmul.f32 1.0, %v276
  %v278 = vadd.f32 %v268, %v167
  %280 = vrot.lane.b32.xlu0 %v278, 64
  %v281 = vpop.permute.xlu0 %280
  %v283 = vmul.f32 %v277, %v281
  %285 = vrot.lane.b32.xlu0 %v283, 64
  %v286 = vpop.permute.xlu0 %285
  %v288 = vadd.f32 %v198, %v286
  %v289 = vtanh.pop %v288
  %v290 = vsub.f32 1.0, %v277
  %292 = vrot.lane.b32.xlu0 %v289, 96
  %v293 = vpop.permute.xlu0 %292
  %v295 = vmul.f32 %v290, %v293
  %v296 = vmul.f32 %v277, %v191
  %v297 = vadd.f32 %v295, %v296
  %299 = vrot.lane.b32.xlu0 %v297, 96
  %v300 = vpop.permute.xlu0 %299
  %s302 = scalar_lea.vmem %s6, 8
  %303 = vst.msk [vmem:[%s302] sm:$0xff] %vm80, %v300
  %s304 = scalar_lea.vmem %s0, 16
  %v305 = vld [vmem:[%s304] sm:$0xff]
  %v306 = vsel %vm80, %v300, 0
  %308 = vmatprep.subr.mxu0 0.0
  %309 = vmatpush1.msra.mxu0 0.0
  %310 = vmatprep.subr.mxu0 0.0
  %311 = vmatpush1.msra.mxu0 0.0
  %312 = vmatprep.subr.mxu0 0.0
  %313 = vmatpush1.msra.mxu0 0.0
  %314 = vmatprep.subr.mxu0 0.0
  %315 = vmatpush1.msra.mxu0 0.0
  %316 = vmatprep.subr.mxu0 0.0
  %317 = vmatpush1.msra.mxu0 0.0
  %318 = vmatprep.subr.mxu0 0.0
  %319 = vmatpush1.msra.mxu0 0.0
  %320 = vmatprep.subr.mxu0 0.0
  %321 = vmatpush1.msra.mxu0 0.0
  %322 = vmatprep.subr.mxu0 0.0
  %323 = vmatpush1.msra.mxu0 0.0
  %324 = vmatprep.subr.mxu0 0.0
  %325 = vmatpush1.msra.mxu0 0.0
  %326 = vmatprep.subr.mxu0 0.0
  %327 = vmatpush1.msra.mxu0 0.0
  %328 = vmatprep.subr.mxu0 0.0
  %329 = vmatpush1.msra.mxu0 0.0
  %330 = vmatprep.subr.mxu0 0.0
  %331 = vmatpush1.msra.mxu0 0.0
  %332 = vmatprep.subr.mxu0 0.0
  %333 = vmatpush1.msra.mxu0 %v77
  %334 = vmatprep.subr.mxu0 0.0
  %335 = vmatpush1.msra.mxu0 %v76
  %336 = vmatprep.subr.mxu0 0.0
  %337 = vmatpush1.msra.mxu0 %v75
  %338 = vmatprep.subr.mxu0 0.0
  %339 = vmatpush1.msra.mxu0 %v74
  %340 = vmatprep.subr.mxu0 0.0
  %341 = vmatpush2.msra.mxu0 0.0
  %342 = vmatprep.subr.mxu0 0.0
  %343 = vmatpush2.msra.mxu0 0.0
  %344 = vmatprep.subr.mxu0 0.0
  %345 = vmatpush2.msra.mxu0 0.0
  %346 = vmatprep.subr.mxu0 0.0
  %347 = vmatpush2.msra.mxu0 0.0
  %348 = vmatprep.subr.mxu0 0.0
  %349 = vmatpush2.msra.mxu0 0.0
  %350 = vmatprep.subr.mxu0 0.0
  %351 = vmatpush2.msra.mxu0 0.0
  %352 = vmatprep.subr.mxu0 0.0
  %353 = vmatpush2.msra.mxu0 0.0
  %354 = vmatprep.subr.mxu0 0.0
  %355 = vmatpush2.msra.mxu0 0.0
  %356 = vmatprep.subr.mxu0 0.0
  %357 = vmatpush2.msra.mxu0 0.0
  %358 = vmatprep.subr.mxu0 0.0
  %359 = vmatpush2.msra.mxu0 0.0
  %360 = vmatprep.subr.mxu0 0.0
  %361 = vmatpush2.msra.mxu0 0.0
  %362 = vmatprep.subr.mxu0 0.0
  %363 = vmatpush2.msra.mxu0 0.0
  %364 = vmatprep.subr.mxu0 0.0
  %365 = vmatpush2.msra.mxu0 0.0
  %366 = vmatprep.subr.mxu0 0.0
  %367 = vmatpush2.msra.mxu0 0.0
  %368 = vmatprep.subr.mxu0 0.0
  %369 = vmatpush2.msra.mxu0 0.0
  %370 = vmatprep.subr.mxu0 0.0
  %371 = vmatpush2.msra.mxu0 0.0
  %372 = vmatprep.mubr.f32.mxu0 0.0
  %373 = vmatmul.mubr.f32.gmra.mxu0 %v306
  %v374 = vpop.f32.mrf.mxu0
  %v375 = vadd.f32 0.0, %v374
  %v376 = vpop.f32.mrf.mxu0
  %377 = vdwg.mxu0
  %v378 = vadd.f32 %v305, %v375
  %v379 = vxor.u32 %v378, 2147483648
  %v380 = vmul.f32 %v379, 1.442695
  %v381 = vpow.pop %v380
  %v382 = vadd.f32 %v381, 1.0
  %v383 = vrcp.pop %v382
  %v384 = vmul.f32 1.0, %v383
  %v385 = vadd.f32 %v375, %v167
  %387 = vrot.lane.b32.xlu0 %v385, 64
  %v388 = vpop.permute.xlu0 %387
  %v390 = vmul.f32 %v384, %v388
  %392 = vrot.lane.b32.xlu0 %v390, 64
  %v393 = vpop.permute.xlu0 %392
  %v395 = vadd.f32 %v305, %v393
  %v396 = vtanh.pop %v395
  %v397 = vsub.f32 1.0, %v384
  %399 = vrot.lane.b32.xlu0 %v396, 96
  %v400 = vpop.permute.xlu0 %399
  %v402 = vmul.f32 %v397, %v400
  %v403 = vmul.f32 %v384, %v297
  %v404 = vadd.f32 %v402, %v403
  %406 = vrot.lane.b32.xlu0 %v404, 96
  %v407 = vpop.permute.xlu0 %406
  %s409 = scalar_lea.vmem %s6, 16
  %410 = vst.msk [vmem:[%s409] sm:$0xff] %vm80, %v407
  %s411 = scalar_lea.vmem %s0, 24
  %v412 = vld [vmem:[%s411] sm:$0xff]
  %v413 = vsel %vm80, %v407, 0
  %415 = vmatprep.subr.mxu0 0.0
  %416 = vmatpush1.msra.mxu0 0.0
  %417 = vmatprep.subr.mxu0 0.0
  %418 = vmatpush1.msra.mxu0 0.0
  %419 = vmatprep.subr.mxu0 0.0
  %420 = vmatpush1.msra.mxu0 0.0
  %421 = vmatprep.subr.mxu0 0.0
  %422 = vmatpush1.msra.mxu0 0.0
  %423 = vmatprep.subr.mxu0 0.0
  %424 = vmatpush1.msra.mxu0 0.0
  %425 = vmatprep.subr.mxu0 0.0
  %426 = vmatpush1.msra.mxu0 0.0
  %427 = vmatprep.subr.mxu0 0.0
  %428 = vmatpush1.msra.mxu0 0.0
  %429 = vmatprep.subr.mxu0 0.0
  %430 = vmatpush1.msra.mxu0 0.0
  %431 = vmatprep.subr.mxu0 0.0
  %432 = vmatpush1.msra.mxu0 0.0
  %433 = vmatprep.subr.mxu0 0.0
  %434 = vmatpush1.msra.mxu0 0.0
  %435 = vmatprep.subr.mxu0 0.0
  %436 = vmatpush1.msra.mxu0 0.0
  %437 = vmatprep.subr.mxu0 0.0
  %438 = vmatpush1.msra.mxu0 0.0
  %439 = vmatprep.subr.mxu0 0.0
  %440 = vmatpush1.msra.mxu0 %v77
  %441 = vmatprep.subr.mxu0 0.0
  %442 = vmatpush1.msra.mxu0 %v76
  %443 = vmatprep.subr.mxu0 0.0
  %444 = vmatpush1.msra.mxu0 %v75
  %445 = vmatprep.subr.mxu0 0.0
  %446 = vmatpush1.msra.mxu0 %v74
  %447 = vmatprep.subr.mxu0 0.0
  %448 = vmatpush2.msra.mxu0 0.0
  %449 = vmatprep.subr.mxu0 0.0
  %450 = vmatpush2.msra.mxu0 0.0
  %451 = vmatprep.subr.mxu0 0.0
  %452 = vmatpush2.msra.mxu0 0.0
  %453 = vmatprep.subr.mxu0 0.0
  %454 = vmatpush2.msra.mxu0 0.0
  %455 = vmatprep.subr.mxu0 0.0
  %456 = vmatpush2.msra.mxu0 0.0
  %457 = vmatprep.subr.mxu0 0.0
  %458 = vmatpush2.msra.mxu0 0.0
  %459 = vmatprep.subr.mxu0 0.0
  %460 = vmatpush2.msra.mxu0 0.0
  %461 = vmatprep.subr.mxu0 0.0
  %462 = vmatpush2.msra.mxu0 0.0
  %463 = vmatprep.subr.mxu0 0.0
  %464 = vmatpush2.msra.mxu0 0.0
  %465 = vmatprep.subr.mxu0 0.0
  %466 = vmatpush2.msra.mxu0 0.0
  %467 = vmatprep.subr.mxu0 0.0
  %468 = vmatpush2.msra.mxu0 0.0
  %469 = vmatprep.subr.mxu0 0.0
  %470 = vmatpush2.msra.mxu0 0.0
  %471 = vmatprep.subr.mxu0 0.0
  %472 = vmatpush2.msra.mxu0 0.0
  %473 = vmatprep.subr.mxu0 0.0
  %474 = vmatpush2.msra.mxu0 0.0
  %475 = vmatprep.subr.mxu0 0.0
  %476 = vmatpush2.msra.mxu0 0.0
  %477 = vmatprep.subr.mxu0 0.0
  %478 = vmatpush2.msra.mxu0 0.0
  %479 = vmatprep.mubr.f32.mxu0 0.0
  %480 = vmatmul.mubr.f32.gmra.mxu0 %v413
  %v481 = vpop.f32.mrf.mxu0
  %v482 = vadd.f32 0.0, %v481
  %v483 = vpop.f32.mrf.mxu0
  %484 = vdwg.mxu0
  %v485 = vadd.f32 %v412, %v482
  %v486 = vxor.u32 %v485, 2147483648
  %v487 = vmul.f32 %v486, 1.442695
  %v488 = vpow.pop %v487
  %v489 = vadd.f32 %v488, 1.0
  %v490 = vrcp.pop %v489
  %v491 = vmul.f32 1.0, %v490
  %v492 = vadd.f32 %v482, %v167
  %494 = vrot.lane.b32.xlu0 %v492, 64
  %v495 = vpop.permute.xlu0 %494
  %v497 = vmul.f32 %v491, %v495
  %499 = vrot.lane.b32.xlu0 %v497, 64
  %v500 = vpop.permute.xlu0 %499
  %v502 = vadd.f32 %v412, %v500
  %v503 = vtanh.pop %v502
  %v504 = vsub.f32 1.0, %v491
  %506 = vrot.lane.b32.xlu0 %v503, 96
  %v507 = vpop.permute.xlu0 %506
  %v509 = vmul.f32 %v504, %v507
  %v510 = vmul.f32 %v491, %v404
  %v511 = vadd.f32 %v509, %v510
  %513 = vrot.lane.b32.xlu0 %v511, 96
  %v514 = vpop.permute.xlu0 %513
  %s516 = scalar_lea.vmem %s6, 24
  %517 = vst.msk [vmem:[%s516] sm:$0xff] %vm80, %v514
  %518 = vst.msk [vmem:[#allocation2] sm:$0xff] %vm80, %v514
  %s519 = scalar_lea.vmem [#allocation2], 8
  %v520 = vld [vmem:[%s519] sm:$0xff]
  %s521 = scalar_lea.vmem %s2, 32
  %v522 = vld [vmem:[%s521] sm:$0xff]
  %v523 = vld [vmem:[%s521 + $0x8] sm:$0xff]
  %v524 = vld [vmem:[%s521 + $0x10] sm:$0xff]
  %v525 = vld [vmem:[%s521 + $0x18] sm:$0xff]
  %s526 = scalar_lea.vmem %s4, 1
  %v527 = vld [vmem:[%s526] sm:$0x1]
  %s528 = scalar_lea.vmem %s0, 32
  %v529 = vld [vmem:[%s528] sm:$0xff]
  %v531 = vsel %vm80, %v520, 0
  %533 = vmatprep.subr.mxu0 0.0
  %534 = vmatpush1.msra.mxu0 0.0
  %535 = vmatprep.subr.mxu0 0.0
  %536 = vmatpush1.msra.mxu0 0.0
  %537 = vmatprep.subr.mxu0 0.0
  %538 = vmatpush1.msra.mxu0 0.0
  %539 = vmatprep.subr.mxu0 0.0
  %540 = vmatpush1.msra.mxu0 0.0
  %541 = vmatprep.subr.mxu0 0.0
  %542 = vmatpush1.msra.mxu0 0.0
  %543 = vmatprep.subr.mxu0 0.0
  %544 = vmatpush1.msra.mxu0 0.0
  %545 = vmatprep.subr.mxu0 0.0
  %546 = vmatpush1.msra.mxu0 0.0
  %547 = vmatprep.subr.mxu0 0.0
  %548 = vmatpush1.msra.mxu0 0.0
  %549 = vmatprep.subr.mxu0 0.0
  %550 = vmatpush1.msra.mxu0 0.0
  %551 = vmatprep.subr.mxu0 0.0
  %552 = vmatpush1.msra.mxu0 0.0
  %553 = vmatprep.subr.mxu0 0.0
  %554 = vmatpush1.msra.mxu0 0.0
  %555 = vmatprep.subr.mxu0 0.0
  %556 = vmatpush1.msra.mxu0 0.0
  %557 = vmatprep.subr.mxu0 0.0
  %558 = vmatpush1.msra.mxu0 %v525
  %559 = vmatprep.subr.mxu0 0.0
  %560 = vmatpush1.msra.mxu0 %v524
  %561 = vmatprep.subr.mxu0 0.0
  %562 = vmatpush1.msra.mxu0 %v523
  %563 = vmatprep.subr.mxu0 0.0
  %564 = vmatpush1.msra.mxu0 %v522
  %565 = vmatprep.subr.mxu0 0.0
  %566 = vmatpush2.msra.mxu0 0.0
  %567 = vmatprep.subr.mxu0 0.0
  %568 = vmatpush2.msra.mxu0 0.0
  %569 = vmatprep.subr.mxu0 0.0
  %570 = vmatpush2.msra.mxu0 0.0
  %571 = vmatprep.subr.mxu0 0.0
  %572 = vmatpush2.msra.mxu0 0.0
  %573 = vmatprep.subr.mxu0 0.0
  %574 = vmatpush2.msra.mxu0 0.0
  %575 = vmatprep.subr.mxu0 0.0
  %576 = vmatpush2.msra.mxu0 0.0
  %577 = vmatprep.subr.mxu0 0.0
  %578 = vmatpush2.msra.mxu0 0.0
  %579 = vmatprep.subr.mxu0 0.0
  %580 = vmatpush2.msra.mxu0 0.0
  %581 = vmatprep.subr.mxu0 0.0
  %582 = vmatpush2.msra.mxu0 0.0
  %583 = vmatprep.subr.mxu0 0.0
  %584 = vmatpush2.msra.mxu0 0.0
  %585 = vmatprep.subr.mxu0 0.0
  %586 = vmatpush2.msra.mxu0 0.0
  %587 = vmatprep.subr.mxu0 0.0
  %588 = vmatpush2.msra.mxu0 0.0
  %589 = vmatprep.subr.mxu0 0.0
  %590 = vmatpush2.msra.mxu0 0.0
  %591 = vmatprep.subr.mxu0 0.0
  %592 = vmatpush2.msra.mxu0 0.0
  %593 = vmatprep.subr.mxu0 0.0
  %594 = vmatpush2.msra.mxu0 0.0
  %595 = vmatprep.subr.mxu0 0.0
  %596 = vmatpush2.msra.mxu0 0.0
  %597 = vmatprep.mubr.f32.mxu0 0.0
  %598 = vmatmul.mubr.f32.gmra.mxu0 %v531
  %v599 = vpop.f32.mrf.mxu0
  %v600 = vadd.f32 0.0, %v599
  %v601 = vpop.f32.mrf.mxu0
  %602 = vdwg.mxu0
  %v603 = vadd.f32 %v529, %v600
  %v604 = vxor.u32 %v603, 2147483648
  %v605 = vmul.f32 %v604, 1.442695
  %v606 = vpow.pop %v605
  %v607 = vadd.f32 %v606, 1.0
  %v608 = vrcp.pop %v607
  %v609 = vmul.f32 1.0, %v608
  %v611 = vlaneseq
  %v612 = vshrl.u32 %v611, 7
  %v613 = vsub.s32 0, %v612
  %v614 = vrot.slane %v527, %v613
  %615 = vrot.lane.b32.xlu0 %v614, 64
  %v616 = vpop.permute.xlu0 %615
  %v618 = vadd.f32 %v600, %v616
  %620 = vrot.lane.b32.xlu0 %v618, 64
  %v621 = vpop.permute.xlu0 %620
  %v623 = vmul.f32 %v609, %v621
  %625 = vrot.lane.b32.xlu0 %v623, 64
  %v626 = vpop.permute.xlu0 %625
  %v628 = vadd.f32 %v529, %v626
  %v629 = vtanh.pop %v628
  %v630 = vsub.f32 1.0, %v609
  %632 = vrot.lane.b32.xlu0 %v629, 96
  %v633 = vpop.permute.xlu0 %632
  %v635 = vmul.f32 %v630, %v633
  %636 = vrot.lane.b32.xlu0 %v520, 32
  %v637 = vpop.permute.xlu0 %636
  %v639 = vmul.f32 %v609, %v637
  %v640 = vadd.f32 %v635, %v639
  %642 = vrot.lane.b32.xlu0 %v640, 96
  %v643 = vpop.permute.xlu0 %642
  %s645 = scalar_lea.vmem %s6, 32
  %646 = vst.msk [vmem:[%s645] sm:$0xff] %vm80, %v643
  %s647 = scalar_lea.vmem %s0, 40
  %v648 = vld [vmem:[%s647] sm:$0xff]
  %v649 = vsel %vm80, %v643, 0
  %651 = vmatprep.subr.mxu0 0.0
  %652 = vmatpush1.msra.mxu0 0.0
  %653 = vmatprep.subr.mxu0 0.0
  %654 = vmatpush1.msra.mxu0 0.0
  %655 = vmatprep.subr.mxu0 0.0
  %656 = vmatpush1.msra.mxu0 0.0
  %657 = vmatprep.subr.mxu0 0.0
  %658 = vmatpush1.msra.mxu0 0.0
  %659 = vmatprep.subr.mxu0 0.0
  %660 = vmatpush1.msra.mxu0 0.0
  %661 = vmatprep.subr.mxu0 0.0
  %662 = vmatpush1.msra.mxu0 0.0
  %663 = vmatprep.subr.mxu0 0.0
  %664 = vmatpush1.msra.mxu0 0.0
  %665 = vmatprep.subr.mxu0 0.0
  %666 = vmatpush1.msra.mxu0 0.0
  %667 = vmatprep.subr.mxu0 0.0
  %668 = vmatpush1.msra.mxu0 0.0
  %669 = vmatprep.subr.mxu0 0.0
  %670 = vmatpush1.msra.mxu0 0.0
  %671 = vmatprep.subr.mxu0 0.0
  %672 = vmatpush1.msra.mxu0 0.0
  %673 = vmatprep.subr.mxu0 0.0
  %674 = vmatpush1.msra.mxu0 0.0
  %675 = vmatprep.subr.mxu0 0.0
  %676 = vmatpush1.msra.mxu0 %v525
  %677 = vmatprep.subr.mxu0 0.0
  %678 = vmatpush1.msra.mxu0 %v524
  %679 = vmatprep.subr.mxu0 0.0
  %680 = vmatpush1.msra.mxu0 %v523
  %681 = vmatprep.subr.mxu0 0.0
  %682 = vmatpush1.msra.mxu0 %v522
  %683 = vmatprep.subr.mxu0 0.0
  %684 = vmatpush2.msra.mxu0 0.0
  %685 = vmatprep.subr.mxu0 0.0
  %686 = vmatpush2.msra.mxu0 0.0
  %687 = vmatprep.subr.mxu0 0.0
  %688 = vmatpush2.msra.mxu0 0.0
  %689 = vmatprep.subr.mxu0 0.0
  %690 = vmatpush2.msra.mxu0 0.0
  %691 = vmatprep.subr.mxu0 0.0
  %692 = vmatpush2.msra.mxu0 0.0
  %693 = vmatprep.subr.mxu0 0.0
  %694 = vmatpush2.msra.mxu0 0.0
  %695 = vmatprep.subr.mxu0 0.0
  %696 = vmatpush2.msra.mxu0 0.0
  %697 = vmatprep.subr.mxu0 0.0
  %698 = vmatpush2.msra.mxu0 0.0
  %699 = vmatprep.subr.mxu0 0.0
  %700 = vmatpush2.msra.mxu0 0.0
  %701 = vmatprep.subr.mxu0 0.0
  %702 = vmatpush2.msra.mxu0 0.0
  %703 = vmatprep.subr.mxu0 0.0
  %704 = vmatpush2.msra.mxu0 0.0
  %705 = vmatprep.subr.mxu0 0.0
  %706 = vmatpush2.msra.mxu0 0.0
  %707 = vmatprep.subr.mxu0 0.0
  %708 = vmatpush2.msra.mxu0 0.0
  %709 = vmatprep.subr.mxu0 0.0
  %710 = vmatpush2.msra.mxu0 0.0
  %711 = vmatprep.subr.mxu0 0.0
  %712 = vmatpush2.msra.mxu0 0.0
  %713 = vmatprep.subr.mxu0 0.0
  %714 = vmatpush2.msra.mxu0 0.0
  %715 = vmatprep.mubr.f32.mxu0 0.0
  %716 = vmatmul.mubr.f32.gmra.mxu0 %v649
  %v717 = vpop.f32.mrf.mxu0
  %v718 = vadd.f32 0.0, %v717
  %v719 = vpop.f32.mrf.mxu0
  %720 = vdwg.mxu0
  %v721 = vadd.f32 %v648, %v718
  %v722 = vxor.u32 %v721, 2147483648
  %v723 = vmul.f32 %v722, 1.442695
  %v724 = vpow.pop %v723
  %v725 = vadd.f32 %v724, 1.0
  %v726 = vrcp.pop %v725
  %v727 = vmul.f32 1.0, %v726
  %v728 = vadd.f32 %v718, %v616
  %730 = vrot.lane.b32.xlu0 %v728, 64
  %v731 = vpop.permute.xlu0 %730
  %v733 = vmul.f32 %v727, %v731
  %735 = vrot.lane.b32.xlu0 %v733, 64
  %v736 = vpop.permute.xlu0 %735
  %v738 = vadd.f32 %v648, %v736
  %v739 = vtanh.pop %v738
  %v740 = vsub.f32 1.0, %v727
  %742 = vrot.lane.b32.xlu0 %v739, 96
  %v743 = vpop.permute.xlu0 %742
  %v745 = vmul.f32 %v740, %v743
  %v746 = vmul.f32 %v727, %v640
  %v747 = vadd.f32 %v745, %v746
  %749 = vrot.lane.b32.xlu0 %v747, 96
  %v750 = vpop.permute.xlu0 %749
  %s752 = scalar_lea.vmem %s6, 40
  %753 = vst.msk [vmem:[%s752] sm:$0xff] %vm80, %v750
  %s754 = scalar_lea.vmem %s0, 48
  %v755 = vld [vmem:[%s754] sm:$0xff]
  %v756 = vsel %vm80, %v750, 0
  %758 = vmatprep.subr.mxu0 0.0
  %759 = vmatpush1.msra.mxu0 0.0
  %760 = vmatprep.subr.mxu0 0.0
  %761 = vmatpush1.msra.mxu0 0.0
  %762 = vmatprep.subr.mxu0 0.0
  %763 = vmatpush1.msra.mxu0 0.0
  %764 = vmatprep.subr.mxu0 0.0
  %765 = vmatpush1.msra.mxu0 0.0
  %766 = vmatprep.subr.mxu0 0.0
  %767 = vmatpush1.msra.mxu0 0.0
  %768 = vmatprep.subr.mxu0 0.0
  %769 = vmatpush1.msra.mxu0 0.0
  %770 = vmatprep.subr.mxu0 0.0
  %771 = vmatpush1.msra.mxu0 0.0
  %772 = vmatprep.subr.mxu0 0.0
  %773 = vmatpush1.msra.mxu0 0.0
  %774 = vmatprep.subr.mxu0 0.0
  %775 = vmatpush1.msra.mxu0 0.0
  %776 = vmatprep.subr.mxu0 0.0
  %777 = vmatpush1.msra.mxu0 0.0
  %778 = vmatprep.subr.mxu0 0.0
  %779 = vmatpush1.msra.mxu0 0.0
  %780 = vmatprep.subr.mxu0 0.0
  %781 = vmatpush1.msra.mxu0 0.0
  %782 = vmatprep.subr.mxu0 0.0
  %783 = vmatpush1.msra.mxu0 %v525
  %784 = vmatprep.subr.mxu0 0.0
  %785 = vmatpush1.msra.mxu0 %v524
  %786 = vmatprep.subr.mxu0 0.0
  %787 = vmatpush1.msra.mxu0 %v523
  %788 = vmatprep.subr.mxu0 0.0
  %789 = vmatpush1.msra.mxu0 %v522
  %790 = vmatprep.subr.mxu0 0.0
  %791 = vmatpush2.msra.mxu0 0.0
  %792 = vmatprep.subr.mxu0 0.0
  %793 = vmatpush2.msra.mxu0 0.0
  %794 = vmatprep.subr.mxu0 0.0
  %795 = vmatpush2.msra.mxu0 0.0
  %796 = vmatprep.subr.mxu0 0.0
  %797 = vmatpush2.msra.mxu0 0.0
  %798 = vmatprep.subr.mxu0 0.0
  %799 = vmatpush2.msra.mxu0 0.0
  %800 = vmatprep.subr.mxu0 0.0
  %801 = vmatpush2.msra.mxu0 0.0
  %802 = vmatprep.subr.mxu0 0.0
  %803 = vmatpush2.msra.mxu0 0.0
  %804 = vmatprep.subr.mxu0 0.0
  %805 = vmatpush2.msra.mxu0 0.0
  %806 = vmatprep.subr.mxu0 0.0
  %807 = vmatpush2.msra.mxu0 0.0
  %808 = vmatprep.subr.mxu0 0.0
  %809 = vmatpush2.msra.mxu0 0.0
  %810 = vmatprep.subr.mxu0 0.0
  %811 = vmatpush2.msra.mxu0 0.0
  %812 = vmatprep.subr.mxu0 0.0
  %813 = vmatpush2.msra.mxu0 0.0
  %814 = vmatprep.subr.mxu0 0.0
  %815 = vmatpush2.msra.mxu0 0.0
  %816 = vmatprep.subr.mxu0 0.0
  %817 = vmatpush2.msra.mxu0 0.0
  %818 = vmatprep.subr.mxu0 0.0
  %819 = vmatpush2.msra.mxu0 0.0
  %820 = vmatprep.subr.mxu0 0.0
  %821 = vmatpush2.msra.mxu0 0.0
  %822 = vmatprep.mubr.f32.mxu0 0.0
  %823 = vmatmul.mubr.f32.gmra.mxu0 %v756
  %v824 = vpop.f32.mrf.mxu0
  %v825 = vadd.f32 0.0, %v824
  %v826 = vpop.f32.mrf.mxu0
  %827 = vdwg.mxu0
  %v828 = vadd.f32 %v755, %v825
  %v829 = vxor.u32 %v828, 2147483648
  %v830 = vmul.f32 %v829, 1.442695
  %v831 = vpow.pop %v830
  %v832 = vadd.f32 %v831, 1.0
  %v833 = vrcp.pop %v832
  %v834 = vmul.f32 1.0, %v833
  %v835 = vadd.f32 %v825, %v616
  %837 = vrot.lane.b32.xlu0 %v835, 64
  %v838 = vpop.permute.xlu0 %837
  %v840 = vmul.f32 %v834, %v838
  %842 = vrot.lane.b32.xlu0 %v840, 64
  %v843 = vpop.permute.xlu0 %842
  %v845 = vadd.f32 %v755, %v843
  %v846 = vtanh.pop %v845
  %v847 = vsub.f32 1.0, %v834
  %849 = vrot.lane.b32.xlu0 %v846, 96
  %v850 = vpop.permute.xlu0 %849
  %v852 = vmul.f32 %v847, %v850
  %v853 = vmul.f32 %v834, %v747
  %v854 = vadd.f32 %v852, %v853
  %856 = vrot.lane.b32.xlu0 %v854, 96
  %v857 = vpop.permute.xlu0 %856
  %s859 = scalar_lea.vmem %s6, 48
  %860 = vst.msk [vmem:[%s859] sm:$0xff] %vm80, %v857
  %s861 = scalar_lea.vmem %s0, 56
  %v862 = vld [vmem:[%s861] sm:$0xff]
  %v863 = vsel %vm80, %v857, 0
  %865 = vmatprep.subr.mxu0 0.0
  %866 = vmatpush1.msra.mxu0 0.0
  %867 = vmatprep.subr.mxu0 0.0
  %868 = vmatpush1.msra.mxu0 0.0
  %869 = vmatprep.subr.mxu0 0.0
  %870 = vmatpush1.msra.mxu0 0.0
  %871 = vmatprep.subr.mxu0 0.0
  %872 = vmatpush1.msra.mxu0 0.0
  %873 = vmatprep.subr.mxu0 0.0
  %874 = vmatpush1.msra.mxu0 0.0
  %875 = vmatprep.subr.mxu0 0.0
  %876 = vmatpush1.msra.mxu0 0.0
  %877 = vmatprep.subr.mxu0 0.0
  %878 = vmatpush1.msra.mxu0 0.0
  %879 = vmatprep.subr.mxu0 0.0
  %880 = vmatpush1.msra.mxu0 0.0
  %881 = vmatprep.subr.mxu0 0.0
  %882 = vmatpush1.msra.mxu0 0.0
  %883 = vmatprep.subr.mxu0 0.0
  %884 = vmatpush1.msra.mxu0 0.0
  %885 = vmatprep.subr.mxu0 0.0
  %886 = vmatpush1.msra.mxu0 0.0
  %887 = vmatprep.subr.mxu0 0.0
  %888 = vmatpush1.msra.mxu0 0.0
  %889 = vmatprep.subr.mxu0 0.0
  %890 = vmatpush1.msra.mxu0 %v525
  %891 = vmatprep.subr.mxu0 0.0
  %892 = vmatpush1.msra.mxu0 %v524
  %893 = vmatprep.subr.mxu0 0.0
  %894 = vmatpush1.msra.mxu0 %v523
  %895 = vmatprep.subr.mxu0 0.0
  %896 = vmatpush1.msra.mxu0 %v522
  %897 = vmatprep.subr.mxu0 0.0
  %898 = vmatpush2.msra.mxu0 0.0
  %899 = vmatprep.subr.mxu0 0.0
  %900 = vmatpush2.msra.mxu0 0.0
  %901 = vmatprep.subr.mxu0 0.0
  %902 = vmatpush2.msra.mxu0 0.0
  %903 = vmatprep.subr.mxu0 0.0
  %904 = vmatpush2.msra.mxu0 0.0
  %905 = vmatprep.subr.mxu0 0.0
  %906 = vmatpush2.msra.mxu0 0.0
  %907 = vmatprep.subr.mxu0 0.0
  %908 = vmatpush2.msra.mxu0 0.0
  %909 = vmatprep.subr.mxu0 0.0
  %910 = vmatpush2.msra.mxu0 0.0
  %911 = vmatprep.subr.mxu0 0.0
  %912 = vmatpush2.msra.mxu0 0.0
  %913 = vmatprep.subr.mxu0 0.0
  %914 = vmatpush2.msra.mxu0 0.0
  %915 = vmatprep.subr.mxu0 0.0
  %916 = vmatpush2.msra.mxu0 0.0
  %917 = vmatprep.subr.mxu0 0.0
  %918 = vmatpush2.msra.mxu0 0.0
  %919 = vmatprep.subr.mxu0 0.0
  %920 = vmatpush2.msra.mxu0 0.0
  %921 = vmatprep.subr.mxu0 0.0
  %922 = vmatpush2.msra.mxu0 0.0
  %923 = vmatprep.subr.mxu0 0.0
  %924 = vmatpush2.msra.mxu0 0.0
  %925 = vmatprep.subr.mxu0 0.0
  %926 = vmatpush2.msra.mxu0 0.0
  %927 = vmatprep.subr.mxu0 0.0
  %928 = vmatpush2.msra.mxu0 0.0
  %929 = vmatprep.mubr.f32.mxu0 0.0
  %930 = vmatmul.mubr.f32.gmra.mxu0 %v863
  %v931 = vpop.f32.mrf.mxu0
  %v932 = vadd.f32 0.0, %v931
  %v933 = vpop.f32.mrf.mxu0
  %934 = vdwg.mxu0
  %v935 = vadd.f32 %v862, %v932
  %v936 = vxor.u32 %v935, 2147483648
  %v937 = vmul.f32 %v936, 1.442695
  %v938 = vpow.pop %v937
  %v939 = vadd.f32 %v938, 1.0
  %v940 = vrcp.pop %v939
  %v941 = vmul.f32 1.0, %v940
  %v942 = vadd.f32 %v932, %v616
  %944 = vrot.lane.b32.xlu0 %v942, 64
  %v945 = vpop.permute.xlu0 %944
  %v947 = vmul.f32 %v941, %v945
  %949 = vrot.lane.b32.xlu0 %v947, 64
  %v950 = vpop.permute.xlu0 %949
  %v952 = vadd.f32 %v862, %v950
  %v953 = vtanh.pop %v952
  %v954 = vsub.f32 1.0, %v941
  %956 = vrot.lane.b32.xlu0 %v953, 96
  %v957 = vpop.permute.xlu0 %956
  %v959 = vmul.f32 %v954, %v957
  %v960 = vmul.f32 %v941, %v854
  %v961 = vadd.f32 %v959, %v960
  %963 = vrot.lane.b32.xlu0 %v961, 96
  %v964 = vpop.permute.xlu0 %963
  %s966 = scalar_lea.vmem %s6, 56
  %967 = vst.msk [vmem:[%s966] sm:$0xff] %vm80, %v964
  %968 = vst.msk [vmem:[%s519] sm:$0xff] %vm80, %v964
  %v969 = vld [vmem:[#allocation3] sm:$0xff]
  %v970 = vld [vmem:[%s3] sm:$0xff]
  %v971 = vld [vmem:[%s3 + $0x8] sm:$0xff]
  %v972 = vld [vmem:[%s3 + $0x10] sm:$0xff]
  %v973 = vld [vmem:[%s3 + $0x18] sm:$0xff]
  %v974 = vld [vmem:[%s5] sm:$0x1]
  %s975 = scalar_lea.vmem %s53, 24
  %v976 = vld [vmem:[%s975] sm:$0xff]
  %v978 = vsel %vm80, %v969, 0
  %980 = vmatprep.subr.mxu0 0.0
  %981 = vmatpush1.msra.mxu0 0.0
  %982 = vmatprep.subr.mxu0 0.0
  %983 = vmatpush1.msra.mxu0 0.0
  %984 = vmatprep.subr.mxu0 0.0
  %985 = vmatpush1.msra.mxu0 0.0
  %986 = vmatprep.subr.mxu0 0.0
  %987 = vmatpush1.msra.mxu0 0.0
  %988 = vmatprep.subr.mxu0 0.0
  %989 = vmatpush1.msra.mxu0 0.0
  %990 = vmatprep.subr.mxu0 0.0
  %991 = vmatpush1.msra.mxu0 0.0
  %992 = vmatprep.subr.mxu0 0.0
  %993 = vmatpush1.msra.mxu0 0.0
  %994 = vmatprep.subr.mxu0 0.0
  %995 = vmatpush1.msra.mxu0 0.0
  %996 = vmatprep.subr.mxu0 0.0
  %997 = vmatpush1.msra.mxu0 0.0
  %998 = vmatprep.subr.mxu0 0.0
  %999 = vmatpush1.msra.mxu0 0.0
  %1000 = vmatprep.subr.mxu0 0.0
  %1001 = vmatpush1.msra.mxu0 0.0
  %1002 = vmatprep.subr.mxu0 0.0
  %1003 = vmatpush1.msra.mxu0 0.0
  %1004 = vmatprep.subr.mxu0 0.0
  %1005 = vmatpush1.msra.mxu0 %v973
  %1006 = vmatprep.subr.mxu0 0.0
  %1007 = vmatpush1.msra.mxu0 %v972
  %1008 = vmatprep.subr.mxu0 0.0
  %1009 = vmatpush1.msra.mxu0 %v971
  %1010 = vmatprep.subr.mxu0 0.0
  %1011 = vmatpush1.msra.mxu0 %v970
  %1012 = vmatprep.subr.mxu0 0.0
  %1013 = vmatpush2.msra.mxu0 0.0
  %1014 = vmatprep.subr.mxu0 0.0
  %1015 = vmatpush2.msra.mxu0 0.0
  %1016 = vmatprep.subr.mxu0 0.0
  %1017 = vmatpush2.msra.mxu0 0.0
  %1018 = vmatprep.subr.mxu0 0.0
  %1019 = vmatpush2.msra.mxu0 0.0
  %1020 = vmatprep.subr.mxu0 0.0
  %1021 = vmatpush2.msra.mxu0 0.0
  %1022 = vmatprep.subr.mxu0 0.0
  %1023 = vmatpush2.msra.mxu0 0.0
  %1024 = vmatprep.subr.mxu0 0.0
  %1025 = vmatpush2.msra.mxu0 0.0
  %1026 = vmatprep.subr.mxu0 0.0
  %1027 = vmatpush2.msra.mxu0 0.0
  %1028 = vmatprep.subr.mxu0 0.0
  %1029 = vmatpush2.msra.mxu0 0.0
  %1030 = vmatprep.subr.mxu0 0.0
  %1031 = vmatpush2.msra.mxu0 0.0
  %1032 = vmatprep.subr.mxu0 0.0
  %1033 = vmatpush2.msra.mxu0 0.0
  %1034 = vmatprep.subr.mxu0 0.0
  %1035 = vmatpush2.msra.mxu0 0.0
  %1036 = vmatprep.subr.mxu0 0.0
  %1037 = vmatpush2.msra.mxu0 0.0
  %1038 = vmatprep.subr.mxu0 0.0
  %1039 = vmatpush2.msra.mxu0 0.0
  %1040 = vmatprep.subr.mxu0 0.0
  %1041 = vmatpush2.msra.mxu0 0.0
  %1042 = vmatprep.subr.mxu0 0.0
  %1043 = vmatpush2.msra.mxu0 0.0
  %1044 = vmatprep.mubr.f32.mxu0 0.0
  %1045 = vmatmul.mubr.f32.gmra.mxu0 %v978
  %v1046 = vpop.f32.mrf.mxu0
  %v1047 = vadd.f32 0.0, %v1046
  %v1048 = vpop.f32.mrf.mxu0
  %1049 = vdwg.mxu0
  %v1050 = vadd.f32 %v976, %v1047
  %v1051 = vxor.u32 %v1050, 2147483648
  %v1052 = vmul.f32 %v1051, 1.442695
  %v1053 = vpow.pop %v1052
  %v1054 = vadd.f32 %v1053, 1.0
  %v1055 = vrcp.pop %v1054
  %v1056 = vmul.f32 1.0, %v1055
  %v1058 = vlaneseq
  %v1059 = vshrl.u32 %v1058, 7
  %v1060 = vsub.s32 0, %v1059
  %v1061 = vrot.slane %v974, %v1060
  %1062 = vrot.lane.b32.xlu0 %v1061, 64
  %v1063 = vpop.permute.xlu0 %1062
  %v1065 = vadd.f32 %v1047, %v1063
  %1067 = vrot.lane.b32.xlu0 %v1065, 64
  %v1068 = vpop.permute.xlu0 %1067
  %v1070 = vmul.f32 %v1056, %v1068
  %1072 = vrot.lane.b32.xlu0 %v1070, 64
  %v1073 = vpop.permute.xlu0 %1072
  %v1075 = vadd.f32 %v976, %v1073
  %v1076 = vtanh.pop %v1075
  %v1077 = vsub.f32 1.0, %v1056
  %1079 = vrot.lane.b32.xlu0 %v1076, 96
  %v1080 = vpop.permute.xlu0 %1079
  %v1082 = vmul.f32 %v1077, %v1080
  %1083 = vrot.lane.b32.xlu0 %v969, 32
  %v1084 = vpop.permute.xlu0 %1083
  %v1086 = vmul.f32 %v1056, %v1084
  %v1087 = vadd.f32 %v1082, %v1086
  %1089 = vrot.lane.b32.xlu0 %v1087, 96
  %v1090 = vpop.permute.xlu0 %1089
  %s1092 = scalar_lea.vmem %s61, 24
  %1093 = vst.msk [vmem:[%s1092] sm:$0xff] %vm80, %v1090
  %s1094 = scalar_lea.vmem %s53, 16
  %v1095 = vld [vmem:[%s1094] sm:$0xff]
  %v1096 = vsel %vm80, %v1090, 0
  %1098 = vmatprep.subr.mxu0 0.0
  %1099 = vmatpush1.msra.mxu0 0.0
  %1100 = vmatprep.subr.mxu0 0.0
  %1101 = vmatpush1.msra.mxu0 0.0
  %1102 = vmatprep.subr.mxu0 0.0
  %1103 = vmatpush1.msra.mxu0 0.0
  %1104 = vmatprep.subr.mxu0 0.0
  %1105 = vmatpush1.msra.mxu0 0.0
  %1106 = vmatprep.subr.mxu0 0.0
  %1107 = vmatpush1.msra.mxu0 0.0
  %1108 = vmatprep.subr.mxu0 0.0
  %1109 = vmatpush1.msra.mxu0 0.0
  %1110 = vmatprep.subr.mxu0 0.0
  %1111 = vmatpush1.msra.mxu0 0.0
  %1112 = vmatprep.subr.mxu0 0.0
  %1113 = vmatpush1.msra.mxu0 0.0
  %1114 = vmatprep.subr.mxu0 0.0
  %1115 = vmatpush1.msra.mxu0 0.0
  %1116 = vmatprep.subr.mxu0 0.0
  %1117 = vmatpush1.msra.mxu0 0.0
  %1118 = vmatprep.subr.mxu0 0.0
  %1119 = vmatpush1.msra.mxu0 0.0
  %1120 = vmatprep.subr.mxu0 0.0
  %1121 = vmatpush1.msra.mxu0 0.0
  %1122 = vmatprep.subr.mxu0 0.0
  %1123 = vmatpush1.msra.mxu0 %v973
  %1124 = vmatprep.subr.mxu0 0.0
  %1125 = vmatpush1.msra.mxu0 %v972
  %1126 = vmatprep.subr.mxu0 0.0
  %1127 = vmatpush1.msra.mxu0 %v971
  %1128 = vmatprep.subr.mxu0 0.0
  %1129 = vmatpush1.msra.mxu0 %v970
  %1130 = vmatprep.subr.mxu0 0.0
  %1131 = vmatpush2.msra.mxu0 0.0
  %1132 = vmatprep.subr.mxu0 0.0
  %1133 = vmatpush2.msra.mxu0 0.0
  %1134 = vmatprep.subr.mxu0 0.0
  %1135 = vmatpush2.msra.mxu0 0.0
  %1136 = vmatprep.subr.mxu0 0.0
  %1137 = vmatpush2.msra.mxu0 0.0
  %1138 = vmatprep.subr.mxu0 0.0
  %1139 = vmatpush2.msra.mxu0 0.0
  %1140 = vmatprep.subr.mxu0 0.0
  %1141 = vmatpush2.msra.mxu0 0.0
  %1142 = vmatprep.subr.mxu0 0.0
  %1143 = vmatpush2.msra.mxu0 0.0
  %1144 = vmatprep.subr.mxu0 0.0
  %1145 = vmatpush2.msra.mxu0 0.0
  %1146 = vmatprep.subr.mxu0 0.0
  %1147 = vmatpush2.msra.mxu0 0.0
  %1148 = vmatprep.subr.mxu0 0.0
  %1149 = vmatpush2.msra.mxu0 0.0
  %1150 = vmatprep.subr.mxu0 0.0
  %1151 = vmatpush2.msra.mxu0 0.0
  %1152 = vmatprep.subr.mxu0 0.0
  %1153 = vmatpush2.msra.mxu0 0.0
  %1154 = vmatprep.subr.mxu0 0.0
  %1155 = vmatpush2.msra.mxu0 0.0
  %1156 = vmatprep.subr.mxu0 0.0
  %1157 = vmatpush2.msra.mxu0 0.0
  %1158 = vmatprep.subr.mxu0 0.0
  %1159 = vmatpush2.msra.mxu0 0.0
  %1160 = vmatprep.subr.mxu0 0.0
  %1161 = vmatpush2.msra.mxu0 0.0
  %1162 = vmatprep.mubr.f32.mxu0 0.0
  %1163 = vmatmul.mubr.f32.gmra.mxu0 %v1096
  %v1164 = vpop.f32.mrf.mxu0
  %v1165 = vadd.f32 0.0, %v1164
  %v1166 = vpop.f32.mrf.mxu0
  %1167 = vdwg.mxu0
  %v1168 = vadd.f32 %v1095, %v1165
  %v1169 = vxor.u32 %v1168, 2147483648
  %v1170 = vmul.f32 %v1169, 1.442695
  %v1171 = vpow.pop %v1170
  %v1172 = vadd.f32 %v1171, 1.0
  %v1173 = vrcp.pop %v1172
  %v1174 = vmul.f32 1.0, %v1173
  %v1175 = vadd.f32 %v1165, %v1063
  %1177 = vrot.lane.b32.xlu0 %v1175, 64
  %v1178 = vpop.permute.xlu0 %1177
  %v1180 = vmul.f32 %v1174, %v1178
  %1182 = vrot.lane.b32.xlu0 %v1180, 64
  %v1183 = vpop.permute.xlu0 %1182
  %v1185 = vadd.f32 %v1095, %v1183
  %v1186 = vtanh.pop %v1185
  %v1187 = vsub.f32 1.0, %v1174
  %1189 = vrot.lane.b32.xlu0 %v1186, 96
  %v1190 = vpop.permute.xlu0 %1189
  %v1192 = vmul.f32 %v1187, %v1190
  %v1193 = vmul.f32 %v1174, %v1087
  %v1194 = vadd.f32 %v1192, %v1193
  %1196 = vrot.lane.b32.xlu0 %v1194, 96
  %v1197 = vpop.permute.xlu0 %1196
  %s1199 = scalar_lea.vmem %s61, 16
  %1200 = vst.msk [vmem:[%s1199] sm:$0xff] %vm80, %v1197
  %s1201 = scalar_lea.vmem %s53, 8
  %v1202 = vld [vmem:[%s1201] sm:$0xff]
  %v1203 = vsel %vm80, %v1197, 0
  %1205 = vmatprep.subr.mxu0 0.0
  %1206 = vmatpush1.msra.mxu0 0.0
  %1207 = vmatprep.subr.mxu0 0.0
  %1208 = vmatpush1.msra.mxu0 0.0
  %1209 = vmatprep.subr.mxu0 0.0
  %1210 = vmatpush1.msra.mxu0 0.0
  %1211 = vmatprep.subr.mxu0 0.0
  %1212 = vmatpush1.msra.mxu0 0.0
  %1213 = vmatprep.subr.mxu0 0.0
  %1214 = vmatpush1.msra.mxu0 0.0
  %1215 = vmatprep.subr.mxu0 0.0
  %1216 = vmatpush1.msra.mxu0 0.0
  %1217 = vmatprep.subr.mxu0 0.0
  %1218 = vmatpush1.msra.mxu0 0.0
  %1219 = vmatprep.subr.mxu0 0.0
  %1220 = vmatpush1.msra.mxu0 0.0
  %1221 = vmatprep.subr.mxu0 0.0
  %1222 = vmatpush1.msra.mxu0 0.0
  %1223 = vmatprep.subr.mxu0 0.0
  %1224 = vmatpush1.msra.mxu0 0.0
  %1225 = vmatprep.subr.mxu0 0.0
  %1226 = vmatpush1.msra.mxu0 0.0
  %1227 = vmatprep.subr.mxu0 0.0
  %1228 = vmatpush1.msra.mxu0 0.0
  %1229 = vmatprep.subr.mxu0 0.0
  %1230 = vmatpush1.msra.mxu0 %v973
  %1231 = vmatprep.subr.mxu0 0.0
  %1232 = vmatpush1.msra.mxu0 %v972
  %1233 = vmatprep.subr.mxu0 0.0
  %1234 = vmatpush1.msra.mxu0 %v971
  %1235 = vmatprep.subr.mxu0 0.0
  %1236 = vmatpush1.msra.mxu0 %v970
  %1237 = vmatprep.subr.mxu0 0.0
  %1238 = vmatpush2.msra.mxu0 0.0
  %1239 = vmatprep.subr.mxu0 0.0
  %1240 = vmatpush2.msra.mxu0 0.0
  %1241 = vmatprep.subr.mxu0 0.0
  %1242 = vmatpush2.msra.mxu0 0.0
  %1243 = vmatprep.subr.mxu0 0.0
  %1244 = vmatpush2.msra.mxu0 0.0
  %1245 = vmatprep.subr.mxu0 0.0
  %1246 = vmatpush2.msra.mxu0 0.0
  %1247 = vmatprep.subr.mxu0 0.0
  %1248 = vmatpush2.msra.mxu0 0.0
  %1249 = vmatprep.subr.mxu0 0.0
  %1250 = vmatpush2.msra.mxu0 0.0
  %1251 = vmatprep.subr.mxu0 0.0
  %1252 = vmatpush2.msra.mxu0 0.0
  %1253 = vmatprep.subr.mxu0 0.0
  %1254 = vmatpush2.msra.mxu0 0.0
  %1255 = vmatprep.subr.mxu0 0.0
  %1256 = vmatpush2.msra.mxu0 0.0
  %1257 = vmatprep.subr.mxu0 0.0
  %1258 = vmatpush2.msra.mxu0 0.0
  %1259 = vmatprep.subr.mxu0 0.0
  %1260 = vmatpush2.msra.mxu0 0.0
  %1261 = vmatprep.subr.mxu0 0.0
  %1262 = vmatpush2.msra.mxu0 0.0
  %1263 = vmatprep.subr.mxu0 0.0
  %1264 = vmatpush2.msra.mxu0 0.0
  %1265 = vmatprep.subr.mxu0 0.0
  %1266 = vmatpush2.msra.mxu0 0.0
  %1267 = vmatprep.subr.mxu0 0.0
  %1268 = vmatpush2.msra.mxu0 0.0
  %1269 = vmatprep.mubr.f32.mxu0 0.0
  %1270 = vmatmul.mubr.f32.gmra.mxu0 %v1203
  %v1271 = vpop.f32.mrf.mxu0
  %v1272 = vadd.f32 0.0, %v1271
  %v1273 = vpop.f32.mrf.mxu0
  %1274 = vdwg.mxu0
  %v1275 = vadd.f32 %v1202, %v1272
  %v1276 = vxor.u32 %v1275, 2147483648
  %v1277 = vmul.f32 %v1276, 1.442695
  %v1278 = vpow.pop %v1277
  %v1279 = vadd.f32 %v1278, 1.0
  %v1280 = vrcp.pop %v1279
  %v1281 = vmul.f32 1.0, %v1280
  %v1282 = vadd.f32 %v1272, %v1063
  %1284 = vrot.lane.b32.xlu0 %v1282, 64
  %v1285 = vpop.permute.xlu0 %1284
  %v1287 = vmul.f32 %v1281, %v1285
  %1289 = vrot.lane.b32.xlu0 %v1287, 64
  %v1290 = vpop.permute.xlu0 %1289
  %v1292 = vadd.f32 %v1202, %v1290
  %v1293 = vtanh.pop %v1292
  %v1294 = vsub.f32 1.0, %v1281
  %1296 = vrot.lane.b32.xlu0 %v1293, 96
  %v1297 = vpop.permute.xlu0 %1296
  %v1299 = vmul.f32 %v1294, %v1297
  %v1300 = vmul.f32 %v1281, %v1194
  %v1301 = vadd.f32 %v1299, %v1300
  %1303 = vrot.lane.b32.xlu0 %v1301, 96
  %v1304 = vpop.permute.xlu0 %1303
  %s1306 = scalar_lea.vmem %s61, 8
  %1307 = vst.msk [vmem:[%s1306] sm:$0xff] %vm80, %v1304
  %v1308 = vld [vmem:[%s53] sm:$0xff]
  %v1309 = vsel %vm80, %v1304, 0
  %1311 = vmatprep.subr.mxu0 0.0
  %1312 = vmatpush1.msra.mxu0 0.0
  %1313 = vmatprep.subr.mxu0 0.0
  %1314 = vmatpush1.msra.mxu0 0.0
  %1315 = vmatprep.subr.mxu0 0.0
  %1316 = vmatpush1.msra.mxu0 0.0
  %1317 = vmatprep.subr.mxu0 0.0
  %1318 = vmatpush1.msra.mxu0 0.0
  %1319 = vmatprep.subr.mxu0 0.0
  %1320 = vmatpush1.msra.mxu0 0.0
  %1321 = vmatprep.subr.mxu0 0.0
  %1322 = vmatpush1.msra.mxu0 0.0
  %1323 = vmatprep.subr.mxu0 0.0
  %1324 = vmatpush1.msra.mxu0 0.0
  %1325 = vmatprep.subr.mxu0 0.0
  %1326 = vmatpush1.msra.mxu0 0.0
  %1327 = vmatprep.subr.mxu0 0.0
  %1328 = vmatpush1.msra.mxu0 0.0
  %1329 = vmatprep.subr.mxu0 0.0
  %1330 = vmatpush1.msra.mxu0 0.0
  %1331 = vmatprep.subr.mxu0 0.0
  %1332 = vmatpush1.msra.mxu0 0.0
  %1333 = vmatprep.subr.mxu0 0.0
  %1334 = vmatpush1.msra.mxu0 0.0
  %1335 = vmatprep.subr.mxu0 0.0
  %1336 = vmatpush1.msra.mxu0 %v973
  %1337 = vmatprep.subr.mxu0 0.0
  %1338 = vmatpush1.msra.mxu0 %v972
  %1339 = vmatprep.subr.mxu0 0.0
  %1340 = vmatpush1.msra.mxu0 %v971
  %1341 = vmatprep.subr.mxu0 0.0
  %1342 = vmatpush1.msra.mxu0 %v970
  %1343 = vmatprep.subr.mxu0 0.0
  %1344 = vmatpush2.msra.mxu0 0.0
  %1345 = vmatprep.subr.mxu0 0.0
  %1346 = vmatpush2.msra.mxu0 0.0
  %1347 = vmatprep.subr.mxu0 0.0
  %1348 = vmatpush2.msra.mxu0 0.0
  %1349 = vmatprep.subr.mxu0 0.0
  %1350 = vmatpush2.msra.mxu0 0.0
  %1351 = vmatprep.subr.mxu0 0.0
  %1352 = vmatpush2.msra.mxu0 0.0
  %1353 = vmatprep.subr.mxu0 0.0
  %1354 = vmatpush2.msra.mxu0 0.0
  %1355 = vmatprep.subr.mxu0 0.0
  %1356 = vmatpush2.msra.mxu0 0.0
  %1357 = vmatprep.subr.mxu0 0.0
  %1358 = vmatpush2.msra.mxu0 0.0
  %1359 = vmatprep.subr.mxu0 0.0
  %1360 = vmatpush2.msra.mxu0 0.0
  %1361 = vmatprep.subr.mxu0 0.0
  %1362 = vmatpush2.msra.mxu0 0.0
  %1363 = vmatprep.subr.mxu0 0.0
  %1364 = vmatpush2.msra.mxu0 0.0
  %1365 = vmatprep.subr.mxu0 0.0
  %1366 = vmatpush2.msra.mxu0 0.0
  %1367 = vmatprep.subr.mxu0 0.0
  %1368 = vmatpush2.msra.mxu0 0.0
  %1369 = vmatprep.subr.mxu0 0.0
  %1370 = vmatpush2.msra.mxu0 0.0
  %1371 = vmatprep.subr.mxu0 0.0
  %1372 = vmatpush2.msra.mxu0 0.0
  %1373 = vmatprep.subr.mxu0 0.0
  %1374 = vmatpush2.msra.mxu0 0.0
  %1375 = vmatprep.mubr.f32.mxu0 0.0
  %1376 = vmatmul.mubr.f32.gmra.mxu0 %v1309
  %v1377 = vpop.f32.mrf.mxu0
  %v1378 = vadd.f32 0.0, %v1377
  %v1379 = vpop.f32.mrf.mxu0
  %1380 = vdwg.mxu0
  %v1381 = vadd.f32 %v1308, %v1378
  %v1382 = vxor.u32 %v1381, 2147483648
  %v1383 = vmul.f32 %v1382, 1.442695
  %v1384 = vpow.pop %v1383
  %v1385 = vadd.f32 %v1384, 1.0
  %v1386 = vrcp.pop %v1385
  %v1387 = vmul.f32 1.0, %v1386
  %v1388 = vadd.f32 %v1378, %v1063
  %1390 = vrot.lane.b32.xlu0 %v1388, 64
  %v1391 = vpop.permute.xlu0 %1390
  %v1393 = vmul.f32 %v1387, %v1391
  %1395 = vrot.lane.b32.xlu0 %v1393, 64
  %v1396 = vpop.permute.xlu0 %1395
  %v1398 = vadd.f32 %v1308, %v1396
  %v1399 = vtanh.pop %v1398
  %v1400 = vsub.f32 1.0, %v1387
  %1402 = vrot.lane.b32.xlu0 %v1399, 96
  %v1403 = vpop.permute.xlu0 %1402
  %v1405 = vmul.f32 %v1400, %v1403
  %v1406 = vmul.f32 %v1387, %v1301
  %v1407 = vadd.f32 %v1405, %v1406
  %1409 = vrot.lane.b32.xlu0 %v1407, 96
  %v1410 = vpop.permute.xlu0 %1409
  %1412 = vst.msk [vmem:[%s61] sm:$0xff] %vm80, %v1410
  %1413 = vst.msk [vmem:[#allocation3] sm:$0xff] %vm80, %v1410
  %s1414 = scalar_lea.vmem [#allocation3], 8
  %v1415 = vld [vmem:[%s1414] sm:$0xff]
  %s1416 = scalar_lea.vmem %s3, 32
  %v1417 = vld [vmem:[%s1416] sm:$0xff]
  %v1418 = vld [vmem:[%s1416 + $0x8] sm:$0xff]
  %v1419 = vld [vmem:[%s1416 + $0x10] sm:$0xff]
  %v1420 = vld [vmem:[%s1416 + $0x18] sm:$0xff]
  %s1421 = scalar_lea.vmem %s5, 1
  %v1422 = vld [vmem:[%s1421] sm:$0x1]
  %s1423 = scalar_lea.vmem %s53, 56
  %v1424 = vld [vmem:[%s1423] sm:$0xff]
  %v1426 = vsel %vm80, %v1415, 0
  %1428 = vmatprep.subr.mxu0 0.0
  %1429 = vmatpush1.msra.mxu0 0.0
  %1430 = vmatprep.subr.mxu0 0.0
  %1431 = vmatpush1.msra.mxu0 0.0
  %1432 = vmatprep.subr.mxu0 0.0
  %1433 = vmatpush1.msra.mxu0 0.0
  %1434 = vmatprep.subr.mxu0 0.0
  %1435 = vmatpush1.msra.mxu0 0.0
  %1436 = vmatprep.subr.mxu0 0.0
  %1437 = vmatpush1.msra.mxu0 0.0
  %1438 = vmatprep.subr.mxu0 0.0
  %1439 = vmatpush1.msra.mxu0 0.0
  %1440 = vmatprep.subr.mxu0 0.0
  %1441 = vmatpush1.msra.mxu0 0.0
  %1442 = vmatprep.subr.mxu0 0.0
  %1443 = vmatpush1.msra.mxu0 0.0
  %1444 = vmatprep.subr.mxu0 0.0
  %1445 = vmatpush1.msra.mxu0 0.0
  %1446 = vmatprep.subr.mxu0 0.0
  %1447 = vmatpush1.msra.mxu0 0.0
  %1448 = vmatprep.subr.mxu0 0.0
  %1449 = vmatpush1.msra.mxu0 0.0
  %1450 = vmatprep.subr.mxu0 0.0
  %1451 = vmatpush1.msra.mxu0 0.0
  %1452 = vmatprep.subr.mxu0 0.0
  %1453 = vmatpush1.msra.mxu0 %v1420
  %1454 = vmatprep.subr.mxu0 0.0
  %1455 = vmatpush1.msra.mxu0 %v1419
  %1456 = vmatprep.subr.mxu0 0.0
  %1457 = vmatpush1.msra.mxu0 %v1418
  %1458 = vmatprep.subr.mxu0 0.0
  %1459 = vmatpush1.msra.mxu0 %v1417
  %1460 = vmatprep.subr.mxu0 0.0
  %1461 = vmatpush2.msra.mxu0 0.0
  %1462 = vmatprep.subr.mxu0 0.0
  %1463 = vmatpush2.msra.mxu0 0.0
  %1464 = vmatprep.subr.mxu0 0.0
  %1465 = vmatpush2.msra.mxu0 0.0
  %1466 = vmatprep.subr.mxu0 0.0
  %1467 = vmatpush2.msra.mxu0 0.0
  %1468 = vmatprep.subr.mxu0 0.0
  %1469 = vmatpush2.msra.mxu0 0.0
  %1470 = vmatprep.subr.mxu0 0.0
  %1471 = vmatpush2.msra.mxu0 0.0
  %1472 = vmatprep.subr.mxu0 0.0
  %1473 = vmatpush2.msra.mxu0 0.0
  %1474 = vmatprep.subr.mxu0 0.0
  %1475 = vmatpush2.msra.mxu0 0.0
  %1476 = vmatprep.subr.mxu0 0.0
  %1477 = vmatpush2.msra.mxu0 0.0
  %1478 = vmatprep.subr.mxu0 0.0
  %1479 = vmatpush2.msra.mxu0 0.0
  %1480 = vmatprep.subr.mxu0 0.0
  %1481 = vmatpush2.msra.mxu0 0.0
  %1482 = vmatprep.subr.mxu0 0.0
  %1483 = vmatpush2.msra.mxu0 0.0
  %1484 = vmatprep.subr.mxu0 0.0
  %1485 = vmatpush2.msra.mxu0 0.0
  %1486 = vmatprep.subr.mxu0 0.0
  %1487 = vmatpush2.msra.mxu0 0.0
  %1488 = vmatprep.subr.mxu0 0.0
  %1489 = vmatpush2.msra.mxu0 0.0
  %1490 = vmatprep.subr.mxu0 0.0
  %1491 = vmatpush2.msra.mxu0 0.0
  %1492 = vmatprep.mubr.f32.mxu0 0.0
  %1493 = vmatmul.mubr.f32.gmra.mxu0 %v1426
  %v1494 = vpop.f32.mrf.mxu0
  %v1495 = vadd.f32 0.0, %v1494
  %v1496 = vpop.f32.mrf.mxu0
  %1497 = vdwg.mxu0
  %v1498 = vadd.f32 %v1424, %v1495
  %v1499 = vxor.u32 %v1498, 2147483648
  %v1500 = vmul.f32 %v1499, 1.442695
  %v1501 = vpow.pop %v1500
  %v1502 = vadd.f32 %v1501, 1.0
  %v1503 = vrcp.pop %v1502
  %v1504 = vmul.f32 1.0, %v1503
  %v1506 = vlaneseq
  %v1507 = vshrl.u32 %v1506, 7
  %v1508 = vsub.s32 0, %v1507
  %v1509 = vrot.slane %v1422, %v1508
  %1510 = vrot.lane.b32.xlu0 %v1509, 64
  %v1511 = vpop.permute.xlu0 %1510
  %v1513 = vadd.f32 %v1495, %v1511
  %1515 = vrot.lane.b32.xlu0 %v1513, 64
  %v1516 = vpop.permute.xlu0 %1515
  %v1518 = vmul.f32 %v1504, %v1516
  %1520 = vrot.lane.b32.xlu0 %v1518, 64
  %v1521 = vpop.permute.xlu0 %1520
  %v1523 = vadd.f32 %v1424, %v1521
  %v1524 = vtanh.pop %v1523
  %v1525 = vsub.f32 1.0, %v1504
  %1527 = vrot.lane.b32.xlu0 %v1524, 96
  %v1528 = vpop.permute.xlu0 %1527
  %v1530 = vmul.f32 %v1525, %v1528
  %1531 = vrot.lane.b32.xlu0 %v1415, 32
  %v1532 = vpop.permute.xlu0 %1531
  %v1534 = vmul.f32 %v1504, %v1532
  %v1535 = vadd.f32 %v1530, %v1534
  %1537 = vrot.lane.b32.xlu0 %v1535, 96
  %v1538 = vpop.permute.xlu0 %1537
  %s1540 = scalar_lea.vmem %s61, 56
  %1541 = vst.msk [vmem:[%s1540] sm:$0xff] %vm80, %v1538
  %s1542 = scalar_lea.vmem %s53, 48
  %v1543 = vld [vmem:[%s1542] sm:$0xff]
  %v1544 = vsel %vm80, %v1538, 0
  %1546 = vmatprep.subr.mxu0 0.0
  %1547 = vmatpush1.msra.mxu0 0.0
  %1548 = vmatprep.subr.mxu0 0.0
  %1549 = vmatpush1.msra.mxu0 0.0
  %1550 = vmatprep.subr.mxu0 0.0
  %1551 = vmatpush1.msra.mxu0 0.0
  %1552 = vmatprep.subr.mxu0 0.0
  %1553 = vmatpush1.msra.mxu0 0.0
  %1554 = vmatprep.subr.mxu0 0.0
  %1555 = vmatpush1.msra.mxu0 0.0
  %1556 = vmatprep.subr.mxu0 0.0
  %1557 = vmatpush1.msra.mxu0 0.0
  %1558 = vmatprep.subr.mxu0 0.0
  %1559 = vmatpush1.msra.mxu0 0.0
  %1560 = vmatprep.subr.mxu0 0.0
  %1561 = vmatpush1.msra.mxu0 0.0
  %1562 = vmatprep.subr.mxu0 0.0
  %1563 = vmatpush1.msra.mxu0 0.0
  %1564 = vmatprep.subr.mxu0 0.0
  %1565 = vmatpush1.msra.mxu0 0.0
  %1566 = vmatprep.subr.mxu0 0.0
  %1567 = vmatpush1.msra.mxu0 0.0
  %1568 = vmatprep.subr.mxu0 0.0
  %1569 = vmatpush1.msra.mxu0 0.0
  %1570 = vmatprep.subr.mxu0 0.0
  %1571 = vmatpush1.msra.mxu0 %v1420
  %1572 = vmatprep.subr.mxu0 0.0
  %1573 = vmatpush1.msra.mxu0 %v1419
  %1574 = vmatprep.subr.mxu0 0.0
  %1575 = vmatpush1.msra.mxu0 %v1418
  %1576 = vmatprep.subr.mxu0 0.0
  %1577 = vmatpush1.msra.mxu0 %v1417
  %1578 = vmatprep.subr.mxu0 0.0
  %1579 = vmatpush2.msra.mxu0 0.0
  %1580 = vmatprep.subr.mxu0 0.0
  %1581 = vmatpush2.msra.mxu0 0.0
  %1582 = vmatprep.subr.mxu0 0.0
  %1583 = vmatpush2.msra.mxu0 0.0
  %1584 = vmatprep.subr.mxu0 0.0
  %1585 = vmatpush2.msra.mxu0 0.0
  %1586 = vmatprep.subr.mxu0 0.0
  %1587 = vmatpush2.msra.mxu0 0.0
  %1588 = vmatprep.subr.mxu0 0.0
  %1589 = vmatpush2.msra.mxu0 0.0
  %1590 = vmatprep.subr.mxu0 0.0
  %1591 = vmatpush2.msra.mxu0 0.0
  %1592 = vmatprep.subr.mxu0 0.0
  %1593 = vmatpush2.msra.mxu0 0.0
  %1594 = vmatprep.subr.mxu0 0.0
  %1595 = vmatpush2.msra.mxu0 0.0
  %1596 = vmatprep.subr.mxu0 0.0
  %1597 = vmatpush2.msra.mxu0 0.0
  %1598 = vmatprep.subr.mxu0 0.0
  %1599 = vmatpush2.msra.mxu0 0.0
  %1600 = vmatprep.subr.mxu0 0.0
  %1601 = vmatpush2.msra.mxu0 0.0
  %1602 = vmatprep.subr.mxu0 0.0
  %1603 = vmatpush2.msra.mxu0 0.0
  %1604 = vmatprep.subr.mxu0 0.0
  %1605 = vmatpush2.msra.mxu0 0.0
  %1606 = vmatprep.subr.mxu0 0.0
  %1607 = vmatpush2.msra.mxu0 0.0
  %1608 = vmatprep.subr.mxu0 0.0
  %1609 = vmatpush2.msra.mxu0 0.0
  %1610 = vmatprep.mubr.f32.mxu0 0.0
  %1611 = vmatmul.mubr.f32.gmra.mxu0 %v1544
  %v1612 = vpop.f32.mrf.mxu0
  %v1613 = vadd.f32 0.0, %v1612
  %v1614 = vpop.f32.mrf.mxu0
  %1615 = vdwg.mxu0
  %v1616 = vadd.f32 %v1543, %v1613
  %v1617 = vxor.u32 %v1616, 2147483648
  %v1618 = vmul.f32 %v1617, 1.442695
  %v1619 = vpow.pop %v1618
  %v1620 = vadd.f32 %v1619, 1.0
  %v1621 = vrcp.pop %v1620
  %v1622 = vmul.f32 1.0, %v1621
  %v1623 = vadd.f32 %v1613, %v1511
  %1625 = vrot.lane.b32.xlu0 %v1623, 64
  %v1626 = vpop.permute.xlu0 %1625
  %v1628 = vmul.f32 %v1622, %v1626
  %1630 = vrot.lane.b32.xlu0 %v1628, 64
  %v1631 = vpop.permute.xlu0 %1630
  %v1633 = vadd.f32 %v1543, %v1631
  %v1634 = vtanh.pop %v1633
  %v1635 = vsub.f32 1.0, %v1622
  %1637 = vrot.lane.b32.xlu0 %v1634, 96
  %v1638 = vpop.permute.xlu0 %1637
  %v1640 = vmul.f32 %v1635, %v1638
  %v1641 = vmul.f32 %v1622, %v1535
  %v1642 = vadd.f32 %v1640, %v1641
  %1644 = vrot.lane.b32.xlu0 %v1642, 96
  %v1645 = vpop.permute.xlu0 %1644
  %s1647 = scalar_lea.vmem %s61, 48
  %1648 = vst.msk [vmem:[%s1647] sm:$0xff] %vm80, %v1645
  %s1649 = scalar_lea.vmem %s53, 40
  %v1650 = vld [vmem:[%s1649] sm:$0xff]
  %v1651 = vsel %vm80, %v1645, 0
  %1653 = vmatprep.subr.mxu0 0.0
  %1654 = vmatpush1.msra.mxu0 0.0
  %1655 = vmatprep.subr.mxu0 0.0
  %1656 = vmatpush1.msra.mxu0 0.0
  %1657 = vmatprep.subr.mxu0 0.0
  %1658 = vmatpush1.msra.mxu0 0.0
  %1659 = vmatprep.subr.mxu0 0.0
  %1660 = vmatpush1.msra.mxu0 0.0
  %1661 = vmatprep.subr.mxu0 0.0
  %1662 = vmatpush1.msra.mxu0 0.0
  %1663 = vmatprep.subr.mxu0 0.0
  %1664 = vmatpush1.msra.mxu0 0.0
  %1665 = vmatprep.subr.mxu0 0.0
  %1666 = vmatpush1.msra.mxu0 0.0
  %1667 = vmatprep.subr.mxu0 0.0
  %1668 = vmatpush1.msra.mxu0 0.0
  %1669 = vmatprep.subr.mxu0 0.0
  %1670 = vmatpush1.msra.mxu0 0.0
  %1671 = vmatprep.subr.mxu0 0.0
  %1672 = vmatpush1.msra.mxu0 0.0
  %1673 = vmatprep.subr.mxu0 0.0
  %1674 = vmatpush1.msra.mxu0 0.0
  %1675 = vmatprep.subr.mxu0 0.0
  %1676 = vmatpush1.msra.mxu0 0.0
  %1677 = vmatprep.subr.mxu0 0.0
  %1678 = vmatpush1.msra.mxu0 %v1420
  %1679 = vmatprep.subr.mxu0 0.0
  %1680 = vmatpush1.msra.mxu0 %v1419
  %1681 = vmatprep.subr.mxu0 0.0
  %1682 = vmatpush1.msra.mxu0 %v1418
  %1683 = vmatprep.subr.mxu0 0.0
  %1684 = vmatpush1.msra.mxu0 %v1417
  %1685 = vmatprep.subr.mxu0 0.0
  %1686 = vmatpush2.msra.mxu0 0.0
  %1687 = vmatprep.subr.mxu0 0.0
  %1688 = vmatpush2.msra.mxu0 0.0
  %1689 = vmatprep.subr.mxu0 0.0
  %1690 = vmatpush2.msra.mxu0 0.0
  %1691 = vmatprep.subr.mxu0 0.0
  %1692 = vmatpush2.msra.mxu0 0.0
  %1693 = vmatprep.subr.mxu0 0.0
  %1694 = vmatpush2.msra.mxu0 0.0
  %1695 = vmatprep.subr.mxu0 0.0
  %1696 = vmatpush2.msra.mxu0 0.0
  %1697 = vmatprep.subr.mxu0 0.0
  %1698 = vmatpush2.msra.mxu0 0.0
  %1699 = vmatprep.subr.mxu0 0.0
  %1700 = vmatpush2.msra.mxu0 0.0
  %1701 = vmatprep.subr.mxu0 0.0
  %1702 = vmatpush2.msra.mxu0 0.0
  %1703 = vmatprep.subr.mxu0 0.0
  %1704 = vmatpush2.msra.mxu0 0.0
  %1705 = vmatprep.subr.mxu0 0.0
  %1706 = vmatpush2.msra.mxu0 0.0
  %1707 = vmatprep.subr.mxu0 0.0
  %1708 = vmatpush2.msra.mxu0 0.0
  %1709 = vmatprep.subr.mxu0 0.0
  %1710 = vmatpush2.msra.mxu0 0.0
  %1711 = vmatprep.subr.mxu0 0.0
  %1712 = vmatpush2.msra.mxu0 0.0
  %1713 = vmatprep.subr.mxu0 0.0
  %1714 = vmatpush2.msra.mxu0 0.0
  %1715 = vmatprep.subr.mxu0 0.0
  %1716 = vmatpush2.msra.mxu0 0.0
  %1717 = vmatprep.mubr.f32.mxu0 0.0
  %1718 = vmatmul.mubr.f32.gmra.mxu0 %v1651
  %v1719 = vpop.f32.mrf.mxu0
  %v1720 = vadd.f32 0.0, %v1719
  %v1721 = vpop.f32.mrf.mxu0
  %1722 = vdwg.mxu0
  %v1723 = vadd.f32 %v1650, %v1720
  %v1724 = vxor.u32 %v1723, 2147483648
  %v1725 = vmul.f32 %v1724, 1.442695
  %v1726 = vpow.pop %v1725
  %v1727 = vadd.f32 %v1726, 1.0
  %v1728 = vrcp.pop %v1727
  %v1729 = vmul.f32 1.0, %v1728
  %v1730 = vadd.f32 %v1720, %v1511
  %1732 = vrot.lane.b32.xlu0 %v1730, 64
  %v1733 = vpop.permute.xlu0 %1732
  %v1735 = vmul.f32 %v1729, %v1733
  %1737 = vrot.lane.b32.xlu0 %v1735, 64
  %v1738 = vpop.permute.xlu0 %1737
  %v1740 = vadd.f32 %v1650, %v1738
  %v1741 = vtanh.pop %v1740
  %v1742 = vsub.f32 1.0, %v1729
  %1744 = vrot.lane.b32.xlu0 %v1741, 96
  %v1745 = vpop.permute.xlu0 %1744
  %v1747 = vmul.f32 %v1742, %v1745
  %v1748 = vmul.f32 %v1729, %v1642
  %v1749 = vadd.f32 %v1747, %v1748
  %1751 = vrot.lane.b32.xlu0 %v1749, 96
  %v1752 = vpop.permute.xlu0 %1751
  %s1754 = scalar_lea.vmem %s61, 40
  %1755 = vst.msk [vmem:[%s1754] sm:$0xff] %vm80, %v1752
  %s1756 = scalar_lea.vmem %s53, 32
  %v1757 = vld [vmem:[%s1756] sm:$0xff]
  %v1758 = vsel %vm80, %v1752, 0
  %1760 = vmatprep.subr.mxu0 0.0
  %1761 = vmatpush1.msra.mxu0 0.0
  %1762 = vmatprep.subr.mxu0 0.0
  %1763 = vmatpush1.msra.mxu0 0.0
  %1764 = vmatprep.subr.mxu0 0.0
  %1765 = vmatpush1.msra.mxu0 0.0
  %1766 = vmatprep.subr.mxu0 0.0
  %1767 = vmatpush1.msra.mxu0 0.0
  %1768 = vmatprep.subr.mxu0 0.0
  %1769 = vmatpush1.msra.mxu0 0.0
  %1770 = vmatprep.subr.mxu0 0.0
  %1771 = vmatpush1.msra.mxu0 0.0
  %1772 = vmatprep.subr.mxu0 0.0
  %1773 = vmatpush1.msra.mxu0 0.0
  %1774 = vmatprep.subr.mxu0 0.0
  %1775 = vmatpush1.msra.mxu0 0.0
  %1776 = vmatprep.subr.mxu0 0.0
  %1777 = vmatpush1.msra.mxu0 0.0
  %1778 = vmatprep.subr.mxu0 0.0
  %1779 = vmatpush1.msra.mxu0 0.0
  %1780 = vmatprep.subr.mxu0 0.0
  %1781 = vmatpush1.msra.mxu0 0.0
  %1782 = vmatprep.subr.mxu0 0.0
  %1783 = vmatpush1.msra.mxu0 0.0
  %1784 = vmatprep.subr.mxu0 0.0
  %1785 = vmatpush1.msra.mxu0 %v1420
  %1786 = vmatprep.subr.mxu0 0.0
  %1787 = vmatpush1.msra.mxu0 %v1419
  %1788 = vmatprep.subr.mxu0 0.0
  %1789 = vmatpush1.msra.mxu0 %v1418
  %1790 = vmatprep.subr.mxu0 0.0
  %1791 = vmatpush1.msra.mxu0 %v1417
  %1792 = vmatprep.subr.mxu0 0.0
  %1793 = vmatpush2.msra.mxu0 0.0
  %1794 = vmatprep.subr.mxu0 0.0
  %1795 = vmatpush2.msra.mxu0 0.0
  %1796 = vmatprep.subr.mxu0 0.0
  %1797 = vmatpush2.msra.mxu0 0.0
  %1798 = vmatprep.subr.mxu0 0.0
  %1799 = vmatpush2.msra.mxu0 0.0
  %1800 = vmatprep.subr.mxu0 0.0
  %1801 = vmatpush2.msra.mxu0 0.0
  %1802 = vmatprep.subr.mxu0 0.0
  %1803 = vmatpush2.msra.mxu0 0.0
  %1804 = vmatprep.subr.mxu0 0.0
  %1805 = vmatpush2.msra.mxu0 0.0
  %1806 = vmatprep.subr.mxu0 0.0
  %1807 = vmatpush2.msra.mxu0 0.0
  %1808 = vmatprep.subr.mxu0 0.0
  %1809 = vmatpush2.msra.mxu0 0.0
  %1810 = vmatprep.subr.mxu0 0.0
  %1811 = vmatpush2.msra.mxu0 0.0
  %1812 = vmatprep.subr.mxu0 0.0
  %1813 = vmatpush2.msra.mxu0 0.0
  %1814 = vmatprep.subr.mxu0 0.0
  %1815 = vmatpush2.msra.mxu0 0.0
  %1816 = vmatprep.subr.mxu0 0.0
  %1817 = vmatpush2.msra.mxu0 0.0
  %1818 = vmatprep.subr.mxu0 0.0
  %1819 = vmatpush2.msra.mxu0 0.0
  %1820 = vmatprep.subr.mxu0 0.0
  %1821 = vmatpush2.msra.mxu0 0.0
  %1822 = vmatprep.subr.mxu0 0.0
  %1823 = vmatpush2.msra.mxu0 0.0
  %1824 = vmatprep.mubr.f32.mxu0 0.0
  %1825 = vmatmul.mubr.f32.gmra.mxu0 %v1758
  %v1826 = vpop.f32.mrf.mxu0
  %v1827 = vadd.f32 0.0, %v1826
  %v1828 = vpop.f32.mrf.mxu0
  %1829 = vdwg.mxu0
  %v1830 = vadd.f32 %v1757, %v1827
  %v1831 = vxor.u32 %v1830, 2147483648
  %v1832 = vmul.f32 %v1831, 1.442695
  %v1833 = vpow.pop %v1832
  %v1834 = vadd.f32 %v1833, 1.0
  %v1835 = vrcp.pop %v1834
  %v1836 = vmul.f32 1.0, %v1835
  %v1837 = vadd.f32 %v1827, %v1511
  %1839 = vrot.lane.b32.xlu0 %v1837, 64
  %v1840 = vpop.permute.xlu0 %1839
  %v1842 = vmul.f32 %v1836, %v1840
  %1844 = vrot.lane.b32.xlu0 %v1842, 64
  %v1845 = vpop.permute.xlu0 %1844
  %v1847 = vadd.f32 %v1757, %v1845
  %v1848 = vtanh.pop %v1847
  %v1849 = vsub.f32 1.0, %v1836
  %1851 = vrot.lane.b32.xlu0 %v1848, 96
  %v1852 = vpop.permute.xlu0 %1851
  %v1854 = vmul.f32 %v1849, %v1852
  %v1855 = vmul.f32 %v1836, %v1749
  %v1856 = vadd.f32 %v1854, %v1855
  %1858 = vrot.lane.b32.xlu0 %v1856, 96
  %v1859 = vpop.permute.xlu0 %1858
  %s1861 = scalar_lea.vmem %s61, 32
  %1862 = vst.msk [vmem:[%s1861] sm:$0xff] %vm80, %v1859
  %1863 = vst.msk [vmem:[%s1414] sm:$0xff] %vm80, %v1859
  %s1864 = ssub.s32 0, 0
  %s1865 = smul.u32 4, %s1864
  %p1866 = scmp.lt.s32.totalorder %s1865, 3
  %s1867 = scalar_select %p1866, %s1865, 3
  %s1868 = smul.addr %s1867, 8
  %s1869 = scalar_lea.vmem %s7, %s1868
  // Predicated region
  $region30: #{user_item_encoder_forward.6} parent=0 // pred_check
    _
  $region31: #{user_item_encoder_forward.6} parent=0 // pred_check_branch
    %1871 = sbr.rel (0) target = $region33
  $region32: #{user_item_encoder_forward.6} parent=0 // pred_region
    _
  $region33: #{user_item_encoder_forward.6} parent=0 // pred_fallthru
    _
  // Predicated region
  $region34: #{user_item_encoder_forward.6} parent=0 // pred_check
    _
  $region35: #{user_item_encoder_forward.6} parent=0 // pred_check_branch
    %1873 = sbr.rel (0) target = $region37
  $region36: #{user_item_encoder_forward.6} parent=0 // pred_region
    %s1874 = ssub.s32 0, 0
    %s1875 = smul.u32 4, %s1874
  $region37: #{user_item_encoder_forward.6} parent=0 // pred_fallthru
    _
  // Predicated region
  $region38: #{user_item_encoder_forward.6} parent=0 // pred_check
    _
  $region39: #{user_item_encoder_forward.6} parent=0 // pred_check_branch
    %1877 = sbr.rel (0) target = $region41
  $region40: #{user_item_encoder_forward.6} parent=0 // pred_region
    _
  $region41: #{user_item_encoder_forward.6} parent=0 // pred_fallthru
    _
  // Predicated region
  $region42: #{user_item_encoder_forward.6} parent=0 // pred_check
    _
  $region43: #{user_item_encoder_forward.6} parent=0 // pred_check_branch
    %1879 = sbr.rel (0) target = $region45
  $region44: #{user_item_encoder_forward.6} parent=0 // pred_region
    %s1880 = ssub.s32 0, 0
    %s1881 = smul.u32 4, %s1880
    %p1882 = scmp.lt.s32.totalorder %s1881, 3
    %s1883 = scalar_select %p1882, %s1881, 3
    %s1884 = smul.addr %s1883, 8
    %s1885 = scalar_lea.vmem %s7, %s1884
  $region45: #{user_item_encoder_forward.6} parent=0 // pred_fallthru
    _

</llo_original>
